<compile_context>
chip_gen: v7x
topology: tpu7x:2x2x1
jax: 0.10.0
libtpu: 0.0.40
codegen_flags: <defaults>
</compile_context>

<pallas_src>
import math

import jax
import jax.numpy as jnp
from jax.experimental import pallas as pl
from jax.experimental.pallas import tpu as pltpu

LANES = 128           # channel padding target -> lane-dense stores / MXU columns
_IN_EPS = 1e-5        # PyTorch InstanceNorm2d default (affine=False, biased var)


# ----------------------------- small helpers -------------------------------

def _round_up(n, m):
    return ((n + m - 1) // m) * m


def _pick_k_tile(total_k, unit, cap):
    """Largest tile = unit * g, g | (total_k // unit), tile <= max(cap, unit)."""
    if total_k % unit != 0:
        return total_k
    groups = total_k // unit
    cap = max(cap, unit)
    best = 1
    for g in range(1, groups + 1):
        if groups % g == 0 and unit * g <= cap:
            best = g
    return unit * best


# ------------------- fused conv-matmul + InstanceNorm kernel ----------------

def _make_fused_conv_kernel(apply_relu: bool, has_residual: bool):
    def kernel(*refs):
        if has_residual:
            a_ref, b_ref, bias_ref, res_ref, o_ref, acc_ref = refs
        else:
            a_ref, b_ref, bias_ref, o_ref, acc_ref = refs
            res_ref = None
        k = pl.program_id(1)

        @pl.when(k == 0)
        def _init():
            # Bias folded into the accumulator init (no separate add later).
            acc_ref[...] = jnp.broadcast_to(bias_ref[...], acc_ref.shape)

        acc_ref[...] += jnp.dot(a_ref[...], b_ref[...],
                                preferred_element_type=jnp.float32)

        @pl.when(k == pl.num_programs(1) - 1)
        def _finalize():
            # InstanceNorm over the full spatial extent (rows) of this sample,
            # fused with ReLU / residual add, on the f32 accumulator.
            x = acc_ref[...]
            mean = jnp.mean(x, axis=0, keepdims=True)
            var = jnp.mean(jnp.square(x - mean), axis=0, keepdims=True)
            y = (x - mean) * jax.lax.rsqrt(var + _IN_EPS)
            if apply_relu:
                y = jnp.maximum(y, 0.0)
            if has_residual:
                y = y + res_ref[...].astype(jnp.float32)
            o_ref[...] = y.astype(o_ref.dtype)

    return kernel


def fused_conv_instance_norm(a, b, bias, *, n_batch, rows_per_image, tk,
                             apply_relu, residual=None):
    """a:(N*Ho*Wo, K) bf16, b:(K, Cp) bf16, bias:(1, Cp) f32 -> (N*Ho*Wo, Cp) bf16.

    grid = (batch, K_steps); one sample's full spatial extent per M tile so the
    InstanceNorm reduction can run in the finalize branch.
    """
    M, K = a.shape
    n_out = b.shape[1]
    assert M == n_batch * rows_per_image
    assert rows_per_image % 8 == 0, "spatial extent per sample must be sublane-aligned"
    assert K % tk == 0
    k_steps = K // tk

    in_specs = [
        pl.BlockSpec((rows_per_image, tk), lambda n, k: (n, k)),   # A tile
        pl.BlockSpec((tk, n_out), lambda n, k: (k, 0)),            # B tile
        pl.BlockSpec((1, n_out), lambda n, k: (0, 0)),             # bias row
    ]
    args = [a, b, bias]
    if residual is not None:
        in_specs.append(pl.BlockSpec((rows_per_image, n_out), lambda n, k: (n, 0)))
        args.append(residual)

    grid_spec = pltpu.PrefetchScalarGridSpec(
        num_scalar_prefetch=0,
        grid=(n_batch, k_steps),
        in_specs=in_specs,
        out_specs=pl.BlockSpec((rows_per_image, n_out), lambda n, k: (n, 0)),
        scratch_shapes=[pltpu.VMEM((rows_per_image, n_out), jnp.float32)],
    )
    return pl.pallas_call(
        _make_fused_conv_kernel(apply_relu, residual is not None),
        out_shape=jax.ShapeDtypeStruct((M, n_out), jnp.bfloat16),
        grid_spec=grid_spec,
        compiler_params=pltpu.CompilerParams(
            dimension_semantics=("parallel", "arbitrary")),
    )(*args)


# ---------------------- final Linear (width-1) as VPU reduce ----------------

def _linear_kernel(a_ref, w_ref, bias_ref, o_ref, acc_ref):
    k = pl.program_id(0)

    @pl.when(k == 0)
    def _init():
        acc_ref[...] = jnp.zeros_like(acc_ref)

    a = a_ref[...].astype(jnp.float32)
    w = w_ref[...].astype(jnp.float32)
    acc_ref[...] += jnp.sum(a * w, axis=-1, keepdims=True)

    @pl.when(k == pl.num_programs(0) - 1)
    def _finalize():
        o_ref[...] = acc_ref[...] + bias_ref[...]


def linear_head(flat, w_row, bias11, *, tf):
    """flat:(N, F) f32, w_row:(1, F) f32, bias11:(1,1) f32 -> (N, 1) f32."""
    nb, f = flat.shape
    assert f % tf == 0
    k_steps = f // tf
    grid_spec = pltpu.PrefetchScalarGridSpec(
        num_scalar_prefetch=0,
        grid=(k_steps,),
        in_specs=[
            pl.BlockSpec((nb, tf), lambda k: (0, k)),
            pl.BlockSpec((1, tf), lambda k: (0, k)),
            pl.BlockSpec((1, 1), lambda k: (0, 0)),
        ],
        out_specs=pl.BlockSpec((nb, 1), lambda k: (0, 0)),
        scratch_shapes=[pltpu.VMEM((nb, 1), jnp.float32)],
    )
    return pl.pallas_call(
        _linear_kernel,
        out_shape=jax.ShapeDtypeStruct((nb, 1), jnp.float32),
        grid_spec=grid_spec,
        compiler_params=pltpu.CompilerParams(
            dimension_semantics=("arbitrary",)),
    )(flat, w_row, bias11)


# ------------------------------ conv glue (NHWC) ----------------------------

def _im2col_nhwc(xp, kh, kw, stride, dilation):
    """xp:(N,Hp,Wp,C) already padded -> (N*Ho*Wo, kh*kw*C); columns ordered (i,j,c)."""
    n, hp, wp, c = xp.shape
    ho = (hp - dilation * (kh - 1) - 1) // stride + 1
    wo = (wp - dilation * (kw - 1) - 1) // stride + 1
    taps = []
    for i in range(kh):
        for j in range(kw):
            taps.append(xp[:,
                           i * dilation: i * dilation + stride * (ho - 1) + 1: stride,
                           j * dilation: j * dilation + stride * (wo - 1) + 1: stride,
                           :])
    a = jnp.concatenate(taps, axis=-1)                    # (N, Ho, Wo, kh*kw*C)
    return a.reshape(n * ho * wo, kh * kw * c), ho, wo


def conv_in_layer(x_nhwc, w_flat, bias_row, *, kh, kw, stride, padding, dilation,
                  pad_mode, apply_relu, residual=None):
    """Conv2d (+bias) + InstanceNorm2d(affine=False) (+ReLU / +residual), NHWC."""
    n = x_nhwc.shape[0]
    if padding > 0:
        mode = "reflect" if pad_mode == "reflect" else "constant"
        xp = jnp.pad(x_nhwc, ((0, 0), (padding, padding), (padding, padding), (0, 0)),
                     mode=mode)
    else:
        xp = x_nhwc
    a, ho, wo = _im2col_nhwc(xp, kh, kw, stride, dilation)
    a = a.astype(jnp.bfloat16)
    rows = ho * wo
    cin_blk = a.shape[1] // (kh * kw)
    tk = _pick_k_tile(a.shape[1], cin_blk, 512)
    res_flat = None
    if residual is not None:
        res_flat = residual.reshape(n * ho * wo, residual.shape[-1])
    out = fused_conv_instance_norm(
        a, w_flat, bias_row, n_batch=n, rows_per_image=rows, tk=tk,
        apply_relu=apply_relu, residual=res_flat)
    return out.reshape(n, ho, wo, w_flat.shape[1])


# ------------------------- parameter init / prep ----------------------------

def _torch_conv_init(key, cout, cin, kh, kw):
    k1, k2 = jax.random.split(key)
    bound = 1.0 / math.sqrt(cin * kh * kw)
    w = jax.random.uniform(k1, (cout, cin, kh, kw), jnp.float32, -bound, bound)
    b = jax.random.uniform(k2, (cout,), jnp.float32, -bound, bound)
    return w, b


def _torch_linear_init(key, in_f, out_f):
    k1, k2 = jax.random.split(key)
    bound = 1.0 / math.sqrt(in_f)
    w = jax.random.uniform(k1, (out_f, in_f), jnp.float32, -bound, bound)
    b = jax.random.uniform(k2, (out_f,), jnp.float32, -bound, bound)
    return w, b


def _prep_conv(w, b, cin_pad, cout_pad):
    """PyTorch (Cout,Cin,kh,kw) -> lane-dense bf16 (kh*kw*cin_pad, cout_pad) + f32 bias row."""
    cout, cin, kh, kw = w.shape
    wt = jnp.transpose(w, (2, 3, 1, 0))                       # (kh, kw, Cin, Cout)
    wt = jnp.pad(wt, ((0, 0), (0, 0), (0, cin_pad - cin), (0, cout_pad - cout)))
    w_flat = wt.reshape(kh * kw * cin_pad, cout_pad).astype(jnp.bfloat16)
    b_row = jnp.pad(b, (0, cout_pad - cout)).reshape(1, cout_pad).astype(jnp.float32)
    return {"w": w_flat, "b": b_row}


def init_critic_params(key, input_nc, ndf, n_blocks, conv_layers_in_block,
                       height, width):
    n_keys = 1 + 2 + n_blocks * conv_layers_in_block + 1
    keys = iter(jax.random.split(key, n_keys + 2))
    params = {}

    # Stem: ReflectionPad(3) + Conv(input_nc -> ndf, 7x7, bias) + IN + ReLU
    w, b = _torch_conv_init(next(keys), ndf, input_nc, 7, 7)
    params["stem"] = _prep_conv(w, b, cin_pad=input_nc,
                                cout_pad=_round_up(ndf, LANES))

    # Two stride-2 downsampling convs
    params["down"] = []
    for i in range(2):
        m = 2 ** i
        w, b = _torch_conv_init(next(keys), ndf * m * 2, ndf * m, 3, 3)
        params["down"].append(
            _prep_conv(w, b, cin_pad=_round_up(ndf * m, LANES),
                       cout_pad=_round_up(ndf * m * 2, LANES)))

    # Resnet blocks
    mult = 4
    params["blocks"] = []
    for _ in range(n_blocks):
        block = []
        for _ in range(conv_layers_in_block):
            w, b = _torch_conv_init(next(keys), ndf * mult, ndf * mult, 3, 3)
            block.append(_prep_conv(w, b, cin_pad=_round_up(ndf * mult, LANES),
                                    cout_pad=_round_up(ndf * mult, LANES)))
        params["blocks"].append(block)

    # Final Linear(ndf*4*H*W/16 -> 1)
    lin_in = ndf * mult * height * width // 16
    lw, lb = _torch_linear_init(next(keys), lin_in, 1)
    params["linear"] = {"w": lw.astype(jnp.float32),
                        "b": lb.reshape(1, 1).astype(jnp.float32)}
    return params


# ------------------------------ forward pass --------------------------------

def critic_forward(params, x_nchw, dilations):
    # Single NCHW -> NHWC conversion at the module boundary; bf16 activations.
    h = jnp.transpose(x_nchw, (0, 2, 3, 1)).astype(jnp.bfloat16)

    # Stem
    p = params["stem"]
    h = conv_in_layer(h, p["w"], p["b"], kh=7, kw=7, stride=1, padding=3,
                      dilation=1, pad_mode="reflect", apply_relu=True)

    # Downsampling (stride-2, zero padding=1)
    for p in params["down"]:
        h = conv_in_layer(h, p["w"], p["b"], kh=3, kw=3, stride=2, padding=1,
                          dilation=1, pad_mode="zeros", apply_relu=True)

    # Resnet blocks: [pad, conv, IN, ReLU] * (n-1) + [pad, conv, IN] + skip
    for block in params["blocks"]:
        res = h
        hb = h
        n_conv = len(block)
        for li, p in enumerate(block):
            d = dilations[li]
            last = li == n_conv - 1
            hb = conv_in_layer(hb, p["w"], p["b"], kh=3, kw=3, stride=1,
                               padding=d, dilation=d, pad_mode="reflect",
                               apply_relu=not last,
                               residual=res if last else None)
        h = hb

    # Flatten in PyTorch NCHW order over the REAL (unpadded) channels + Linear.
    n = h.shape[0]
    hh, ww = h.shape[1], h.shape[2]
    f = params["linear"]["w"].shape[1]
    c_real = f // (hh * ww)
    h = h[..., :c_real]
    flat = jnp.transpose(h, (0, 3, 1, 2)).reshape(n, -1).astype(jnp.float32)
    tf = _pick_k_tile(f, LANES, 2048) if f % LANES == 0 else f
    return linear_head(flat, params["linear"]["w"], params["linear"]["b"], tf=tf)


# ---------------------------------- main -------------------------------------

if __name__ == "__main__":
    # Small but structurally faithful config:
    #   input_nc=3, ndf=8, n_blocks=2, conv_layers_in_block=2, H=W=16, batch=2
    input_nc, ndf, n_blocks, convs_per_block = 3, 8, 2, 2
    H = W = 16
    batch = 2
    dilations = [1 for _ in range(convs_per_block)]

    key = jax.random.PRNGKey(0)
    kparams, kx = jax.random.split(key)
    params = init_critic_params(kparams, input_nc, ndf, n_blocks,
                                convs_per_block, H, W)
    x = jax.random.normal(kx, (batch, input_nc, H, W), jnp.float32)

    fwd = jax.jit(lambda p, xx: critic_forward(p, xx, dilations))
    out = fwd(params, x)
    out = jax.block_until_ready(out)
    assert out.shape == (batch, 1) and out.dtype == jnp.float32
    assert bool(jnp.all(jnp.isfinite(out)))
    print("KERNEL_OK")
</pallas_src>

<mosaic_0001>
module attributes {stable_mosaic.version = 11 : i64} {
  func.func @kernel(%arg0: i32, %arg1: i32, %arg2: memref<256x147xbf16, #tpu.memory_space<vmem>>, %arg3: memref<147x128xbf16, #tpu.memory_space<vmem>>, %arg4: memref<1x128xf32, #tpu.memory_space<vmem>>, %arg5: memref<256x128xbf16, #tpu.memory_space<vmem>>, %arg6: memref<256x128xf32, #tpu.memory_space<vmem>>) attributes {dimension_semantics = [#tpu.dimension_semantics<parallel>, #tpu.dimension_semantics<arbitrary>], iteration_bounds = array<i64: 2, 1>, scalar_prefetch = 0 : i64, scratch_operands = 1 : i64, tpu.core_type = #tpu.core_type<tc>, window_params = [{transform_indices = @transform_0, window_bounds = array<i64: 256, 147>}, {transform_indices = @transform_1, window_bounds = array<i64: 147, 128>}, {pipeline_mode = #tpu.pipeline_mode<synchronous>, transform_indices = @transform_2, window_bounds = array<i64: 1, 128>}, {transform_indices = @transform_3, window_bounds = array<i64: 256, 128>}]} {
    %c0_i32 = arith.constant 0 : i32
    %0 = arith.cmpi eq, %arg1, %c0_i32 : i32
    %1 = arith.extui %0 : i1 to i32
    %c0_i32_0 = arith.constant 0 : i32
    %2 = arith.cmpi ne, %1, %c0_i32_0 : i32
    scf.if %2 {
      %c0_10 = arith.constant 0 : index
      %c0_11 = arith.constant 0 : index
      %12 = vector.load %arg4[%c0_10, %c0_11] : memref<1x128xf32, #tpu.memory_space<vmem>>, vector<1x128xf32>
      %13 = vector.shape_cast %12 : vector<1x128xf32> to vector<1x128xf32>
      %14 = vector.broadcast %13 : vector<1x128xf32> to vector<256x128xf32>
      %c0_12 = arith.constant 0 : index
      %c0_13 = arith.constant 0 : index
      %15 = vector.load %arg6[%c0_12, %c0_13] : memref<256x128xf32, #tpu.memory_space<vmem>>, vector<256x128xf32>
      tpu.vector_store %arg6[%c0_12, %c0_13], %14 {strides = array<i32>} : memref<256x128xf32, #tpu.memory_space<vmem>>, vector<256x128xf32>,
    } else {
    }
    %c0 = arith.constant 0 : index
    %c0_1 = arith.constant 0 : index
    %3 = vector.load %arg6[%c0, %c0_1] : memref<256x128xf32, #tpu.memory_space<vmem>>, vector<256x128xf32>
    %c0_2 = arith.constant 0 : index
    %c0_3 = arith.constant 0 : index
    %4 = vector.load %arg2[%c0_2, %c0_3] : memref<256x147xbf16, #tpu.memory_space<vmem>>, vector<256x147xbf16>
    %c0_4 = arith.constant 0 : index
    %c0_5 = arith.constant 0 : index
    %5 = vector.load %arg3[%c0_4, %c0_5] : memref<147x128xbf16, #tpu.memory_space<vmem>>, vector<147x128xbf16>
    %cst = arith.constant dense<0.000000e+00> : vector<256x128xf32>
    %6 = tpu.matmul %4, %5, %cst {dimension_numbers = #tpu.dot_dimension_numbers<[1], [0], [0], [1], [0, 0, 1, 1], [], []>} : vector<256x147xbf16>, vector<147x128xbf16>, vector<256x128xf32> -> vector<256x128xf32>
    %7 = arith.addf %3, %6 : vector<256x128xf32>
    %c0_6 = arith.constant 0 : index
    %c0_7 = arith.constant 0 : index
    %8 = vector.load %arg6[%c0_6, %c0_7] : memref<256x128xf32, #tpu.memory_space<vmem>>, vector<256x128xf32>
    tpu.vector_store %arg6[%c0_6, %c0_7], %7 {strides = array<i32>} : memref<256x128xf32, #tpu.memory_space<vmem>>, vector<256x128xf32>,
    %c0_i32_8 = arith.constant 0 : i32
    %9 = arith.cmpi eq, %arg1, %c0_i32_8 : i32
    %10 = arith.extui %9 : i1 to i32
    %c0_i32_9 = arith.constant 0 : i32
    %11 = arith.cmpi ne, %10, %c0_i32_9 : i32
    scf.if %11 {
      %c0_10 = arith.constant 0 : index
      %c0_11 = arith.constant 0 : index
      %12 = vector.load %arg6[%c0_10, %c0_11] : memref<256x128xf32, #tpu.memory_space<vmem>>, vector<256x128xf32>
      %cst_12 = arith.constant dense<0.000000e+00> : vector<128xf32>
      %13 = vector.multi_reduction <add>, %12, %cst_12 [0] : vector<256x128xf32> to vector<128xf32>
      %14 = vector.shape_cast %13 : vector<128xf32> to vector<1x128xf32>
      %cst_13 = arith.constant 2.560000e+02 : f32
      %15 = vector.broadcast %cst_13 : f32 to vector<1x128xf32>
      %16 = arith.divf %14, %15 : vector<1x128xf32>
      %17 = vector.broadcast %16 : vector<1x128xf32> to vector<256x128xf32>
      %18 = arith.subf %12, %17 : vector<256x128xf32>
      %19 = arith.mulf %18, %18 : vector<256x128xf32>
      %cst_14 = arith.constant dense<0.000000e+00> : vector<128xf32>
      %20 = vector.multi_reduction <add>, %19, %cst_14 [0] : vector<256x128xf32> to vector<128xf32>
      %21 = vector.shape_cast %20 : vector<128xf32> to vector<1x128xf32>
      %cst_15 = arith.constant 2.560000e+02 : f32
      %22 = vector.broadcast %cst_15 : f32 to vector<1x128xf32>
      %23 = arith.divf %21, %22 : vector<1x128xf32>
      %24 = vector.broadcast %16 : vector<1x128xf32> to vector<256x128xf32>
      %25 = arith.subf %12, %24 : vector<256x128xf32>
      %cst_16 = arith.constant 9.99999974E-6 : f32
      %26 = vector.broadcast %cst_16 : f32 to vector<1x128xf32>
      %27 = arith.addf %23, %26 : vector<1x128xf32>
      %28 = math.rsqrt %27 : vector<1x128xf32>
      %29 = vector.broadcast %28 : vector<1x128xf32> to vector<256x128xf32>
      %30 = arith.mulf %25, %29 : vector<256x128xf32>
      %cst_17 = arith.constant 0.000000e+00 : f32
      %31 = vector.broadcast %cst_17 : f32 to vector<256x128xf32>
      %32 = arith.maximumf %30, %31 : vector<256x128xf32>
      %33 = arith.truncf %32 : vector<256x128xf32> to vector<256x128xbf16>
      %c0_18 = arith.constant 0 : index
      %c0_19 = arith.constant 0 : index
      %34 = vector.load %arg5[%c0_18, %c0_19] : memref<256x128xbf16, #tpu.memory_space<vmem>>, vector<256x128xbf16>
      tpu.vector_store %arg5[%c0_18, %c0_19], %33 {strides = array<i32>} : memref<256x128xbf16, #tpu.memory_space<vmem>>, vector<256x128xbf16>,
    } else {
    }
    return
  }
  func.func @transform_0(%arg0: i32, %arg1: i32) -> (i32, i32) {
    %c0_i32 = arith.constant 0 : i32
    return %arg0, %arg1 : i32, i32
  }
  func.func @transform_1(%arg0: i32, %arg1: i32) -> (i32, i32) {
    %c0_i32 = arith.constant 0 : i32
    %c0_i32_0 = arith.constant 0 : i32
    return %arg1, %c0_i32 : i32, i32
  }
  func.func @transform_2(%arg0: i32, %arg1: i32) -> (i32, i32) {
    %c0_i32 = arith.constant 0 : i32
    %c0_i32_0 = arith.constant 0 : i32
    %c0_i32_1 = arith.constant 0 : i32
    return %c0_i32, %c0_i32_0 : i32, i32
  }
  func.func @transform_3(%arg0: i32, %arg1: i32) -> (i32, i32) {
    %c0_i32 = arith.constant 0 : i32
    %c0_i32_0 = arith.constant 0 : i32
    return %arg0, %c0_i32 : i32, i32
  }
}

module attributes {stable_mosaic.version = 11 : i64} {
  func.func @kernel(%arg0: i32, %arg1: i32, %arg2: memref<64x384xbf16, #tpu.memory_space<vmem>>, %arg3: memref<384x128xbf16, #tpu.memory_space<vmem>>, %arg4: memref<1x128xf32, #tpu.memory_space<vmem>>, %arg5: memref<64x128xbf16, #tpu.memory_space<vmem>>, %arg6: memref<64x128xf32, #tpu.memory_space<vmem>>) attributes {dimension_semantics = [#tpu.dimension_semantics<parallel>, #tpu.dimension_semantics<arbitrary>], iteration_bounds = array<i64: 2, 3>, scalar_prefetch = 0 : i64, scratch_operands = 1 : i64, tpu.core_type = #tpu.core_type<tc>, window_params = [{transform_indices = @transform_0, window_bounds = array<i64: 64, 384>}, {transform_indices = @transform_1, window_bounds = array<i64: 384, 128>}, {pipeline_mode = #tpu.pipeline_mode<synchronous>, transform_indices = @transform_2, window_bounds = array<i64: 1, 128>}, {transform_indices = @transform_3, window_bounds = array<i64: 64, 128>}]} {
    %c0_i32 = arith.constant 0 : i32
    %0 = arith.cmpi eq, %arg1, %c0_i32 : i32
    %1 = arith.extui %0 : i1 to i32
    %c0_i32_0 = arith.constant 0 : i32
    %2 = arith.cmpi ne, %1, %c0_i32_0 : i32
    scf.if %2 {
      %c0_9 = arith.constant 0 : index
      %c0_10 = arith.constant 0 : index
      %12 = vector.load %arg4[%c0_9, %c0_10] : memref<1x128xf32, #tpu.memory_space<vmem>>, vector<1x128xf32>
      %13 = vector.shape_cast %12 : vector<1x128xf32> to vector<1x128xf32>
      %14 = vector.broadcast %13 : vector<1x128xf32> to vector<64x128xf32>
      %c0_11 = arith.constant 0 : index
      %c0_12 = arith.constant 0 : index
      %15 = vector.load %arg6[%c0_11, %c0_12] : memref<64x128xf32, #tpu.memory_space<vmem>>, vector<64x128xf32>
      tpu.vector_store %arg6[%c0_11, %c0_12], %14 {strides = array<i32>} : memref<64x128xf32, #tpu.memory_space<vmem>>, vector<64x128xf32>,
    } else {
    }
    %c0 = arith.constant 0 : index
    %c0_1 = arith.constant 0 : index
    %3 = vector.load %arg6[%c0, %c0_1] : memref<64x128xf32, #tpu.memory_space<vmem>>, vector<64x128xf32>
    %c0_2 = arith.constant 0 : index
    %c0_3 = arith.constant 0 : index
    %4 = vector.load %arg2[%c0_2, %c0_3] : memref<64x384xbf16, #tpu.memory_space<vmem>>, vector<64x384xbf16>
    %c0_4 = arith.constant 0 : index
    %c0_5 = arith.constant 0 : index
    %5 = vector.load %arg3[%c0_4, %c0_5] : memref<384x128xbf16, #tpu.memory_space<vmem>>, vector<384x128xbf16>
    %cst = arith.constant dense<0.000000e+00> : vector<64x128xf32>
    %6 = tpu.matmul %4, %5, %cst {dimension_numbers = #tpu.dot_dimension_numbers<[1], [0], [0], [1], [0, 0, 1, 1], [], []>} : vector<64x384xbf16>, vector<384x128xbf16>, vector<64x128xf32> -> vector<64x128xf32>
    %7 = arith.addf %3, %6 : vector<64x128xf32>
    %c0_6 = arith.constant 0 : index
    %c0_7 = arith.constant 0 : index
    %8 = vector.load %arg6[%c0_6, %c0_7] : memref<64x128xf32, #tpu.memory_space<vmem>>, vector<64x128xf32>
    tpu.vector_store %arg6[%c0_6, %c0_7], %7 {strides = array<i32>} : memref<64x128xf32, #tpu.memory_space<vmem>>, vector<64x128xf32>,
    %c2_i32 = arith.constant 2 : i32
    %9 = arith.cmpi eq, %arg1, %c2_i32 : i32
    %10 = arith.extui %9 : i1 to i32
    %c0_i32_8 = arith.constant 0 : i32
    %11 = arith.cmpi ne, %10, %c0_i32_8 : i32
    scf.if %11 {
      %c0_9 = arith.constant 0 : index
      %c0_10 = arith.constant 0 : index
      %12 = vector.load %arg6[%c0_9, %c0_10] : memref<64x128xf32, #tpu.memory_space<vmem>>, vector<64x128xf32>
      %cst_11 = arith.constant dense<0.000000e+00> : vector<128xf32>
      %13 = vector.multi_reduction <add>, %12, %cst_11 [0] : vector<64x128xf32> to vector<128xf32>
      %14 = vector.shape_cast %13 : vector<128xf32> to vector<1x128xf32>
      %cst_12 = arith.constant 6.400000e+01 : f32
      %15 = vector.broadcast %cst_12 : f32 to vector<1x128xf32>
      %16 = arith.divf %14, %15 : vector<1x128xf32>
      %17 = vector.broadcast %16 : vector<1x128xf32> to vector<64x128xf32>
      %18 = arith.subf %12, %17 : vector<64x128xf32>
      %19 = arith.mulf %18, %18 : vector<64x128xf32>
      %cst_13 = arith.constant dense<0.000000e+00> : vector<128xf32>
      %20 = vector.multi_reduction <add>, %19, %cst_13 [0] : vector<64x128xf32> to vector<128xf32>
      %21 = vector.shape_cast %20 : vector<128xf32> to vector<1x128xf32>
      %cst_14 = arith.constant 6.400000e+01 : f32
      %22 = vector.broadcast %cst_14 : f32 to vector<1x128xf32>
      %23 = arith.divf %21, %22 : vector<1x128xf32>
      %24 = vector.broadcast %16 : vector<1x128xf32> to vector<64x128xf32>
      %25 = arith.subf %12, %24 : vector<64x128xf32>
      %cst_15 = arith.constant 9.99999974E-6 : f32
      %26 = vector.broadcast %cst_15 : f32 to vector<1x128xf32>
      %27 = arith.addf %23, %26 : vector<1x128xf32>
      %28 = math.rsqrt %27 : vector<1x128xf32>
      %29 = vector.broadcast %28 : vector<1x128xf32> to vector<64x128xf32>
      %30 = arith.mulf %25, %29 : vector<64x128xf32>
      %cst_16 = arith.constant 0.000000e+00 : f32
      %31 = vector.broadcast %cst_16 : f32 to vector<64x128xf32>
      %32 = arith.maximumf %30, %31 : vector<64x128xf32>
      %33 = arith.truncf %32 : vector<64x128xf32> to vector<64x128xbf16>
      %c0_17 = arith.constant 0 : index
      %c0_18 = arith.constant 0 : index
      %34 = vector.load %arg5[%c0_17, %c0_18] : memref<64x128xbf16, #tpu.memory_space<vmem>>, vector<64x128xbf16>
      tpu.vector_store %arg5[%c0_17, %c0_18], %33 {strides = array<i32>} : memref<64x128xbf16, #tpu.memory_space<vmem>>, vector<64x128xbf16>,
    } else {
    }
    return
  }
  func.func @transform_0(%arg0: i32, %arg1: i32) -> (i32, i32) {
    %c0_i32 = arith.constant 0 : i32
    return %arg0, %arg1 : i32, i32
  }
  func.func @transform_1(%arg0: i32, %arg1: i32) -> (i32, i32) {
    %c0_i32 = arith.constant 0 : i32
    %c0_i32_0 = arith.constant 0 : i32
    return %arg1, %c0_i32 : i32, i32
  }
  func.func @transform_2(%arg0: i32, %arg1: i32) -> (i32, i32) {
    %c0_i32 = arith.constant 0 : i32
    %c0_i32_0 = arith.constant 0 : i32
    %c0_i32_1 = arith.constant 0 : i32
    return %c0_i32, %c0_i32_0 : i32, i32
  }
  func.func @transform_3(%arg0: i32, %arg1: i32) -> (i32, i32) {
    %c0_i32 = arith.constant 0 : i32
    %c0_i32_0 = arith.constant 0 : i32
    return %arg0, %c0_i32 : i32, i32
  }
}

module attributes {stable_mosaic.version = 11 : i64} {
  func.func @kernel(%arg0: i32, %arg1: i32, %arg2: memref<16x384xbf16, #tpu.memory_space<vmem>>, %arg3: memref<384x128xbf16, #tpu.memory_space<vmem>>, %arg4: memref<1x128xf32, #tpu.memory_space<vmem>>, %arg5: memref<16x128xbf16, #tpu.memory_space<vmem>>, %arg6: memref<16x128xf32, #tpu.memory_space<vmem>>) attributes {dimension_semantics = [#tpu.dimension_semantics<parallel>, #tpu.dimension_semantics<arbitrary>], iteration_bounds = array<i64: 2, 3>, scalar_prefetch = 0 : i64, scratch_operands = 1 : i64, tpu.core_type = #tpu.core_type<tc>, window_params = [{transform_indices = @transform_0, window_bounds = array<i64: 16, 384>}, {transform_indices = @transform_1, window_bounds = array<i64: 384, 128>}, {pipeline_mode = #tpu.pipeline_mode<synchronous>, transform_indices = @transform_2, window_bounds = array<i64: 1, 128>}, {transform_indices = @transform_3, window_bounds = array<i64: 16, 128>}]} {
    %c0_i32 = arith.constant 0 : i32
    %0 = arith.cmpi eq, %arg1, %c0_i32 : i32
    %1 = arith.extui %0 : i1 to i32
    %c0_i32_0 = arith.constant 0 : i32
    %2 = arith.cmpi ne, %1, %c0_i32_0 : i32
    scf.if %2 {
      %c0_9 = arith.constant 0 : index
      %c0_10 = arith.constant 0 : index
      %12 = vector.load %arg4[%c0_9, %c0_10] : memref<1x128xf32, #tpu.memory_space<vmem>>, vector<1x128xf32>
      %13 = vector.shape_cast %12 : vector<1x128xf32> to vector<1x128xf32>
      %14 = vector.broadcast %13 : vector<1x128xf32> to vector<16x128xf32>
      %c0_11 = arith.constant 0 : index
      %c0_12 = arith.constant 0 : index
      %15 = vector.load %arg6[%c0_11, %c0_12] : memref<16x128xf32, #tpu.memory_space<vmem>>, vector<16x128xf32>
      tpu.vector_store %arg6[%c0_11, %c0_12], %14 {strides = array<i32>} : memref<16x128xf32, #tpu.memory_space<vmem>>, vector<16x128xf32>,
    } else {
    }
    %c0 = arith.constant 0 : index
    %c0_1 = arith.constant 0 : index
    %3 = vector.load %arg6[%c0, %c0_1] : memref<16x128xf32, #tpu.memory_space<vmem>>, vector<16x128xf32>
    %c0_2 = arith.constant 0 : index
    %c0_3 = arith.constant 0 : index
    %4 = vector.load %arg2[%c0_2, %c0_3] : memref<16x384xbf16, #tpu.memory_space<vmem>>, vector<16x384xbf16>
    %c0_4 = arith.constant 0 : index
    %c0_5 = arith.constant 0 : index
    %5 = vector.load %arg3[%c0_4, %c0_5] : memref<384x128xbf16, #tpu.memory_space<vmem>>, vector<384x128xbf16>
    %cst = arith.constant dense<0.000000e+00> : vector<16x128xf32>
    %6 = tpu.matmul %4, %5, %cst {dimension_numbers = #tpu.dot_dimension_numbers<[1], [0], [0], [1], [0, 0, 1, 1], [], []>} : vector<16x384xbf16>, vector<384x128xbf16>, vector<16x128xf32> -> vector<16x128xf32>
    %7 = arith.addf %3, %6 : vector<16x128xf32>
    %c0_6 = arith.constant 0 : index
    %c0_7 = arith.constant 0 : index
    %8 = vector.load %arg6[%c0_6, %c0_7] : memref<16x128xf32, #tpu.memory_space<vmem>>, vector<16x128xf32>
    tpu.vector_store %arg6[%c0_6, %c0_7], %7 {strides = array<i32>} : memref<16x128xf32, #tpu.memory_space<vmem>>, vector<16x128xf32>,
    %c2_i32 = arith.constant 2 : i32
    %9 = arith.cmpi eq, %arg1, %c2_i32 : i32
    %10 = arith.extui %9 : i1 to i32
    %c0_i32_8 = arith.constant 0 : i32
    %11 = arith.cmpi ne, %10, %c0_i32_8 : i32
    scf.if %11 {
      %c0_9 = arith.constant 0 : index
      %c0_10 = arith.constant 0 : index
      %12 = vector.load %arg6[%c0_9, %c0_10] : memref<16x128xf32, #tpu.memory_space<vmem>>, vector<16x128xf32>
      %cst_11 = arith.constant dense<0.000000e+00> : vector<128xf32>
      %13 = vector.multi_reduction <add>, %12, %cst_11 [0] : vector<16x128xf32> to vector<128xf32>
      %14 = vector.shape_cast %13 : vector<128xf32> to vector<1x128xf32>
      %cst_12 = arith.constant 1.600000e+01 : f32
      %15 = vector.broadcast %cst_12 : f32 to vector<1x128xf32>
      %16 = arith.divf %14, %15 : vector<1x128xf32>
      %17 = vector.broadcast %16 : vector<1x128xf32> to vector<16x128xf32>
      %18 = arith.subf %12, %17 : vector<16x128xf32>
      %19 = arith.mulf %18, %18 : vector<16x128xf32>
      %cst_13 = arith.constant dense<0.000000e+00> : vector<128xf32>
      %20 = vector.multi_reduction <add>, %19, %cst_13 [0] : vector<16x128xf32> to vector<128xf32>
      %21 = vector.shape_cast %20 : vector<128xf32> to vector<1x128xf32>
      %cst_14 = arith.constant 1.600000e+01 : f32
      %22 = vector.broadcast %cst_14 : f32 to vector<1x128xf32>
      %23 = arith.divf %21, %22 : vector<1x128xf32>
      %24 = vector.broadcast %16 : vector<1x128xf32> to vector<16x128xf32>
      %25 = arith.subf %12, %24 : vector<16x128xf32>
      %cst_15 = arith.constant 9.99999974E-6 : f32
      %26 = vector.broadcast %cst_15 : f32 to vector<1x128xf32>
      %27 = arith.addf %23, %26 : vector<1x128xf32>
      %28 = math.rsqrt %27 : vector<1x128xf32>
      %29 = vector.broadcast %28 : vector<1x128xf32> to vector<16x128xf32>
      %30 = arith.mulf %25, %29 : vector<16x128xf32>
      %cst_16 = arith.constant 0.000000e+00 : f32
      %31 = vector.broadcast %cst_16 : f32 to vector<16x128xf32>
      %32 = arith.maximumf %30, %31 : vector<16x128xf32>
      %33 = arith.truncf %32 : vector<16x128xf32> to vector<16x128xbf16>
      %c0_17 = arith.constant 0 : index
      %c0_18 = arith.constant 0 : index
      %34 = vector.load %arg5[%c0_17, %c0_18] : memref<16x128xbf16, #tpu.memory_space<vmem>>, vector<16x128xbf16>
      tpu.vector_store %arg5[%c0_17, %c0_18], %33 {strides = array<i32>} : memref<16x128xbf16, #tpu.memory_space<vmem>>, vector<16x128xbf16>,
    } else {
    }
    return
  }
  func.func @transform_0(%arg0: i32, %arg1: i32) -> (i32, i32) {
    %c0_i32 = arith.constant 0 : i32
    return %arg0, %arg1 : i32, i32
  }
  func.func @transform_1(%arg0: i32, %arg1: i32) -> (i32, i32) {
    %c0_i32 = arith.constant 0 : i32
    %c0_i32_0 = arith.constant 0 : i32
    return %arg1, %c0_i32 : i32, i32
  }
  func.func @transform_2(%arg0: i32, %arg1: i32) -> (i32, i32) {
    %c0_i32 = arith.constant 0 : i32
    %c0_i32_0 = arith.constant 0 : i32
    %c0_i32_1 = arith.constant 0 : i32
    return %c0_i32, %c0_i32_0 : i32, i32
  }
  func.func @transform_3(%arg0: i32, %arg1: i32) -> (i32, i32) {
    %c0_i32 = arith.constant 0 : i32
    %c0_i32_0 = arith.constant 0 : i32
    return %arg0, %c0_i32 : i32, i32
  }
}

module attributes {stable_mosaic.version = 11 : i64} {
  func.func @kernel(%arg0: i32, %arg1: i32, %arg2: memref<16x384xbf16, #tpu.memory_space<vmem>>, %arg3: memref<384x128xbf16, #tpu.memory_space<vmem>>, %arg4: memref<1x128xf32, #tpu.memory_space<vmem>>, %arg5: memref<16x128xbf16, #tpu.memory_space<vmem>>, %arg6: memref<16x128xbf16, #tpu.memory_space<vmem>>, %arg7: memref<16x128xf32, #tpu.memory_space<vmem>>) attributes {dimension_semantics = [#tpu.dimension_semantics<parallel>, #tpu.dimension_semantics<arbitrary>], iteration_bounds = array<i64: 2, 3>, scalar_prefetch = 0 : i64, scratch_operands = 1 : i64, tpu.core_type = #tpu.core_type<tc>, window_params = [{transform_indices = @transform_0, window_bounds = array<i64: 16, 384>}, {transform_indices = @transform_1, window_bounds = array<i64: 384, 128>}, {pipeline_mode = #tpu.pipeline_mode<synchronous>, transform_indices = @transform_2, window_bounds = array<i64: 1, 128>}, {transform_indices = @transform_3, window_bounds = array<i64: 16, 128>}, {transform_indices = @transform_4, window_bounds = array<i64: 16, 128>}]} {
    %c0_i32 = arith.constant 0 : i32
    %0 = arith.cmpi eq, %arg1, %c0_i32 : i32
    %1 = arith.extui %0 : i1 to i32
    %c0_i32_0 = arith.constant 0 : i32
    %2 = arith.cmpi ne, %1, %c0_i32_0 : i32
    scf.if %2 {
      %c0_9 = arith.constant 0 : index
      %c0_10 = arith.constant 0 : index
      %12 = vector.load %arg4[%c0_9, %c0_10] : memref<1x128xf32, #tpu.memory_space<vmem>>, vector<1x128xf32>
      %13 = vector.shape_cast %12 : vector<1x128xf32> to vector<1x128xf32>
      %14 = vector.broadcast %13 : vector<1x128xf32> to vector<16x128xf32>
      %c0_11 = arith.constant 0 : index
      %c0_12 = arith.constant 0 : index
      %15 = vector.load %arg7[%c0_11, %c0_12] : memref<16x128xf32, #tpu.memory_space<vmem>>, vector<16x128xf32>
      tpu.vector_store %arg7[%c0_11, %c0_12], %14 {strides = array<i32>} : memref<16x128xf32, #tpu.memory_space<vmem>>, vector<16x128xf32>,
    } else {
    }
    %c0 = arith.constant 0 : index
    %c0_1 = arith.constant 0 : index
    %3 = vector.load %arg7[%c0, %c0_1] : memref<16x128xf32, #tpu.memory_space<vmem>>, vector<16x128xf32>
    %c0_2 = arith.constant 0 : index
    %c0_3 = arith.constant 0 : index
    %4 = vector.load %arg2[%c0_2, %c0_3] : memref<16x384xbf16, #tpu.memory_space<vmem>>, vector<16x384xbf16>
    %c0_4 = arith.constant 0 : index
    %c0_5 = arith.constant 0 : index
    %5 = vector.load %arg3[%c0_4, %c0_5] : memref<384x128xbf16, #tpu.memory_space<vmem>>, vector<384x128xbf16>
    %cst = arith.constant dense<0.000000e+00> : vector<16x128xf32>
    %6 = tpu.matmul %4, %5, %cst {dimension_numbers = #tpu.dot_dimension_numbers<[1], [0], [0], [1], [0, 0, 1, 1], [], []>} : vector<16x384xbf16>, vector<384x128xbf16>, vector<16x128xf32> -> vector<16x128xf32>
    %7 = arith.addf %3, %6 : vector<16x128xf32>
    %c0_6 = arith.constant 0 : index
    %c0_7 = arith.constant 0 : index
    %8 = vector.load %arg7[%c0_6, %c0_7] : memref<16x128xf32, #tpu.memory_space<vmem>>, vector<16x128xf32>
    tpu.vector_store %arg7[%c0_6, %c0_7], %7 {strides = array<i32>} : memref<16x128xf32, #tpu.memory_space<vmem>>, vector<16x128xf32>,
    %c2_i32 = arith.constant 2 : i32
    %9 = arith.cmpi eq, %arg1, %c2_i32 : i32
    %10 = arith.extui %9 : i1 to i32
    %c0_i32_8 = arith.constant 0 : i32
    %11 = arith.cmpi ne, %10, %c0_i32_8 : i32
    scf.if %11 {
      %c0_9 = arith.constant 0 : index
      %c0_10 = arith.constant 0 : index
      %12 = vector.load %arg7[%c0_9, %c0_10] : memref<16x128xf32, #tpu.memory_space<vmem>>, vector<16x128xf32>
      %cst_11 = arith.constant dense<0.000000e+00> : vector<128xf32>
      %13 = vector.multi_reduction <add>, %12, %cst_11 [0] : vector<16x128xf32> to vector<128xf32>
      %14 = vector.shape_cast %13 : vector<128xf32> to vector<1x128xf32>
      %cst_12 = arith.constant 1.600000e+01 : f32
      %15 = vector.broadcast %cst_12 : f32 to vector<1x128xf32>
      %16 = arith.divf %14, %15 : vector<1x128xf32>
      %17 = vector.broadcast %16 : vector<1x128xf32> to vector<16x128xf32>
      %18 = arith.subf %12, %17 : vector<16x128xf32>
      %19 = arith.mulf %18, %18 : vector<16x128xf32>
      %cst_13 = arith.constant dense<0.000000e+00> : vector<128xf32>
      %20 = vector.multi_reduction <add>, %19, %cst_13 [0] : vector<16x128xf32> to vector<128xf32>
      %21 = vector.shape_cast %20 : vector<128xf32> to vector<1x128xf32>
      %cst_14 = arith.constant 1.600000e+01 : f32
      %22 = vector.broadcast %cst_14 : f32 to vector<1x128xf32>
      %23 = arith.divf %21, %22 : vector<1x128xf32>
      %24 = vector.broadcast %16 : vector<1x128xf32> to vector<16x128xf32>
      %25 = arith.subf %12, %24 : vector<16x128xf32>
      %cst_15 = arith.constant 9.99999974E-6 : f32
      %26 = vector.broadcast %cst_15 : f32 to vector<1x128xf32>
      %27 = arith.addf %23, %26 : vector<1x128xf32>
      %28 = math.rsqrt %27 : vector<1x128xf32>
      %29 = vector.broadcast %28 : vector<1x128xf32> to vector<16x128xf32>
      %30 = arith.mulf %25, %29 : vector<16x128xf32>
      %c0_16 = arith.constant 0 : index
      %c0_17 = arith.constant 0 : index
      %31 = vector.load %arg5[%c0_16, %c0_17] : memref<16x128xbf16, #tpu.memory_space<vmem>>, vector<16x128xbf16>
      %32 = arith.extf %31 : vector<16x128xbf16> to vector<16x128xf32>
      %33 = arith.addf %30, %32 : vector<16x128xf32>
      %34 = arith.truncf %33 : vector<16x128xf32> to vector<16x128xbf16>
      %c0_18 = arith.constant 0 : index
      %c0_19 = arith.constant 0 : index
      %35 = vector.load %arg6[%c0_18, %c0_19] : memref<16x128xbf16, #tpu.memory_space<vmem>>, vector<16x128xbf16>
      tpu.vector_store %arg6[%c0_18, %c0_19], %34 {strides = array<i32>} : memref<16x128xbf16, #tpu.memory_space<vmem>>, vector<16x128xbf16>,
    } else {
    }
    return
  }
  func.func @transform_0(%arg0: i32, %arg1: i32) -> (i32, i32) {
    %c0_i32 = arith.constant 0 : i32
    return %arg0, %arg1 : i32, i32
  }
  func.func @transform_1(%arg0: i32, %arg1: i32) -> (i32, i32) {
    %c0_i32 = arith.constant 0 : i32
    %c0_i32_0 = arith.constant 0 : i32
    return %arg1, %c0_i32 : i32, i32
  }
  func.func @transform_2(%arg0: i32, %arg1: i32) -> (i32, i32) {
    %c0_i32 = arith.constant 0 : i32
    %c0_i32_0 = arith.constant 0 : i32
    %c0_i32_1 = arith.constant 0 : i32
    return %c0_i32, %c0_i32_0 : i32, i32
  }
  func.func @transform_3(%arg0: i32, %arg1: i32) -> (i32, i32) {
    %c0_i32 = arith.constant 0 : i32
    %c0_i32_0 = arith.constant 0 : i32
    return %arg0, %c0_i32 : i32, i32
  }
  func.func @transform_4(%arg0: i32, %arg1: i32) -> (i32, i32) {
    %c0_i32 = arith.constant 0 : i32
    %c0_i32_0 = arith.constant 0 : i32
    return %arg0, %c0_i32 : i32, i32
  }
}

module attributes {stable_mosaic.version = 11 : i64} {
  func.func @_linear_kernel(%arg0: i32, %arg1: memref<2x512xf32, #tpu.memory_space<vmem>>, %arg2: memref<1x512xf32, #tpu.memory_space<vmem>>, %arg3: memref<1x1xf32, #tpu.memory_space<vmem>>, %arg4: memref<2x1xf32, #tpu.memory_space<vmem>>, %arg5: memref<2x1xf32, #tpu.memory_space<vmem>>) attributes {dimension_semantics = [#tpu.dimension_semantics<arbitrary>], iteration_bounds = array<i64: 1>, scalar_prefetch = 0 : i64, scratch_operands = 1 : i64, tpu.core_type = #tpu.core_type<tc>, window_params = [{transform_indices = @transform_0, window_bounds = array<i64: 2, 512>}, {transform_indices = @transform_1, window_bounds = array<i64: 1, 512>}, {pipeline_mode = #tpu.pipeline_mode<synchronous>, transform_indices = @transform_2, window_bounds = array<i64: 1, 1>}, {pipeline_mode = #tpu.pipeline_mode<synchronous>, transform_indices = @transform_3, window_bounds = array<i64: 2, 1>}]} {
    %c0_i32 = arith.constant 0 : i32
    %0 = arith.cmpi eq, %arg0, %c0_i32 : i32
    %1 = arith.extui %0 : i1 to i32
    %c0_i32_0 = arith.constant 0 : i32
    %2 = arith.cmpi ne, %1, %c0_i32_0 : i32
    scf.if %2 {
      %cst_10 = arith.constant 0.000000e+00 : f32
      %15 = vector.broadcast %cst_10 : f32 to vector<2x1xf32>
      %c0_11 = arith.constant 0 : index
      %c0_12 = arith.constant 0 : index
      %16 = vector.load %arg5[%c0_11, %c0_12] : memref<2x1xf32, #tpu.memory_space<vmem>>, vector<2x1xf32>
      tpu.vector_store %arg5[%c0_11, %c0_12], %15 {strides = array<i32>} : memref<2x1xf32, #tpu.memory_space<vmem>>, vector<2x1xf32>,
    } else {
    }
    %c0 = arith.constant 0 : index
    %c0_1 = arith.constant 0 : index
    %3 = vector.load %arg1[%c0, %c0_1] : memref<2x512xf32, #tpu.memory_space<vmem>>, vector<2x512xf32>
    %c0_2 = arith.constant 0 : index
    %c0_3 = arith.constant 0 : index
    %4 = vector.load %arg2[%c0_2, %c0_3] : memref<1x512xf32, #tpu.memory_space<vmem>>, vector<1x512xf32>
    %c0_4 = arith.constant 0 : index
    %c0_5 = arith.constant 0 : index
    %5 = vector.load %arg5[%c0_4, %c0_5] : memref<2x1xf32, #tpu.memory_space<vmem>>, vector<2x1xf32>
    %6 = vector.broadcast %4 : vector<1x512xf32> to vector<2x512xf32>
    %7 = arith.mulf %3, %6 : vector<2x512xf32>
    %cst = arith.constant dense<0.000000e+00> : vector<2xf32>
    %8 = vector.multi_reduction <add>, %7, %cst [1] : vector<2x512xf32> to vector<2xf32>
    %9 = vector.shape_cast %8 : vector<2xf32> to vector<2x1xf32>
    %10 = arith.addf %5, %9 : vector<2x1xf32>
    %c0_6 = arith.constant 0 : index
    %c0_7 = arith.constant 0 : index
    %11 = vector.load %arg5[%c0_6, %c0_7] : memref<2x1xf32, #tpu.memory_space<vmem>>, vector<2x1xf32>
    tpu.vector_store %arg5[%c0_6, %c0_7], %10 {strides = array<i32>} : memref<2x1xf32, #tpu.memory_space<vmem>>, vector<2x1xf32>,
    %c0_i32_8 = arith.constant 0 : i32
    %12 = arith.cmpi eq, %arg0, %c0_i32_8 : i32
    %13 = arith.extui %12 : i1 to i32
    %c0_i32_9 = arith.constant 0 : i32
    %14 = arith.cmpi ne, %13, %c0_i32_9 : i32
    scf.if %14 {
      %c0_10 = arith.constant 0 : index
      %c0_11 = arith.constant 0 : index
      %15 = vector.load %arg5[%c0_10, %c0_11] : memref<2x1xf32, #tpu.memory_space<vmem>>, vector<2x1xf32>
      %c0_12 = arith.constant 0 : index
      %c0_13 = arith.constant 0 : index
      %16 = vector.load %arg3[%c0_12, %c0_13] : memref<1x1xf32, #tpu.memory_space<vmem>>, vector<1x1xf32>
      %17 = vector.broadcast %16 : vector<1x1xf32> to vector<2x1xf32>
      %18 = arith.addf %15, %17 : vector<2x1xf32>
      %c0_14 = arith.constant 0 : index
      %c0_15 = arith.constant 0 : index
      %19 = vector.load %arg4[%c0_14, %c0_15] : memref<2x1xf32, #tpu.memory_space<vmem>>, vector<2x1xf32>
      tpu.vector_store %arg4[%c0_14, %c0_15], %18 {strides = array<i32>} : memref<2x1xf32, #tpu.memory_space<vmem>>, vector<2x1xf32>,
    } else {
    }
    return
  }
  func.func @transform_0(%arg0: i32) -> (i32, i32) {
    %c0_i32 = arith.constant 0 : i32
    %c0_i32_0 = arith.constant 0 : i32
    return %c0_i32, %arg0 : i32, i32
  }
  func.func @transform_1(%arg0: i32) -> (i32, i32) {
    %c0_i32 = arith.constant 0 : i32
    %c0_i32_0 = arith.constant 0 : i32
    return %c0_i32, %arg0 : i32, i32
  }
  func.func @transform_2(%arg0: i32) -> (i32, i32) {
    %c0_i32 = arith.constant 0 : i32
    %c0_i32_0 = arith.constant 0 : i32
    %c0_i32_1 = arith.constant 0 : i32
    return %c0_i32, %c0_i32_0 : i32, i32
  }
  func.func @transform_3(%arg0: i32) -> (i32, i32) {
    %c0_i32 = arith.constant 0 : i32
    %c0_i32_0 = arith.constant 0 : i32
    %c0_i32_1 = arith.constant 0 : i32
    return %c0_i32, %c0_i32_0 : i32, i32
  }
}

</mosaic_0001>

<llo_original>
// kernel: _lambda_.8
$region0: #{_lambda_.8}
  #allocation0 [shape = 'u32[]', space=smem, size = 0x4, offset = 0x4, fixed_abs, tag = 'smem constant byte address 0x4 - core index']
  #allocation1 [shape = 'u32[144,128]{1,0:T(1,128)}', space=vmem, size = 0x12000, scoped, tag = 'internal scratch']
  #allocation2 [shape = 'f32[256,128]{1,0:T(8,128)}', space=vmem, size = 0x20000, scoped, tag = 'scratch operand']
  %s0 = inlined_call_operand.vmem [shape: bf16[512,147], index: 0, kind: input, shape index: {}]
  %s1 = inlined_call_operand.vmem [shape: bf16[147,128], index: 1, kind: input, shape index: {}]
  %s2 = inlined_call_operand.vmem [shape: f32[1,128], index: 2, kind: input, shape index: {}]
  %s3 = inlined_call_operand.vmem [shape: bf16[512,128], index: 3, kind: output, shape index: {}]
  %s4 = sld [smem:[#allocation0]]
  $region53: #{_lambda_.8} parent=0
    _
  %s6 = ssub.s32 1, %s4
  %s7 = scalar_select 0, %s6, %s4
  loop: start=0, step=1, limit=4
  $region2: #{_lambda_.8} parent=0 // loop_pre_header
    _
  $region3: #{_lambda_.8} parent=0 // loop_header
    %s9 = sphi 0, %s13
    %p10 = scmp.ge.s32.totalorder %s9, 4
    %s16 = sphi 0, %s28
    %s17 = sphi 0, %s24
    %s18 = sphi 0, %s16
    %s19 = sphi 0, %s17
    %s20 = sphi 0, %s18
    %s21 = sphi 0, %s19
    %s33 = sphi 0, %s35
    %s36 = sphi 0, %s33
    %s37 = sphi 0, %s36
    %s53 = sphi 0, %s37
    %s59 = sphi 0, %s61
    %s62 = sphi 0, %s59
    %s63 = sphi 0, %s62
    %s79 = sphi 0, %s63
    %s83 = sphi 0, %s83
    %s85 = sphi 0, %s83
    %s86 = sphi 0, %s85
    %s100 = sphi 0, %s86
    %s106 = sphi 0, %s108
    %s109 = sphi 0, %s106
    %s110 = sphi 0, %s109
    %s126 = sphi 0, %s110
  $region4: #{_lambda_.8} parent=0 // loop_header_branch
    %12 = sbr.rel (%p10) target = $region8
  $region5: #{_lambda_.8} parent=0 // loop_body
    %s14 = ssub.s32 %s9, 1
    %s15 = ssub.s32 %s9, 2
    %s22 = sadd.s32 1, %s17
    %p23 = scmp.ge.s32.totalorder %s22, 1
    %s24 = scalar_select %p23, 0, %s22
    %s25 = sadd.s32 1, %s16
    %s26 = scalar_select %p23, %s25, %s16
    %p27 = scmp.ge.s32.totalorder %s26, 2
    %s28 = scalar_select %p27, 0, %s26
    %s29 = ssub.s32 %s16, %s28
    %s30 = ssub.s32 %s17, %s24
    %s31 = sor.u32 %s29, %s30
    %p32 = scmp.eq.s32.totalorder %s31, 0
    %s34 = sadd.s32 %s33, 1
    %s35 = scalar_select %p32, %s33, %s34
    %p38 = pneg %p32
    %p39 = scmp.eq.s32.totalorder %s9, 1
    %p40 = por %p38, %p39
    %p41 = scmp.ne.s32.totalorder %s33, %s36
    %p42 = scmp.eq.s32.totalorder %s9, 0
    %p43 = por %p41, %p42
    %p44 = scmp.ne.s32.totalorder %s33, %s36
    %p45 = scmp.eq.s32.totalorder %s14, 1
    %p46 = por %p44, %p45
    %p47 = scmp.ne.s32.totalorder %s36, %s37
    %p48 = scmp.eq.s32.totalorder %s14, 0
    %p49 = por %p47, %p48
    %p50 = scmp.ne.s32.totalorder %s36, %s37
    %p51 = scmp.eq.s32.totalorder %s15, 1
    %p52 = por %p50, %p51
    %p54 = scmp.ne.s32.totalorder %s37, %s53
    %p55 = scmp.eq.s32.totalorder %s15, 0
    %p56 = por %p54, %p55
    %s57 = ssub.s32 %s17, %s24
    %p58 = scmp.eq.s32.totalorder %s57, 0
    %s60 = sadd.s32 %s59, 1
    %s61 = scalar_select %p58, %s59, %s60
    %p64 = pneg %p58
    %p65 = scmp.eq.s32.totalorder %s9, 1
    %p66 = por %p64, %p65
    %p67 = scmp.ne.s32.totalorder %s59, %s62
    %p68 = scmp.eq.s32.totalorder %s9, 0
    %p69 = por %p67, %p68
    %p70 = scmp.ne.s32.totalorder %s59, %s62
    %p71 = scmp.eq.s32.totalorder %s14, 1
    %p72 = por %p70, %p71
    %p73 = scmp.ne.s32.totalorder %s62, %s63
    %p74 = scmp.eq.s32.totalorder %s14, 0
    %p75 = por %p73, %p74
    %p76 = scmp.ne.s32.totalorder %s62, %s63
    %p77 = scmp.eq.s32.totalorder %s15, 1
    %p78 = por %p76, %p77
    %p80 = scmp.ne.s32.totalorder %s63, %s79
    %p81 = scmp.eq.s32.totalorder %s15, 0
    %p82 = por %p80, %p81
    %s84 = sadd.s32 %s83, 1
    %p87 = scmp.eq.s32.totalorder %s9, 1
    %p88 = scmp.ne.s32.totalorder %s83, %s85
    %p89 = scmp.eq.s32.totalorder %s9, 0
    %p90 = por %p88, %p89
    %p91 = scmp.ne.s32.totalorder %s83, %s85
    %p92 = scmp.eq.s32.totalorder %s14, 1
    %p93 = por %p91, %p92
    %p94 = scmp.ne.s32.totalorder %s85, %s86
    %p95 = scmp.eq.s32.totalorder %s14, 0
    %p96 = por %p94, %p95
    %p97 = scmp.ne.s32.totalorder %s85, %s86
    %p98 = scmp.eq.s32.totalorder %s15, 1
    %p99 = por %p97, %p98
    %p101 = scmp.ne.s32.totalorder %s86, %s100
    %p102 = scmp.eq.s32.totalorder %s15, 0
    %p103 = por %p101, %p102
    %s104 = ssub.s32 %s16, %s28
    %p105 = scmp.eq.s32.totalorder %s104, 0
    %s107 = sadd.s32 %s106, 1
    %s108 = scalar_select %p105, %s106, %s107
    %p111 = pneg %p105
    %p112 = scmp.eq.s32.totalorder %s9, 1
    %p113 = por %p111, %p112
    %p114 = scmp.ne.s32.totalorder %s106, %s109
    %p115 = scmp.eq.s32.totalorder %s9, 0
    %p116 = por %p114, %p115
    %p117 = scmp.ne.s32.totalorder %s106, %s109
    %p118 = scmp.eq.s32.totalorder %s14, 1
    %p119 = por %p117, %p118
    %p120 = scmp.ne.s32.totalorder %s109, %s110
    %p121 = scmp.eq.s32.totalorder %s14, 0
    %p122 = por %p120, %p121
    %p123 = scmp.ne.s32.totalorder %s109, %s110
    %p124 = scmp.eq.s32.totalorder %s15, 1
    %p125 = por %p123, %p124
    %p127 = scmp.ne.s32.totalorder %s110, %s126
    %p128 = scmp.eq.s32.totalorder %s15, 0
    %p129 = por %p127, %p128
    %p130 = scmp.le.s32.totalorder 1, %s9
    %p131 = scmp.lt.s32.totalorder %s9, 3
    %p132 = pnand %p130, %p131
    %p133 = pneg %p132
    // Predicated region
    $region9: #{_lambda_.8} parent=5 // pred_check
      _
    $region10: #{_lambda_.8} parent=5 // pred_check_branch
      %135 = sbr.rel (%p132) target = $region12
    $region11: #{_lambda_.8} parent=5 // pred_region
      %s136 = ssub.s32 %s9, 1
      // Predicated region
      $region13: #{_lambda_.8} parent=11 // pred_check
        %p137 = pneg %p75
      $region14: #{_lambda_.8} parent=11 // pred_check_branch
        %139 = sbr.rel (%p137) target = $region16
      $region15: #{_lambda_.8} parent=11 // pred_region
        %s140 = smul.u32 19, %s19
        %p141 = scmp.lt.s32.totalorder %s140, 18
        %s142 = scalar_select %p141, %s140, 18
        %s143 = smul.addr %s142, 4
        %s144 = scalar_lea.vmem %s1, %s143
        %s145 = smul.u32 19, %s19
      $region16: #{_lambda_.8} parent=11 // pred_fallthru
        _
      // Predicated region
      $region17: #{_lambda_.8} parent=11 // pred_check
        %p146 = pneg %p96
      $region18: #{_lambda_.8} parent=11 // pred_check_branch
        %148 = sbr.rel (%p146) target = $region20
      $region19: #{_lambda_.8} parent=11 // pred_region
        _
      $region20: #{_lambda_.8} parent=11 // pred_fallthru
        _
    $region12: #{_lambda_.8} parent=5 // pred_fallthru
      _
    %p149 = scmp.lt.s32.totalorder %s9, 2
    // Predicated region
    $region21: #{_lambda_.8} parent=5 // pred_check
      %p150 = pneg %p149
    $region22: #{_lambda_.8} parent=5 // pred_check_branch
      %152 = sbr.rel (%p150) target = $region24
    $region23: #{_lambda_.8} parent=5 // pred_region
      // Predicated region
      $region25: #{_lambda_.8} parent=23 // pred_check
        %p153 = pneg %p43
      $region26: #{_lambda_.8} parent=23 // pred_check_branch
        %155 = sbr.rel (%p153) target = $region28
      $region27: #{_lambda_.8} parent=23 // pred_region
        %s156 = smul.u32 32, %s16
        %s157 = smul.u32 2, %s17
        %p158 = scmp.lt.s32.totalorder %s156, 63
        %s159 = scalar_select %p158, %s156, 63
        %p160 = scmp.lt.s32.totalorder %s157, 1
        %s161 = scalar_select %p160, %s157, 1
        %s162 = smul.addr %s159, 2
        %s163 = sadd.s32 %s161, %s162
        %s164 = smul.addr %s163, 4
        %s165 = scalar_lea.vmem %s0, %s164
        %s166 = smul.u32 32, %s16
        %s167 = smul.u32 2, %s17
      $region28: #{_lambda_.8} parent=23 // pred_fallthru
        _
    $region24: #{_lambda_.8} parent=5 // pred_fallthru
      _
    %p168 = scmp.le.s32.totalorder 1, %s9
    %p169 = scmp.lt.s32.totalorder %s9, 3
    %p170 = pnand %p168, %p169
    %p171 = pneg %p170
    // Predicated region
    $region29: #{_lambda_.8} parent=5 // pred_check
      _
    $region30: #{_lambda_.8} parent=5 // pred_check_branch
      %173 = sbr.rel (%p170) target = $region32
    $region31: #{_lambda_.8} parent=5 // pred_region
      %s174 = ssub.s32 %s9, 1
      %s175 = smul.u32 32, %s18
      %s176 = smul.u32 2, %s19
      %p177 = scmp.lt.s32.totalorder %s175, 63
      %s178 = scalar_select %p177, %s175, 63
      %p179 = scmp.lt.s32.totalorder %s176, 1
      %s180 = scalar_select %p179, %s176, 1
      %s181 = smul.addr %s178, 2
      %s182 = sadd.s32 %s180, %s181
      %s183 = smul.addr %s182, 4
      %s184 = scalar_lea.vmem %s0, %s183
      %p185 = pneg %p49
      %p186 = pneg %p46
      %s187 = smul.u32 19, %s19
      %p188 = scmp.lt.s32.totalorder %s187, 18
      %s189 = scalar_select %p188, %s187, 18
      %s190 = smul.addr %s189, 4
      %s191 = scalar_lea.vmem %s1, %s190
      %p192 = pneg %p75
      %p193 = pneg %p72
      %p194 = pneg %p96
      %p195 = pneg %p93
      %p196 = pneg %p122
      %p197 = pneg %p119
      %s198 = smul.u32 32, %s18
      %p199 = scmp.lt.s32.totalorder %s198, 63
      %s200 = scalar_select %p199, %s198, 63
      %s201 = smul.addr %s200, 4
      %s202 = scalar_lea.vmem %s3, %s201
      %s203 = smul.u32 32, %s18
      %s204 = smul.u32 2, %s19
      %p205 = scmp.lt.s32.totalorder %s203, 63
      %s206 = scalar_select %p205, %s203, 63
      %p207 = scmp.lt.s32.totalorder %s204, 1
      %s208 = scalar_select %p207, %s204, 1
      %s209 = smul.addr %s206, 2
      %s210 = sadd.s32 %s208, %s209
      %s211 = smul.addr %s210, 4
      %s212 = scalar_lea.vmem %s0, %s211
      %s213 = smul.u32 32, %s18
      %s214 = smul.u32 2, %s19
      %s215 = smul.u32 19, %s19
      %p216 = scmp.lt.s32.totalorder %s215, 18
      %s217 = scalar_select %p216, %s215, 18
      %s218 = smul.addr %s217, 4
      %s219 = scalar_lea.vmem %s1, %s218
      %s220 = smul.u32 19, %s19
      %s221 = smul.u32 32, %s18
      %p222 = scmp.lt.s32.totalorder %s221, 63
      %s223 = scalar_select %p222, %s221, 63
      %s224 = smul.addr %s223, 4
      %s225 = scalar_lea.vmem %s3, %s224
      %s226 = smul.u32 32, %s18
      %p228 = scmp.eq.s32.totalorder %s19, 0
      // Predicated region
      $region33: #{_lambda_.8} parent=31 // pred_check
        %p229 = pneg %p228
      $region34: #{_lambda_.8} parent=31 // pred_check_branch
        %231 = sbr.rel (%p229) target = $region36
      $region35: #{_lambda_.8} parent=31 // pred_region
        %v232 = vld [vmem:[%s2] sm:$0x1]
        %v234 = vlaneseq
        %v235 = vshrl.u32 %v234, 7
        %v236 = vsub.s32 0, %v235
        %v237 = vrot.slane %v232, %v236
        %239 = vst [vmem:[#allocation2] sm:$0xff] %v237
        %240 = vst [vmem:[#allocation2 + $0x8] sm:$0xff] %v237
        %241 = vst [vmem:[#allocation2 + $0x10] sm:$0xff] %v237
        %242 = vst [vmem:[#allocation2 + $0x18] sm:$0xff] %v237
        %243 = vst [vmem:[#allocation2 + $0x20] sm:$0xff] %v237
        %244 = vst [vmem:[#allocation2 + $0x28] sm:$0xff] %v237
        %245 = vst [vmem:[#allocation2 + $0x30] sm:$0xff] %v237
        %246 = vst [vmem:[#allocation2 + $0x38] sm:$0xff] %v237
        %247 = vst [vmem:[#allocation2 + $0x40] sm:$0xff] %v237
        %248 = vst [vmem:[#allocation2 + $0x48] sm:$0xff] %v237
        %249 = vst [vmem:[#allocation2 + $0x50] sm:$0xff] %v237
        %250 = vst [vmem:[#allocation2 + $0x58] sm:$0xff] %v237
        %251 = vst [vmem:[#allocation2 + $0x60] sm:$0xff] %v237
        %252 = vst [vmem:[#allocation2 + $0x68] sm:$0xff] %v237
        %253 = vst [vmem:[#allocation2 + $0x70] sm:$0xff] %v237
        %254 = vst [vmem:[#allocation2 + $0x78] sm:$0xff] %v237
        %255 = vst [vmem:[#allocation2 + $0x80] sm:$0xff] %v237
        %256 = vst [vmem:[#allocation2 + $0x88] sm:$0xff] %v237
        %257 = vst [vmem:[#allocation2 + $0x90] sm:$0xff] %v237
        %258 = vst [vmem:[#allocation2 + $0x98] sm:$0xff] %v237
        %259 = vst [vmem:[#allocation2 + $0xa0] sm:$0xff] %v237
        %260 = vst [vmem:[#allocation2 + $0xa8] sm:$0xff] %v237
        %261 = vst [vmem:[#allocation2 + $0xb0] sm:$0xff] %v237
        %262 = vst [vmem:[#allocation2 + $0xb8] sm:$0xff] %v237
        %263 = vst [vmem:[#allocation2 + $0xc0] sm:$0xff] %v237
        %264 = vst [vmem:[#allocation2 + $0xc8] sm:$0xff] %v237
        %265 = vst [vmem:[#allocation2 + $0xd0] sm:$0xff] %v237
        %266 = vst [vmem:[#allocation2 + $0xd8] sm:$0xff] %v237
        %267 = vst [vmem:[#allocation2 + $0xe0] sm:$0xff] %v237
        %268 = vst [vmem:[#allocation2 + $0xe8] sm:$0xff] %v237
        %269 = vst [vmem:[#allocation2 + $0xf0] sm:$0xff] %v237
        %270 = vst [vmem:[#allocation2 + $0xf8] sm:$0xff] %v237
      $region36: #{_lambda_.8} parent=31 // pred_fallthru
        _
      %v271 = vld [vmem:[#allocation2] sm:$0xff]
      %v272 = vld [vmem:[#allocation2 + $0x8] sm:$0xff]
      %v273 = vld [vmem:[#allocation2 + $0x10] sm:$0xff]
      %v274 = vld [vmem:[#allocation2 + $0x18] sm:$0xff]
      %v275 = vld [vmem:[#allocation2 + $0x20] sm:$0xff]
      %v276 = vld [vmem:[#allocation2 + $0x28] sm:$0xff]
      %v277 = vld [vmem:[#allocation2 + $0x30] sm:$0xff]
      %v278 = vld [vmem:[#allocation2 + $0x38] sm:$0xff]
      %v279 = vld [vmem:[#allocation2 + $0x40] sm:$0xff]
      %v280 = vld [vmem:[#allocation2 + $0x48] sm:$0xff]
      %v281 = vld [vmem:[#allocation2 + $0x50] sm:$0xff]
      %v282 = vld [vmem:[#allocation2 + $0x58] sm:$0xff]
      %v283 = vld [vmem:[#allocation2 + $0x60] sm:$0xff]
      %v284 = vld [vmem:[#allocation2 + $0x68] sm:$0xff]
      %v285 = vld [vmem:[#allocation2 + $0x70] sm:$0xff]
      %v286 = vld [vmem:[#allocation2 + $0x78] sm:$0xff]
      %v287 = vld [vmem:[#allocation2 + $0x80] sm:$0xff]
      %v288 = vld [vmem:[#allocation2 + $0x88] sm:$0xff]
      %v289 = vld [vmem:[#allocation2 + $0x90] sm:$0xff]
      %v290 = vld [vmem:[#allocation2 + $0x98] sm:$0xff]
      %v291 = vld [vmem:[#allocation2 + $0xa0] sm:$0xff]
      %v292 = vld [vmem:[#allocation2 + $0xa8] sm:$0xff]
      %v293 = vld [vmem:[#allocation2 + $0xb0] sm:$0xff]
      %v294 = vld [vmem:[#allocation2 + $0xb8] sm:$0xff]
      %v295 = vld [vmem:[#allocation2 + $0xc0] sm:$0xff]
      %v296 = vld [vmem:[#allocation2 + $0xc8] sm:$0xff]
      %v297 = vld [vmem:[#allocation2 + $0xd0] sm:$0xff]
      %v298 = vld [vmem:[#allocation2 + $0xd8] sm:$0xff]
      %v299 = vld [vmem:[#allocation2 + $0xe0] sm:$0xff]
      %v300 = vld [vmem:[#allocation2 + $0xe8] sm:$0xff]
      %v301 = vld [vmem:[#allocation2 + $0xf0] sm:$0xff]
      %v302 = vld [vmem:[#allocation2 + $0xf8] sm:$0xff]
      %v303 = vld [vmem:[%s212] sm:$0xff]
      %v304 = vld [vmem:[%s212 + $0x8] sm:$0xff]
      %v305 = vld [vmem:[%s212 + $0x10] sm:$0xff]
      %v306 = vld [vmem:[%s212 + $0x18] sm:$0xff]
      %v307 = vld [vmem:[%s212 + $0x20] sm:$0xff]
      %v308 = vld [vmem:[%s212 + $0x28] sm:$0xff]
      %v309 = vld [vmem:[%s212 + $0x30] sm:$0xff]
      %v310 = vld [vmem:[%s212 + $0x38] sm:$0xff]
      %v311 = vld [vmem:[%s212 + $0x40] sm:$0xff]
      %v312 = vld [vmem:[%s212 + $0x48] sm:$0xff]
      %v313 = vld [vmem:[%s212 + $0x50] sm:$0xff]
      %v314 = vld [vmem:[%s212 + $0x58] sm:$0xff]
      %v315 = vld [vmem:[%s212 + $0x60] sm:$0xff]
      %v316 = vld [vmem:[%s212 + $0x68] sm:$0xff]
      %v317 = vld [vmem:[%s212 + $0x70] sm:$0xff]
      %v318 = vld [vmem:[%s212 + $0x78] sm:$0xff]
      %v319 = vld [vmem:[%s212 + $0x80] sm:$0xff]
      %v320 = vld [vmem:[%s212 + $0x88] sm:$0xff]
      %v321 = vld [vmem:[%s212 + $0x90] sm:$0xff]
      %v322 = vld [vmem:[%s212 + $0x98] sm:$0xff]
      %v323 = vld [vmem:[%s212 + $0xa0] sm:$0xff]
      %v324 = vld [vmem:[%s212 + $0xa8] sm:$0xff]
      %v325 = vld [vmem:[%s212 + $0xb0] sm:$0xff]
      %v326 = vld [vmem:[%s212 + $0xb8] sm:$0xff]
      %v327 = vld [vmem:[%s212 + $0xc0] sm:$0xff]
      %v328 = vld [vmem:[%s212 + $0xc8] sm:$0xff]
      %v329 = vld [vmem:[%s212 + $0xd0] sm:$0xff]
      %v330 = vld [vmem:[%s212 + $0xd8] sm:$0xff]
      %v331 = vld [vmem:[%s212 + $0xe0] sm:$0xff]
      %v332 = vld [vmem:[%s212 + $0xe8] sm:$0xff]
      %v333 = vld [vmem:[%s212 + $0xf0] sm:$0xff]
      %v334 = vld [vmem:[%s212 + $0xf8] sm:$0xff]
      %v335 = vld [vmem:[%s219] sm:$0xf]
      %v336 = vld [vmem:[%s219 + $0x4] sm:$0xf]
      %v337 = vld [vmem:[%s219 + $0x8] sm:$0xf]
      %v338 = vld [vmem:[%s219 + $0xc] sm:$0xf]
      %v339 = vld [vmem:[%s219 + $0x10] sm:$0xf]
      %v340 = vld [vmem:[%s219 + $0x14] sm:$0xf]
      %v341 = vld [vmem:[%s219 + $0x18] sm:$0xf]
      %v342 = vld [vmem:[%s219 + $0x1c] sm:$0xf]
      %v343 = vld [vmem:[%s219 + $0x20] sm:$0xf]
      %v344 = vld [vmem:[%s219 + $0x24] sm:$0xf]
      %v345 = vld [vmem:[%s219 + $0x28] sm:$0xf]
      %v346 = vld [vmem:[%s219 + $0x2c] sm:$0xf]
      %v347 = vld [vmem:[%s219 + $0x30] sm:$0xf]
      %v348 = vld [vmem:[%s219 + $0x34] sm:$0xf]
      %v349 = vld [vmem:[%s219 + $0x38] sm:$0xf]
      %v350 = vld [vmem:[%s219 + $0x3c] sm:$0xf]
      %v351 = vld [vmem:[%s219 + $0x40] sm:$0xf]
      %v352 = vld [vmem:[%s219 + $0x44] sm:$0xf]
      %v353 = vld [vmem:[%s219 + $0x48] sm:$0x3]
      %v386 = vunpack.c.l.b16 %v303
      %v387 = vunpack.c.h.b16 %v303
      %v388 = vunpack.c.l.b16 %v304
      %v389 = vunpack.c.h.b16 %v304
      %v390 = vunpack.c.l.b16 %v305
      %v391 = vunpack.c.h.b16 %v305
      %v392 = vunpack.c.l.b16 %v306
      %v393 = vunpack.c.h.b16 %v306
      %v394 = vunpack.c.l.b16 %v307
      %v395 = vunpack.c.h.b16 %v307
      %v396 = vunpack.c.l.b16 %v308
      %v397 = vunpack.c.h.b16 %v308
      %v398 = vunpack.c.l.b16 %v309
      %v399 = vunpack.c.h.b16 %v309
      %v400 = vunpack.c.l.b16 %v310
      %v401 = vunpack.c.h.b16 %v310
      %v402 = vunpack.c.l.b16 %v311
      %v403 = vunpack.c.h.b16 %v311
      %v404 = vunpack.c.l.b16 %v312
      %v405 = vunpack.c.h.b16 %v312
      %v406 = vunpack.c.l.b16 %v313
      %v407 = vunpack.c.h.b16 %v313
      %v408 = vunpack.c.l.b16 %v314
      %v409 = vunpack.c.h.b16 %v314
      %v410 = vunpack.c.l.b16 %v315
      %v411 = vunpack.c.h.b16 %v315
      %v412 = vunpack.c.l.b16 %v316
      %v413 = vunpack.c.h.b16 %v316
      %v414 = vunpack.c.l.b16 %v317
      %v415 = vunpack.c.h.b16 %v317
      %v416 = vunpack.c.l.b16 %v318
      %v417 = vunpack.c.h.b16 %v318
      %v418 = vunpack.c.l.b16 %v319
      %v419 = vunpack.c.h.b16 %v319
      %v420 = vunpack.c.l.b16 %v320
      %v421 = vunpack.c.h.b16 %v320
      %v422 = vunpack.c.l.b16 %v321
      %v423 = vunpack.c.h.b16 %v321
      %v424 = vunpack.c.l.b16 %v322
      %v425 = vunpack.c.h.b16 %v322
      %v426 = vunpack.c.l.b16 %v323
      %v427 = vunpack.c.h.b16 %v323
      %v428 = vunpack.c.l.b16 %v324
      %v429 = vunpack.c.h.b16 %v324
      %v430 = vunpack.c.l.b16 %v325
      %v431 = vunpack.c.h.b16 %v325
      %v432 = vunpack.c.l.b16 %v326
      %v433 = vunpack.c.h.b16 %v326
      %v434 = vunpack.c.l.b16 %v327
      %v435 = vunpack.c.h.b16 %v327
      %v436 = vunpack.c.l.b16 %v328
      %v437 = vunpack.c.h.b16 %v328
      %v438 = vunpack.c.l.b16 %v329
      %v439 = vunpack.c.h.b16 %v329
      %v440 = vunpack.c.l.b16 %v330
      %v441 = vunpack.c.h.b16 %v330
      %v442 = vunpack.c.l.b16 %v331
      %v443 = vunpack.c.h.b16 %v331
      %v444 = vunpack.c.l.b16 %v332
      %v445 = vunpack.c.h.b16 %v332
      %v446 = vunpack.c.l.b16 %v333
      %v447 = vunpack.c.h.b16 %v333
      %v448 = vunpack.c.l.b16 %v334
      %v449 = vunpack.c.h.b16 %v334
      %v450 = vpack.c.b16 %v388, %v386
      %v451 = vpack.c.b16 %v389, %v387
      %v452 = vpack.c.b16 %v392, %v390
      %v453 = vpack.c.b16 %v393, %v391
      %v454 = vpack.c.b16 %v396, %v394
      %v455 = vpack.c.b16 %v397, %v395
      %v456 = vpack.c.b16 %v400, %v398
      %v457 = vpack.c.b16 %v401, %v399
      %v458 = vpack.c.b16 %v404, %v402
      %v459 = vpack.c.b16 %v405, %v403
      %v460 = vpack.c.b16 %v408, %v406
      %v461 = vpack.c.b16 %v409, %v407
      %v462 = vpack.c.b16 %v412, %v410
      %v463 = vpack.c.b16 %v413, %v411
      %v464 = vpack.c.b16 %v416, %v414
      %v465 = vpack.c.b16 %v417, %v415
      %v466 = vpack.c.b16 %v420, %v418
      %v467 = vpack.c.b16 %v421, %v419
      %v468 = vpack.c.b16 %v424, %v422
      %v469 = vpack.c.b16 %v425, %v423
      %v470 = vpack.c.b16 %v428, %v426
      %v471 = vpack.c.b16 %v429, %v427
      %v472 = vpack.c.b16 %v432, %v430
      %v473 = vpack.c.b16 %v433, %v431
      %v474 = vpack.c.b16 %v436, %v434
      %v475 = vpack.c.b16 %v437, %v435
      %v476 = vpack.c.b16 %v440, %v438
      %v477 = vpack.c.b16 %v441, %v439
      %v478 = vpack.c.b16 %v444, %v442
      %v479 = vpack.c.b16 %v445, %v443
      %v480 = vpack.c.b16 %v448, %v446
      %v481 = vpack.c.b16 %v449, %v447
      %v517 = vunpack.c.l.b16 %v335
      %v518 = vunpack.c.l.b16 %v336
      %v519 = vunpack.c.l.b16 %v337
      %v520 = vunpack.c.l.b16 %v338
      %v521 = vunpack.c.l.b16 %v339
      %v522 = vunpack.c.l.b16 %v340
      %v523 = vunpack.c.l.b16 %v341
      %v524 = vunpack.c.l.b16 %v342
      %v525 = vunpack.c.l.b16 %v343
      %v526 = vunpack.c.l.b16 %v344
      %v527 = vunpack.c.l.b16 %v345
      %v528 = vunpack.c.l.b16 %v346
      %v529 = vunpack.c.l.b16 %v347
      %v530 = vunpack.c.l.b16 %v348
      %v531 = vunpack.c.l.b16 %v349
      %v532 = vunpack.c.l.b16 %v350
      %v533 = vunpack.c.l.b16 %v351
      %v534 = vunpack.c.l.b16 %v352
      %v535 = vunpack.c.l.b16 %v353
      %v536 = vpack.c.b16 %v518, %v517
      %v537 = vpack.c.b16 %v520, %v519
      %v538 = vpack.c.b16 %v522, %v521
      %v539 = vpack.c.b16 %v524, %v523
      %v540 = vpack.c.b16 %v526, %v525
      %v541 = vpack.c.b16 %v528, %v527
      %v542 = vpack.c.b16 %v530, %v529
      %v543 = vpack.c.b16 %v532, %v531
      %v544 = vpack.c.b16 %v534, %v533
      %v545 = vpack.c.b16 %v535, %v535
      %vm555 = vcmask 154624
      %v557 = vsel %vm555, %v451, 0
      %v560 = vsel %vm555, %v453, 0
      %v563 = vsel %vm555, %v455, 0
      %v566 = vsel %vm555, %v457, 0
      %v569 = vsel %vm555, %v459, 0
      %v572 = vsel %vm555, %v461, 0
      %v575 = vsel %vm555, %v463, 0
      %v578 = vsel %vm555, %v465, 0
      %v581 = vsel %vm555, %v467, 0
      %v584 = vsel %vm555, %v469, 0
      %v587 = vsel %vm555, %v471, 0
      %v590 = vsel %vm555, %v473, 0
      %v593 = vsel %vm555, %v475, 0
      %v596 = vsel %vm555, %v477, 0
      %v599 = vsel %vm555, %v479, 0
      %v602 = vsel %vm555, %v481, 0
      %vm604 = vcmask 1040384
      %vm605 = vcmask 1041408
      %v606 = vsel %vm604, 4294967295, 65535
      %v607 = vsel %vm605, %v606, 0
      %v609 = vand.u32 %v545, %v607
      %611 = vmatprep.subr.bf16.mxu0 0
      %612 = vmatpush1.bf16.msra.mxu0 %v536
      %613 = vmatprep.subr.bf16.mxu0 0
      %614 = vmatpush1.bf16.msra.mxu0 %v537
      %615 = vmatprep.subr.bf16.mxu0 0
      %616 = vmatpush1.bf16.msra.mxu0 %v538
      %617 = vmatprep.subr.bf16.mxu0 0
      %618 = vmatpush1.bf16.msra.mxu0 %v539
      %619 = vmatprep.subr.bf16.mxu0 0
      %620 = vmatpush1.bf16.msra.mxu0 %v540
      %621 = vmatprep.subr.bf16.mxu0 0
      %622 = vmatpush1.bf16.msra.mxu0 %v541
      %623 = vmatprep.subr.bf16.mxu0 0
      %624 = vmatpush1.bf16.msra.mxu0 %v542
      %625 = vmatprep.subr.bf16.mxu0 0
      %626 = vmatpush1.bf16.msra.mxu0 %v543
      %627 = vmatprep.subr.bf16.mxu0 0
      %628 = vmatpush1.bf16.msra.mxu0 %v544
      %629 = vmatprep.subr.bf16.mxu0 0
      %630 = vmatpush1.bf16.msra.mxu0 %v609
      %631 = vmatprep.subr.bf16.mxu0 0
      %632 = vmatpush1.bf16.msra.mxu0 0
      %633 = vmatprep.subr.bf16.mxu0 0
      %634 = vmatpush1.bf16.msra.mxu0 0
      %635 = vmatprep.subr.bf16.mxu0 0
      %636 = vmatpush1.bf16.msra.mxu0 0
      %637 = vmatprep.subr.bf16.mxu0 0
      %638 = vmatpush1.bf16.msra.mxu0 0
      %639 = vmatprep.subr.bf16.mxu0 0
      %640 = vmatpush1.bf16.msra.mxu0 0
      %641 = vmatprep.subr.bf16.mxu0 0
      %642 = vmatpush1.bf16.msra.mxu0 0
      %643 = vmatprep.mubr.bf16.mxu0 %v557
      %644 = vmatmul.mubr.bf16.gmra.mrb[0].mxu0 %v450
      %v645 = vpop.f32.mrb[0].mxu0
      %v646 = vadd.f32 0.0, %v645
      %v647 = vpop.f32.mrb[0].mxu0
      %v648 = vpop.f32.mrb[0].mxu0
      %v649 = vadd.f32 0.0, %v648
      %v650 = vpop.f32.mrb[0].mxu0
      %651 = vmatprep.mubr.bf16.mxu0 %v560
      %652 = vmatmul.mubr.bf16.gmra.mrb[0].mxu0 %v452
      %v653 = vpop.f32.mrb[0].mxu0
      %v654 = vadd.f32 0.0, %v653
      %v655 = vpop.f32.mrb[0].mxu0
      %v656 = vpop.f32.mrb[0].mxu0
      %v657 = vadd.f32 0.0, %v656
      %v658 = vpop.f32.mrb[0].mxu0
      %659 = vmatprep.mubr.bf16.mxu0 %v563
      %660 = vmatmul.mubr.bf16.gmra.mrb[0].mxu0 %v454
      %v661 = vpop.f32.mrb[0].mxu0
      %v662 = vadd.f32 0.0, %v661
      %v663 = vpop.f32.mrb[0].mxu0
      %v664 = vpop.f32.mrb[0].mxu0
      %v665 = vadd.f32 0.0, %v664
      %v666 = vpop.f32.mrb[0].mxu0
      %667 = vmatprep.mubr.bf16.mxu0 %v566
      %668 = vmatmul.mubr.bf16.gmra.mrb[0].mxu0 %v456
      %v669 = vpop.f32.mrb[0].mxu0
      %v670 = vadd.f32 0.0, %v669
      %v671 = vpop.f32.mrb[0].mxu0
      %v672 = vpop.f32.mrb[0].mxu0
      %v673 = vadd.f32 0.0, %v672
      %v674 = vpop.f32.mrb[0].mxu0
      %675 = vmatprep.mubr.bf16.mxu0 %v569
      %676 = vmatmul.mubr.bf16.gmra.mrb[0].mxu0 %v458
      %v677 = vpop.f32.mrb[0].mxu0
      %v678 = vadd.f32 0.0, %v677
      %v679 = vpop.f32.mrb[0].mxu0
      %v680 = vpop.f32.mrb[0].mxu0
      %v681 = vadd.f32 0.0, %v680
      %v682 = vpop.f32.mrb[0].mxu0
      %683 = vmatprep.mubr.bf16.mxu0 %v572
      %684 = vmatmul.mubr.bf16.gmra.mrb[0].mxu0 %v460
      %v685 = vpop.f32.mrb[0].mxu0
      %v686 = vadd.f32 0.0, %v685
      %v687 = vpop.f32.mrb[0].mxu0
      %v688 = vpop.f32.mrb[0].mxu0
      %v689 = vadd.f32 0.0, %v688
      %v690 = vpop.f32.mrb[0].mxu0
      %691 = vmatprep.mubr.bf16.mxu0 %v575
      %692 = vmatmul.mubr.bf16.gmra.mrb[0].mxu0 %v462
      %v693 = vpop.f32.mrb[0].mxu0
      %v694 = vadd.f32 0.0, %v693
      %v695 = vpop.f32.mrb[0].mxu0
      %v696 = vpop.f32.mrb[0].mxu0
      %v697 = vadd.f32 0.0, %v696
      %v698 = vpop.f32.mrb[0].mxu0
      %699 = vmatprep.mubr.bf16.mxu0 %v578
      %700 = vmatmul.mubr.bf16.gmra.mrb[0].mxu0 %v464
      %v701 = vpop.f32.mrb[0].mxu0
      %v702 = vadd.f32 0.0, %v701
      %v703 = vpop.f32.mrb[0].mxu0
      %v704 = vpop.f32.mrb[0].mxu0
      %v705 = vadd.f32 0.0, %v704
      %v706 = vpop.f32.mrb[0].mxu0
      %707 = vmatprep.mubr.bf16.mxu0 %v581
      %708 = vmatmul.mubr.bf16.gmra.mrb[0].mxu0 %v466
      %v709 = vpop.f32.mrb[0].mxu0
      %v710 = vadd.f32 0.0, %v709
      %v711 = vpop.f32.mrb[0].mxu0
      %v712 = vpop.f32.mrb[0].mxu0
      %v713 = vadd.f32 0.0, %v712
      %v714 = vpop.f32.mrb[0].mxu0
      %715 = vmatprep.mubr.bf16.mxu0 %v584
      %716 = vmatmul.mubr.bf16.gmra.mrb[0].mxu0 %v468
      %v717 = vpop.f32.mrb[0].mxu0
      %v718 = vadd.f32 0.0, %v717
      %v719 = vpop.f32.mrb[0].mxu0
      %v720 = vpop.f32.mrb[0].mxu0
      %v721 = vadd.f32 0.0, %v720
      %v722 = vpop.f32.mrb[0].mxu0
      %723 = vmatprep.mubr.bf16.mxu0 %v587
      %724 = vmatmul.mubr.bf16.gmra.mrb[0].mxu0 %v470
      %v725 = vpop.f32.mrb[0].mxu0
      %v726 = vadd.f32 0.0, %v725
      %v727 = vpop.f32.mrb[0].mxu0
      %v728 = vpop.f32.mrb[0].mxu0
      %v729 = vadd.f32 0.0, %v728
      %v730 = vpop.f32.mrb[0].mxu0
      %731 = vmatprep.mubr.bf16.mxu0 %v590
      %732 = vmatmul.mubr.bf16.gmra.mrb[0].mxu0 %v472
      %v733 = vpop.f32.mrb[0].mxu0
      %v734 = vadd.f32 0.0, %v733
      %v735 = vpop.f32.mrb[0].mxu0
      %v736 = vpop.f32.mrb[0].mxu0
      %v737 = vadd.f32 0.0, %v736
      %v738 = vpop.f32.mrb[0].mxu0
      %739 = vmatprep.mubr.bf16.mxu0 %v593
      %740 = vmatmul.mubr.bf16.gmra.mrb[0].mxu0 %v474
      %v741 = vpop.f32.mrb[0].mxu0
      %v742 = vadd.f32 0.0, %v741
      %v743 = vpop.f32.mrb[0].mxu0
      %v744 = vpop.f32.mrb[0].mxu0
      %v745 = vadd.f32 0.0, %v744
      %v746 = vpop.f32.mrb[0].mxu0
      %747 = vmatprep.mubr.bf16.mxu0 %v596
      %748 = vmatmul.mubr.bf16.gmra.mrb[0].mxu0 %v476
      %v749 = vpop.f32.mrb[0].mxu0
      %v750 = vadd.f32 0.0, %v749
      %v751 = vpop.f32.mrb[0].mxu0
      %v752 = vpop.f32.mrb[0].mxu0
      %v753 = vadd.f32 0.0, %v752
      %v754 = vpop.f32.mrb[0].mxu0
      %755 = vmatprep.mubr.bf16.mxu0 %v599
      %756 = vmatmul.mubr.bf16.gmra.mrb[0].mxu0 %v478
      %v757 = vpop.f32.mrb[0].mxu0
      %v758 = vadd.f32 0.0, %v757
      %v759 = vpop.f32.mrb[0].mxu0
      %v760 = vpop.f32.mrb[0].mxu0
      %v761 = vadd.f32 0.0, %v760
      %v762 = vpop.f32.mrb[0].mxu0
      %763 = vmatprep.mubr.bf16.mxu0 %v602
      %764 = vmatmul.mubr.bf16.gmra.mrb[0].mxu0 %v480
      %v765 = vpop.f32.mrb[0].mxu0
      %v766 = vadd.f32 0.0, %v765
      %v767 = vpop.f32.mrb[0].mxu0
      %v768 = vpop.f32.mrb[0].mxu0
      %v769 = vadd.f32 0.0, %v768
      %v770 = vpop.f32.mrb[0].mxu0
      %771 = vdwg.mxu0
      %v772 = vadd.f32 %v271, %v646
      %v773 = vadd.f32 %v272, %v649
      %v774 = vadd.f32 %v273, %v654
      %v775 = vadd.f32 %v274, %v657
      %v776 = vadd.f32 %v275, %v662
      %v777 = vadd.f32 %v276, %v665
      %v778 = vadd.f32 %v277, %v670
      %v779 = vadd.f32 %v278, %v673
      %v780 = vadd.f32 %v279, %v678
      %v781 = vadd.f32 %v280, %v681
      %v782 = vadd.f32 %v281, %v686
      %v783 = vadd.f32 %v282, %v689
      %v784 = vadd.f32 %v283, %v694
      %v785 = vadd.f32 %v284, %v697
      %v786 = vadd.f32 %v285, %v702
      %v787 = vadd.f32 %v286, %v705
      %v788 = vadd.f32 %v287, %v710
      %v789 = vadd.f32 %v288, %v713
      %v790 = vadd.f32 %v289, %v718
      %v791 = vadd.f32 %v290, %v721
      %v792 = vadd.f32 %v291, %v726
      %v793 = vadd.f32 %v292, %v729
      %v794 = vadd.f32 %v293, %v734
      %v795 = vadd.f32 %v294, %v737
      %v796 = vadd.f32 %v295, %v742
      %v797 = vadd.f32 %v296, %v745
      %v798 = vadd.f32 %v297, %v750
      %v799 = vadd.f32 %v298, %v753
      %v800 = vadd.f32 %v299, %v758
      %v801 = vadd.f32 %v300, %v761
      %v802 = vadd.f32 %v301, %v766
      %v803 = vadd.f32 %v302, %v769
      %804 = vst [vmem:[#allocation2] sm:$0xff] %v772
      %805 = vst [vmem:[#allocation2 + $0x8] sm:$0xff] %v773
      %806 = vst [vmem:[#allocation2 + $0x10] sm:$0xff] %v774
      %807 = vst [vmem:[#allocation2 + $0x18] sm:$0xff] %v775
      %808 = vst [vmem:[#allocation2 + $0x20] sm:$0xff] %v776
      %809 = vst [vmem:[#allocation2 + $0x28] sm:$0xff] %v777
      %810 = vst [vmem:[#allocation2 + $0x30] sm:$0xff] %v778
      %811 = vst [vmem:[#allocation2 + $0x38] sm:$0xff] %v779
      %812 = vst [vmem:[#allocation2 + $0x40] sm:$0xff] %v780
      %813 = vst [vmem:[#allocation2 + $0x48] sm:$0xff] %v781
      %814 = vst [vmem:[#allocation2 + $0x50] sm:$0xff] %v782
      %815 = vst [vmem:[#allocation2 + $0x58] sm:$0xff] %v783
      %816 = vst [vmem:[#allocation2 + $0x60] sm:$0xff] %v784
      %817 = vst [vmem:[#allocation2 + $0x68] sm:$0xff] %v785
      %818 = vst [vmem:[#allocation2 + $0x70] sm:$0xff] %v786
      %819 = vst [vmem:[#allocation2 + $0x78] sm:$0xff] %v787
      %820 = vst [vmem:[#allocation2 + $0x80] sm:$0xff] %v788
      %821 = vst [vmem:[#allocation2 + $0x88] sm:$0xff] %v789
      %822 = vst [vmem:[#allocation2 + $0x90] sm:$0xff] %v790
      %823 = vst [vmem:[#allocation2 + $0x98] sm:$0xff] %v791
      %824 = vst [vmem:[#allocation2 + $0xa0] sm:$0xff] %v792
      %825 = vst [vmem:[#allocation2 + $0xa8] sm:$0xff] %v793
      %826 = vst [vmem:[#allocation2 + $0xb0] sm:$0xff] %v794
      %827 = vst [vmem:[#allocation2 + $0xb8] sm:$0xff] %v795
      %828 = vst [vmem:[#allocation2 + $0xc0] sm:$0xff] %v796
      %829 = vst [vmem:[#allocation2 + $0xc8] sm:$0xff] %v797
      %830 = vst [vmem:[#allocation2 + $0xd0] sm:$0xff] %v798
      %831 = vst [vmem:[#allocation2 + $0xd8] sm:$0xff] %v799
      %832 = vst [vmem:[#allocation2 + $0xe0] sm:$0xff] %v800
      %833 = vst [vmem:[#allocation2 + $0xe8] sm:$0xff] %v801
      %834 = vst [vmem:[#allocation2 + $0xf0] sm:$0xff] %v802
      %835 = vst [vmem:[#allocation2 + $0xf8] sm:$0xff] %v803
      // Predicated region
      $region37: #{_lambda_.8} parent=31 // pred_check
        %p836 = pneg %p228
      $region38: #{_lambda_.8} parent=31 // pred_check_branch
        %838 = sbr.rel (%p836) target = $region40
      $region39: #{_lambda_.8} parent=31 // pred_region
        %v839 = vld [vmem:[#allocation2] sm:$0xff]
        %v840 = vld [vmem:[#allocation2 + $0x8] sm:$0xff]
        %v841 = vld [vmem:[#allocation2 + $0x10] sm:$0xff]
        %v842 = vld [vmem:[#allocation2 + $0x18] sm:$0xff]
        %v843 = vld [vmem:[#allocation2 + $0x20] sm:$0xff]
        %v844 = vld [vmem:[#allocation2 + $0x28] sm:$0xff]
        %v845 = vld [vmem:[#allocation2 + $0x30] sm:$0xff]
        %v846 = vld [vmem:[#allocation2 + $0x38] sm:$0xff]
        %v847 = vld [vmem:[#allocation2 + $0x40] sm:$0xff]
        %v848 = vld [vmem:[#allocation2 + $0x48] sm:$0xff]
        %v849 = vld [vmem:[#allocation2 + $0x50] sm:$0xff]
        %v850 = vld [vmem:[#allocation2 + $0x58] sm:$0xff]
        %v851 = vld [vmem:[#allocation2 + $0x60] sm:$0xff]
        %v852 = vld [vmem:[#allocation2 + $0x68] sm:$0xff]
        %v853 = vld [vmem:[#allocation2 + $0x70] sm:$0xff]
        %v854 = vld [vmem:[#allocation2 + $0x78] sm:$0xff]
        %v855 = vld [vmem:[#allocation2 + $0x80] sm:$0xff]
        %v856 = vld [vmem:[#allocation2 + $0x88] sm:$0xff]
        %v857 = vld [vmem:[#allocation2 + $0x90] sm:$0xff]
        %v858 = vld [vmem:[#allocation2 + $0x98] sm:$0xff]
        %v859 = vld [vmem:[#allocation2 + $0xa0] sm:$0xff]
        %v860 = vld [vmem:[#allocation2 + $0xa8] sm:$0xff]
        %v861 = vld [vmem:[#allocation2 + $0xb0] sm:$0xff]
        %v862 = vld [vmem:[#allocation2 + $0xb8] sm:$0xff]
        %v863 = vld [vmem:[#allocation2 + $0xc0] sm:$0xff]
        %v864 = vld [vmem:[#allocation2 + $0xc8] sm:$0xff]
        %v865 = vld [vmem:[#allocation2 + $0xd0] sm:$0xff]
        %v866 = vld [vmem:[#allocation2 + $0xd8] sm:$0xff]
        %v867 = vld [vmem:[#allocation2 + $0xe0] sm:$0xff]
        %v868 = vld [vmem:[#allocation2 + $0xe8] sm:$0xff]
        %v869 = vld [vmem:[#allocation2 + $0xf0] sm:$0xff]
        %v870 = vld [vmem:[#allocation2 + $0xf8] sm:$0xff]
        %v871 = vadd.f32 %v839, %v840
        %v872 = vadd.f32 %v871, %v841
        %v873 = vadd.f32 %v872, %v842
        %v874 = vadd.f32 %v873, %v843
        %v875 = vadd.f32 %v874, %v844
        %v876 = vadd.f32 %v875, %v845
        %v877 = vadd.f32 %v876, %v846
        %v878 = vadd.f32 %v877, %v847
        %v879 = vadd.f32 %v878, %v848
        %v880 = vadd.f32 %v879, %v849
        %v881 = vadd.f32 %v880, %v850
        %v882 = vadd.f32 %v881, %v851
        %v883 = vadd.f32 %v882, %v852
        %v884 = vadd.f32 %v883, %v853
        %v885 = vadd.f32 %v884, %v854
        %v886 = vadd.f32 %v885, %v855
        %v887 = vadd.f32 %v886, %v856
        %v888 = vadd.f32 %v887, %v857
        %v889 = vadd.f32 %v888, %v858
        %v890 = vadd.f32 %v889, %v859
        %v891 = vadd.f32 %v890, %v860
        %v892 = vadd.f32 %v891, %v861
        %v893 = vadd.f32 %v892, %v862
        %v894 = vadd.f32 %v893, %v863
        %v895 = vadd.f32 %v894, %v864
        %v896 = vadd.f32 %v895, %v865
        %v897 = vadd.f32 %v896, %v866
        %v898 = vadd.f32 %v897, %v867
        %v899 = vadd.f32 %v898, %v868
        %v900 = vadd.f32 %v899, %v869
        %v901 = vadd.f32 %v900, %v870
        %v902 = vrot.slane %v901, 4
        %v903 = vadd.f32 %v901, %v902
        %v904 = vrot.slane %v903, 2
        %v905 = vadd.f32 %v903, %v904
        %v906 = vrot.slane %v905, 1
        %v907 = vadd.f32 %v905, %v906
        %v908 = vrcp.pop 256.0
        %v909 = vmul.f32 %v907, %v908
        %v910 = vsub.f32 %v839, %v909
        %v911 = vsub.f32 %v840, %v909
        %v912 = vsub.f32 %v841, %v909
        %v913 = vsub.f32 %v842, %v909
        %v914 = vsub.f32 %v843, %v909
        %v915 = vsub.f32 %v844, %v909
        %v916 = vsub.f32 %v845, %v909
        %v917 = vsub.f32 %v846, %v909
        %v918 = vsub.f32 %v847, %v909
        %v919 = vsub.f32 %v848, %v909
        %v920 = vsub.f32 %v849, %v909
        %v921 = vsub.f32 %v850, %v909
        %v922 = vsub.f32 %v851, %v909
        %v923 = vsub.f32 %v852, %v909
        %v924 = vsub.f32 %v853, %v909
        %v925 = vsub.f32 %v854, %v909
        %v926 = vsub.f32 %v855, %v909
        %v927 = vsub.f32 %v856, %v909
        %v928 = vsub.f32 %v857, %v909
        %v929 = vsub.f32 %v858, %v909
        %v930 = vsub.f32 %v859, %v909
        %v931 = vsub.f32 %v860, %v909
        %v932 = vsub.f32 %v861, %v909
        %v933 = vsub.f32 %v862, %v909
        %v934 = vsub.f32 %v863, %v909
        %v935 = vsub.f32 %v864, %v909
        %v936 = vsub.f32 %v865, %v909
        %v937 = vsub.f32 %v866, %v909
        %v938 = vsub.f32 %v867, %v909
        %v939 = vsub.f32 %v868, %v909
        %v940 = vsub.f32 %v869, %v909
        %v941 = vsub.f32 %v870, %v909
        %v942 = vmul.f32 %v910, %v910
        %v943 = vmul.f32 %v911, %v911
        %v944 = vmul.f32 %v912, %v912
        %v945 = vmul.f32 %v913, %v913
        %v946 = vmul.f32 %v914, %v914
        %v947 = vmul.f32 %v915, %v915
        %v948 = vmul.f32 %v916, %v916
        %v949 = vmul.f32 %v917, %v917
        %v950 = vmul.f32 %v918, %v918
        %v951 = vmul.f32 %v919, %v919
        %v952 = vmul.f32 %v920, %v920
        %v953 = vmul.f32 %v921, %v921
        %v954 = vmul.f32 %v922, %v922
        %v955 = vmul.f32 %v923, %v923
        %v956 = vmul.f32 %v924, %v924
        %v957 = vmul.f32 %v925, %v925
        %v958 = vmul.f32 %v926, %v926
        %v959 = vmul.f32 %v927, %v927
        %v960 = vmul.f32 %v928, %v928
        %v961 = vmul.f32 %v929, %v929
        %v962 = vmul.f32 %v930, %v930
        %v963 = vmul.f32 %v931, %v931
        %v964 = vmul.f32 %v932, %v932
        %v965 = vmul.f32 %v933, %v933
        %v966 = vmul.f32 %v934, %v934
        %v967 = vmul.f32 %v935, %v935
        %v968 = vmul.f32 %v936, %v936
        %v969 = vmul.f32 %v937, %v937
        %v970 = vmul.f32 %v938, %v938
        %v971 = vmul.f32 %v939, %v939
        %v972 = vmul.f32 %v940, %v940
        %v973 = vmul.f32 %v941, %v941
        %v974 = vadd.f32 %v942, %v943
        %v975 = vadd.f32 %v974, %v944
        %v976 = vadd.f32 %v975, %v945
        %v977 = vadd.f32 %v976, %v946
        %v978 = vadd.f32 %v977, %v947
        %v979 = vadd.f32 %v978, %v948
        %v980 = vadd.f32 %v979, %v949
        %v981 = vadd.f32 %v980, %v950
        %v982 = vadd.f32 %v981, %v951
        %v983 = vadd.f32 %v982, %v952
        %v984 = vadd.f32 %v983, %v953
        %v985 = vadd.f32 %v984, %v954
        %v986 = vadd.f32 %v985, %v955
        %v987 = vadd.f32 %v986, %v956
        %v988 = vadd.f32 %v987, %v957
        %v989 = vadd.f32 %v988, %v958
        %v990 = vadd.f32 %v989, %v959
        %v991 = vadd.f32 %v990, %v960
        %v992 = vadd.f32 %v991, %v961
        %v993 = vadd.f32 %v992, %v962
        %v994 = vadd.f32 %v993, %v963
        %v995 = vadd.f32 %v994, %v964
        %v996 = vadd.f32 %v995, %v965
        %v997 = vadd.f32 %v996, %v966
        %v998 = vadd.f32 %v997, %v967
        %v999 = vadd.f32 %v998, %v968
        %v1000 = vadd.f32 %v999, %v969
        %v1001 = vadd.f32 %v1000, %v970
        %v1002 = vadd.f32 %v1001, %v971
        %v1003 = vadd.f32 %v1002, %v972
        %v1004 = vadd.f32 %v1003, %v973
        %v1005 = vrot.slane %v1004, 4
        %v1006 = vadd.f32 %v1004, %v1005
        %v1007 = vrot.slane %v1006, 2
        %v1008 = vadd.f32 %v1006, %v1007
        %v1009 = vrot.slane %v1008, 1
        %v1010 = vadd.f32 %v1008, %v1009
        %v1011 = vmul.f32 %v1010, %v908
        %v1012 = vadd.f32 %v1011, 1e-05
        %v1013 = vrsqrt.pop %v1012
        %v1014 = vmul.f32 %v910, %v1013
        %v1015 = vmul.f32 %v911, %v1013
        %v1016 = vmul.f32 %v912, %v1013
        %v1017 = vmul.f32 %v913, %v1013
        %v1018 = vmul.f32 %v914, %v1013
        %v1019 = vmul.f32 %v915, %v1013
        %v1020 = vmul.f32 %v916, %v1013
        %v1021 = vmul.f32 %v917, %v1013
        %v1022 = vmul.f32 %v918, %v1013
        %v1023 = vmul.f32 %v919, %v1013
        %v1024 = vmul.f32 %v920, %v1013
        %v1025 = vmul.f32 %v921, %v1013
        %v1026 = vmul.f32 %v922, %v1013
        %v1027 = vmul.f32 %v923, %v1013
        %v1028 = vmul.f32 %v924, %v1013
        %v1029 = vmul.f32 %v925, %v1013
        %v1030 = vmul.f32 %v926, %v1013
        %v1031 = vmul.f32 %v927, %v1013
        %v1032 = vmul.f32 %v928, %v1013
        %v1033 = vmul.f32 %v929, %v1013
        %v1034 = vmul.f32 %v930, %v1013
        %v1035 = vmul.f32 %v931, %v1013
        %v1036 = vmul.f32 %v932, %v1013
        %v1037 = vmul.f32 %v933, %v1013
        %v1038 = vmul.f32 %v934, %v1013
        %v1039 = vmul.f32 %v935, %v1013
        %v1040 = vmul.f32 %v936, %v1013
        %v1041 = vmul.f32 %v937, %v1013
        %v1042 = vmul.f32 %v938, %v1013
        %v1043 = vmul.f32 %v939, %v1013
        %v1044 = vmul.f32 %v940, %v1013
        %v1045 = vmul.f32 %v941, %v1013
        %v1046 = vmax.f32 %v1014, 0.0
        %v1047 = vmax.f32 %v1015, 0.0
        %v1048 = vmax.f32 %v1016, 0.0
        %v1049 = vmax.f32 %v1017, 0.0
        %v1050 = vmax.f32 %v1018, 0.0
        %v1051 = vmax.f32 %v1019, 0.0
        %v1052 = vmax.f32 %v1020, 0.0
        %v1053 = vmax.f32 %v1021, 0.0
        %v1054 = vmax.f32 %v1022, 0.0
        %v1055 = vmax.f32 %v1023, 0.0
        %v1056 = vmax.f32 %v1024, 0.0
        %v1057 = vmax.f32 %v1025, 0.0
        %v1058 = vmax.f32 %v1026, 0.0
        %v1059 = vmax.f32 %v1027, 0.0
        %v1060 = vmax.f32 %v1028, 0.0
        %v1061 = vmax.f32 %v1029, 0.0
        %v1062 = vmax.f32 %v1030, 0.0
        %v1063 = vmax.f32 %v1031, 0.0
        %v1064 = vmax.f32 %v1032, 0.0
        %v1065 = vmax.f32 %v1033, 0.0
        %v1066 = vmax.f32 %v1034, 0.0
        %v1067 = vmax.f32 %v1035, 0.0
        %v1068 = vmax.f32 %v1036, 0.0
        %v1069 = vmax.f32 %v1037, 0.0
        %v1070 = vmax.f32 %v1038, 0.0
        %v1071 = vmax.f32 %v1039, 0.0
        %v1072 = vmax.f32 %v1040, 0.0
        %v1073 = vmax.f32 %v1041, 0.0
        %v1074 = vmax.f32 %v1042, 0.0
        %v1075 = vmax.f32 %v1043, 0.0
        %v1076 = vmax.f32 %v1044, 0.0
        %v1077 = vmax.f32 %v1045, 0.0
        %v1078 = vpack.c.bf16 %v1047, %v1046
        %v1079 = vpack.c.bf16 %v1049, %v1048
        %v1080 = vpack.c.bf16 %v1051, %v1050
        %v1081 = vpack.c.bf16 %v1053, %v1052
        %v1082 = vpack.c.bf16 %v1055, %v1054
        %v1083 = vpack.c.bf16 %v1057, %v1056
        %v1084 = vpack.c.bf16 %v1059, %v1058
        %v1085 = vpack.c.bf16 %v1061, %v1060
        %v1086 = vpack.c.bf16 %v1063, %v1062
        %v1087 = vpack.c.bf16 %v1065, %v1064
        %v1088 = vpack.c.bf16 %v1067, %v1066
        %v1089 = vpack.c.bf16 %v1069, %v1068
        %v1090 = vpack.c.bf16 %v1071, %v1070
        %v1091 = vpack.c.bf16 %v1073, %v1072
        %v1092 = vpack.c.bf16 %v1075, %v1074
        %v1093 = vpack.c.bf16 %v1077, %v1076
        %v1110 = vunpack.c.l.b16 %v1078
        %v1111 = vunpack.c.h.b16 %v1078
        %v1112 = vunpack.c.l.b16 %v1079
        %v1113 = vunpack.c.h.b16 %v1079
        %v1114 = vunpack.c.l.b16 %v1080
        %v1115 = vunpack.c.h.b16 %v1080
        %v1116 = vunpack.c.l.b16 %v1081
        %v1117 = vunpack.c.h.b16 %v1081
        %v1118 = vunpack.c.l.b16 %v1082
        %v1119 = vunpack.c.h.b16 %v1082
        %v1120 = vunpack.c.l.b16 %v1083
        %v1121 = vunpack.c.h.b16 %v1083
        %v1122 = vunpack.c.l.b16 %v1084
        %v1123 = vunpack.c.h.b16 %v1084
        %v1124 = vunpack.c.l.b16 %v1085
        %v1125 = vunpack.c.h.b16 %v1085
        %v1126 = vunpack.c.l.b16 %v1086
        %v1127 = vunpack.c.h.b16 %v1086
        %v1128 = vunpack.c.l.b16 %v1087
        %v1129 = vunpack.c.h.b16 %v1087
        %v1130 = vunpack.c.l.b16 %v1088
        %v1131 = vunpack.c.h.b16 %v1088
        %v1132 = vunpack.c.l.b16 %v1089
        %v1133 = vunpack.c.h.b16 %v1089
        %v1134 = vunpack.c.l.b16 %v1090
        %v1135 = vunpack.c.h.b16 %v1090
        %v1136 = vunpack.c.l.b16 %v1091
        %v1137 = vunpack.c.h.b16 %v1091
        %v1138 = vunpack.c.l.b16 %v1092
        %v1139 = vunpack.c.h.b16 %v1092
        %v1140 = vunpack.c.l.b16 %v1093
        %v1141 = vunpack.c.h.b16 %v1093
        %v1142 = vpack.c.b16 %v1110, %v1110
        %v1143 = vpack.c.b16 %v1111, %v1111
        %v1144 = vpack.c.b16 %v1112, %v1112
        %v1145 = vpack.c.b16 %v1113, %v1113
        %v1146 = vpack.c.b16 %v1114, %v1114
        %v1147 = vpack.c.b16 %v1115, %v1115
        %v1148 = vpack.c.b16 %v1116, %v1116
        %v1149 = vpack.c.b16 %v1117, %v1117
        %v1150 = vpack.c.b16 %v1118, %v1118
        %v1151 = vpack.c.b16 %v1119, %v1119
        %v1152 = vpack.c.b16 %v1120, %v1120
        %v1153 = vpack.c.b16 %v1121, %v1121
        %v1154 = vpack.c.b16 %v1122, %v1122
        %v1155 = vpack.c.b16 %v1123, %v1123
        %v1156 = vpack.c.b16 %v1124, %v1124
        %v1157 = vpack.c.b16 %v1125, %v1125
        %v1158 = vpack.c.b16 %v1126, %v1126
        %v1159 = vpack.c.b16 %v1127, %v1127
        %v1160 = vpack.c.b16 %v1128, %v1128
        %v1161 = vpack.c.b16 %v1129, %v1129
        %v1162 = vpack.c.b16 %v1130, %v1130
        %v1163 = vpack.c.b16 %v1131, %v1131
        %v1164 = vpack.c.b16 %v1132, %v1132
        %v1165 = vpack.c.b16 %v1133, %v1133
        %v1166 = vpack.c.b16 %v1134, %v1134
        %v1167 = vpack.c.b16 %v1135, %v1135
        %v1168 = vpack.c.b16 %v1136, %v1136
        %v1169 = vpack.c.b16 %v1137, %v1137
        %v1170 = vpack.c.b16 %v1138, %v1138
        %v1171 = vpack.c.b16 %v1139, %v1139
        %v1172 = vpack.c.b16 %v1140, %v1140
        %v1173 = vpack.c.b16 %v1141, %v1141
        %1206 = vst [vmem:[%s225] sm:$0xf] %v1142
        %1207 = vst [vmem:[%s225 + $0x4] sm:$0xf] %v1143
        %1208 = vst [vmem:[%s225 + $0x8] sm:$0xf] %v1144
        %1209 = vst [vmem:[%s225 + $0xc] sm:$0xf] %v1145
        %1210 = vst [vmem:[%s225 + $0x10] sm:$0xf] %v1146
        %1211 = vst [vmem:[%s225 + $0x14] sm:$0xf] %v1147
        %1212 = vst [vmem:[%s225 + $0x18] sm:$0xf] %v1148
        %1213 = vst [vmem:[%s225 + $0x1c] sm:$0xf] %v1149
        %1214 = vst [vmem:[%s225 + $0x20] sm:$0xf] %v1150
        %1215 = vst [vmem:[%s225 + $0x24] sm:$0xf] %v1151
        %1216 = vst [vmem:[%s225 + $0x28] sm:$0xf] %v1152
        %1217 = vst [vmem:[%s225 + $0x2c] sm:$0xf] %v1153
        %1218 = vst [vmem:[%s225 + $0x30] sm:$0xf] %v1154
        %1219 = vst [vmem:[%s225 + $0x34] sm:$0xf] %v1155
        %1220 = vst [vmem:[%s225 + $0x38] sm:$0xf] %v1156
        %1221 = vst [vmem:[%s225 + $0x3c] sm:$0xf] %v1157
        %1222 = vst [vmem:[%s225 + $0x40] sm:$0xf] %v1158
        %1223 = vst [vmem:[%s225 + $0x44] sm:$0xf] %v1159
        %1224 = vst [vmem:[%s225 + $0x48] sm:$0xf] %v1160
        %1225 = vst [vmem:[%s225 + $0x4c] sm:$0xf] %v1161
        %1226 = vst [vmem:[%s225 + $0x50] sm:$0xf] %v1162
        %1227 = vst [vmem:[%s225 + $0x54] sm:$0xf] %v1163
        %1228 = vst [vmem:[%s225 + $0x58] sm:$0xf] %v1164
        %1229 = vst [vmem:[%s225 + $0x5c] sm:$0xf] %v1165
        %1230 = vst [vmem:[%s225 + $0x60] sm:$0xf] %v1166
        %1231 = vst [vmem:[%s225 + $0x64] sm:$0xf] %v1167
        %1232 = vst [vmem:[%s225 + $0x68] sm:$0xf] %v1168
        %1233 = vst [vmem:[%s225 + $0x6c] sm:$0xf] %v1169
        %1234 = vst [vmem:[%s225 + $0x70] sm:$0xf] %v1170
        %1235 = vst [vmem:[%s225 + $0x74] sm:$0xf] %v1171
        %1236 = vst [vmem:[%s225 + $0x78] sm:$0xf] %v1172
        %1237 = vst [vmem:[%s225 + $0x7c] sm:$0xf] %v1173
      $region40: #{_lambda_.8} parent=31 // pred_fallthru
        _
      %s1238 = smul.u32 32, %s18
      %p1239 = scmp.lt.s32.totalorder %s1238, 63
      %s1240 = scalar_select %p1239, %s1238, 63
      %s1241 = smul.addr %s1240, 4
      %s1242 = scalar_lea.vmem %s3, %s1241
      // Predicated region
      $region41: #{_lambda_.8} parent=31 // pred_check
        %p1243 = pneg %p119
      $region42: #{_lambda_.8} parent=31 // pred_check_branch
        %1245 = sbr.rel (%p1243) target = $region44
      $region43: #{_lambda_.8} parent=31 // pred_region
        %s1246 = smul.u32 32, %s18
      $region44: #{_lambda_.8} parent=31 // pred_fallthru
        _
    $region32: #{_lambda_.8} parent=5 // pred_fallthru
      _
    %p1247 = scmp.le.s32.totalorder 2, %s9
    // Predicated region
    $region45: #{_lambda_.8} parent=5 // pred_check
      %p1248 = pneg %p1247
    $region46: #{_lambda_.8} parent=5 // pred_check_branch
      %1250 = sbr.rel (%p1248) target = $region48
    $region47: #{_lambda_.8} parent=5 // pred_region
      %s1251 = ssub.s32 %s9, 2
      // Predicated region
      $region49: #{_lambda_.8} parent=47 // pred_check
        %p1252 = pneg %p125
      $region50: #{_lambda_.8} parent=47 // pred_check_branch
        %1254 = sbr.rel (%p1252) target = $region52
      $region51: #{_lambda_.8} parent=47 // pred_region
        %s1255 = smul.u32 32, %s20
        %p1256 = scmp.lt.s32.totalorder %s1255, 63
        %s1257 = scalar_select %p1256, %s1255, 63
        %s1258 = smul.addr %s1257, 4
        %s1259 = scalar_lea.vmem %s3, %s1258
      $region52: #{_lambda_.8} parent=47 // pred_fallthru
        _
    $region48: #{_lambda_.8} parent=5 // pred_fallthru
      _
  $region6: #{_lambda_.8} parent=0 // loop_footer
    %s13 = sadd.s32 1, %s9
  $region7: #{_lambda_.8} parent=0 // loop_footer_branch
    %8 = sbr.rel target = $region3
  $region8: #{_lambda_.8} parent=0 // loop_exit
    _

// kernel: _lambda_.9
$region0: #{_lambda_.9}
  #allocation0 [shape = 'u32[]', space=smem, size = 0x4, offset = 0x4, fixed_abs, tag = 'smem constant byte address 0x4 - core index']
  #allocation1 [shape = 'u32[144,128]{1,0:T(1,128)}', space=vmem, size = 0x12000, scoped, tag = 'internal scratch']
  #allocation2 [shape = 'f32[64,128]{1,0:T(8,128)}', space=vmem, size = 0x8000, scoped, tag = 'scratch operand']
  %s0 = inlined_call_operand.vmem [shape: bf16[128,1152], index: 0, kind: input, shape index: {}]
  %s1 = inlined_call_operand.vmem [shape: bf16[1152,128], index: 1, kind: input, shape index: {}]
  %s2 = inlined_call_operand.vmem [shape: f32[1,128], index: 2, kind: input, shape index: {}]
  %s3 = inlined_call_operand.vmem [shape: bf16[128,128], index: 3, kind: output, shape index: {}]
  %s4 = sld [smem:[#allocation0]]
  $region79: #{_lambda_.9} parent=0
    _
  %s6 = ssub.s32 1, %s4
  %s7 = scalar_select 0, %s6, %s4
  $region1: #{_lambda_.9} parent=0
    #allocation3 [shape = 'u8[98304]{0}', space=vmem, size = 0x18000, scoped, tag = 'input window, operand 0']
    loop: start=0, step=1, limit=8
    $region2: #{_lambda_.9} parent=1 // loop_pre_header
      _
    $region3: #{_lambda_.9} parent=1 // loop_header
      %s9 = sphi 0, %s13
      %p10 = scmp.ge.s32.totalorder %s9, 8
      %s16 = sphi 0, %s28
      %s17 = sphi 0, %s24
      %s18 = sphi 0, %s16
      %s19 = sphi 0, %s17
      %s20 = sphi 0, %s18
      %s21 = sphi 0, %s19
      %s33 = sphi 0, %s35
      %s36 = sphi 0, %s33
      %s37 = sphi 0, %s36
      %s53 = sphi 0, %s37
      %s59 = sphi 0, %s61
      %s62 = sphi 0, %s59
      %s63 = sphi 0, %s62
      %s79 = sphi 0, %s63
      %s83 = sphi 0, %s83
      %s85 = sphi 0, %s83
      %s86 = sphi 0, %s85
      %s100 = sphi 0, %s86
      %s106 = sphi 0, %s108
      %s109 = sphi 0, %s106
      %s110 = sphi 0, %s109
      %s126 = sphi 0, %s110
    $region4: #{_lambda_.9} parent=1 // loop_header_branch
      %12 = sbr.rel (%p10) target = $region8
    $region5: #{_lambda_.9} parent=1 // loop_body
      %s14 = ssub.s32 %s9, 1
      %s15 = ssub.s32 %s9, 2
      %s22 = sadd.s32 1, %s17
      %p23 = scmp.ge.s32.totalorder %s22, 3
      %s24 = scalar_select %p23, 0, %s22
      %s25 = sadd.s32 1, %s16
      %s26 = scalar_select %p23, %s25, %s16
      %p27 = scmp.ge.s32.totalorder %s26, 2
      %s28 = scalar_select %p27, 0, %s26
      %s29 = ssub.s32 %s16, %s28
      %s30 = ssub.s32 %s17, %s24
      %s31 = sor.u32 %s29, %s30
      %p32 = scmp.eq.s32.totalorder %s31, 0
      %s34 = sadd.s32 %s33, 1
      %s35 = scalar_select %p32, %s33, %s34
      %p38 = pneg %p32
      %p39 = scmp.eq.s32.totalorder %s9, 5
      %p40 = por %p38, %p39
      %p41 = scmp.ne.s32.totalorder %s33, %s36
      %p42 = scmp.eq.s32.totalorder %s9, 0
      %p43 = por %p41, %p42
      %p44 = scmp.ne.s32.totalorder %s33, %s36
      %p45 = scmp.eq.s32.totalorder %s14, 5
      %p46 = por %p44, %p45
      %p47 = scmp.ne.s32.totalorder %s36, %s37
      %p48 = scmp.eq.s32.totalorder %s14, 0
      %p49 = por %p47, %p48
      %p50 = scmp.ne.s32.totalorder %s36, %s37
      %p51 = scmp.eq.s32.totalorder %s15, 5
      %p52 = por %p50, %p51
      %p54 = scmp.ne.s32.totalorder %s37, %s53
      %p55 = scmp.eq.s32.totalorder %s15, 0
      %p56 = por %p54, %p55
      %s57 = ssub.s32 %s17, %s24
      %p58 = scmp.eq.s32.totalorder %s57, 0
      %s60 = sadd.s32 %s59, 1
      %s61 = scalar_select %p58, %s59, %s60
      %p64 = pneg %p58
      %p65 = scmp.eq.s32.totalorder %s9, 5
      %p66 = por %p64, %p65
      %p67 = scmp.ne.s32.totalorder %s59, %s62
      %p68 = scmp.eq.s32.totalorder %s9, 0
      %p69 = por %p67, %p68
      %p70 = scmp.ne.s32.totalorder %s59, %s62
      %p71 = scmp.eq.s32.totalorder %s14, 5
      %p72 = por %p70, %p71
      %p73 = scmp.ne.s32.totalorder %s62, %s63
      %p74 = scmp.eq.s32.totalorder %s14, 0
      %p75 = por %p73, %p74
      %p76 = scmp.ne.s32.totalorder %s62, %s63
      %p77 = scmp.eq.s32.totalorder %s15, 5
      %p78 = por %p76, %p77
      %p80 = scmp.ne.s32.totalorder %s63, %s79
      %p81 = scmp.eq.s32.totalorder %s15, 0
      %p82 = por %p80, %p81
      %s84 = sadd.s32 %s83, 1
      %p87 = scmp.eq.s32.totalorder %s9, 5
      %p88 = scmp.ne.s32.totalorder %s83, %s85
      %p89 = scmp.eq.s32.totalorder %s9, 0
      %p90 = por %p88, %p89
      %p91 = scmp.ne.s32.totalorder %s83, %s85
      %p92 = scmp.eq.s32.totalorder %s14, 5
      %p93 = por %p91, %p92
      %p94 = scmp.ne.s32.totalorder %s85, %s86
      %p95 = scmp.eq.s32.totalorder %s14, 0
      %p96 = por %p94, %p95
      %p97 = scmp.ne.s32.totalorder %s85, %s86
      %p98 = scmp.eq.s32.totalorder %s15, 5
      %p99 = por %p97, %p98
      %p101 = scmp.ne.s32.totalorder %s86, %s100
      %p102 = scmp.eq.s32.totalorder %s15, 0
      %p103 = por %p101, %p102
      %s104 = ssub.s32 %s16, %s28
      %p105 = scmp.eq.s32.totalorder %s104, 0
      %s107 = sadd.s32 %s106, 1
      %s108 = scalar_select %p105, %s106, %s107
      %p111 = pneg %p105
      %p112 = scmp.eq.s32.totalorder %s9, 5
      %p113 = por %p111, %p112
      %p114 = scmp.ne.s32.totalorder %s106, %s109
      %p115 = scmp.eq.s32.totalorder %s9, 0
      %p116 = por %p114, %p115
      %p117 = scmp.ne.s32.totalorder %s106, %s109
      %p118 = scmp.eq.s32.totalorder %s14, 5
      %p119 = por %p117, %p118
      %p120 = scmp.ne.s32.totalorder %s109, %s110
      %p121 = scmp.eq.s32.totalorder %s14, 0
      %p122 = por %p120, %p121
      %p123 = scmp.ne.s32.totalorder %s109, %s110
      %p124 = scmp.eq.s32.totalorder %s15, 5
      %p125 = por %p123, %p124
      %p127 = scmp.ne.s32.totalorder %s110, %s126
      %p128 = scmp.eq.s32.totalorder %s15, 0
      %p129 = por %p127, %p128
      %p130 = scmp.le.s32.totalorder 1, %s9
      %p131 = scmp.lt.s32.totalorder %s9, 7
      %p132 = pnand %p130, %p131
      %p133 = pneg %p132
      // Predicated region
      $region9: #{_lambda_.9} parent=5 // pred_check
        _
      $region10: #{_lambda_.9} parent=5 // pred_check_branch
        %135 = sbr.rel (%p132) target = $region12
      $region11: #{_lambda_.9} parent=5 // pred_region
        %s136 = ssub.s32 %s9, 1
        // Predicated region
        $region13: #{_lambda_.9} parent=11 // pred_check
          %p137 = pneg %p96
        $region14: #{_lambda_.9} parent=11 // pred_check_branch
          %139 = sbr.rel (%p137) target = $region16
        $region15: #{_lambda_.9} parent=11 // pred_region
          _
        $region16: #{_lambda_.9} parent=11 // pred_fallthru
          _
      $region12: #{_lambda_.9} parent=5 // pred_fallthru
        _
      %p140 = scmp.lt.s32.totalorder %s9, 6
      // Predicated region
      $region17: #{_lambda_.9} parent=5 // pred_check
        %p141 = pneg %p140
      $region18: #{_lambda_.9} parent=5 // pred_check_branch
        %143 = sbr.rel (%p141) target = $region20
      $region19: #{_lambda_.9} parent=5 // pred_region
        // Predicated region
        $region21: #{_lambda_.9} parent=19 // pred_check
          %p144 = pneg %p43
        $region22: #{_lambda_.9} parent=19 // pred_check_branch
          %146 = sbr.rel (%p144) target = $region24
        $region23: #{_lambda_.9} parent=19 // pred_region
          %s147 = sand.u32 %s33, 1
          %s148 = sand.u32 %s33, 1
          %s149 = smul.addr %s148, 96
          %s150 = scalar_lea.vmem [#allocation3], %s149
          %s151 = smul.u32 8, %s16
          %s152 = smul.u32 3, %s17
          %s153 = smul.addr %s151, 9
          %s154 = sadd.s32 %s152, %s153
          %s155 = smul.addr %s154, 4
          %s156 = scalar_lea.vmem %s0, %s155
          // Predicated region
          $region25: #{_lambda_.9} parent=23 // pred_check
            _
          $region26: #{_lambda_.9} parent=23 // pred_check_branch
            %158 = sbr.rel (0) target = $region28
          $region27: #{_lambda_.9} parent=23 // pred_region
            // Predicated region
            $region29: #{_lambda_.9} parent=27 // pred_check
              _
            $region30: #{_lambda_.9} parent=27 // pred_check_branch
              %160 = sbr.rel (0) target = $region32
            $region31: #{_lambda_.9} parent=27 // pred_region
              %s161 = scalar_lea.vmem %s156, 8
              %s162 = scalar_lea.vmem %s150, 8 [#allocation3]
              loop: start=0, step=1, limit=1
              $region33: #{_lambda_.9} parent=31 // loop_pre_header
                _
              $region34: #{_lambda_.9} parent=31 // loop_header
                %s164 = sphi 0, %s168
                %p165 = scmp.ge.s32.totalorder %s164, 1
                %s169 = sphi %s156, %s156
                %s170 = sphi %s150, %s150
              $region35: #{_lambda_.9} parent=31 // loop_header_branch
                %167 = sbr.rel (%p165) target = $region39
              $region36: #{_lambda_.9} parent=31 // loop_body
                %v171 = vld [vmem:[%s169] sm:$0xff]
                %172 = vst [vmem:[%s170] sm:$0xff] %v171
                %v173 = vld [vmem:[%s169 + $0x24] sm:$0xff]
                %174 = vst [vmem:[%s170 + $0xc] sm:$0xff] %v173
                %v175 = vld [vmem:[%s169 + $0x48] sm:$0xff]
                %176 = vst [vmem:[%s170 + $0x18] sm:$0xff] %v175
                %v177 = vld [vmem:[%s169 + $0x6c] sm:$0xff]
                %178 = vst [vmem:[%s170 + $0x24] sm:$0xff] %v177
                %v179 = vld [vmem:[%s169 + $0x90] sm:$0xff]
                %180 = vst [vmem:[%s170 + $0x30] sm:$0xff] %v179
                %v181 = vld [vmem:[%s169 + $0xb4] sm:$0xff]
                %182 = vst [vmem:[%s170 + $0x3c] sm:$0xff] %v181
                %v183 = vld [vmem:[%s169 + $0xd8] sm:$0xff]
                %184 = vst [vmem:[%s170 + $0x48] sm:$0xff] %v183
                %v185 = vld [vmem:[%s169 + $0xfc] sm:$0xff]
                %186 = vst [vmem:[%s170 + $0x54] sm:$0xff] %v185
              $region37: #{_lambda_.9} parent=31 // loop_footer
                %s168 = sadd.s32 1, %s164
              $region38: #{_lambda_.9} parent=31 // loop_footer_branch
                %163 = sbr.rel target = $region34
              $region39: #{_lambda_.9} parent=31 // loop_exit
                _
              loop: start=0, step=1, limit=1
              $region40: #{_lambda_.9} parent=31 // loop_pre_header
                _
              $region41: #{_lambda_.9} parent=31 // loop_header
                %s189 = sphi 0, %s193
                %p190 = scmp.ge.s32.totalorder %s189, 1
                %s194 = sphi %s161, %s161
                %s195 = sphi %s162, %s162
              $region42: #{_lambda_.9} parent=31 // loop_header_branch
                %192 = sbr.rel (%p190) target = $region46
              $region43: #{_lambda_.9} parent=31 // loop_body
                %v196 = vld [vmem:[%s194] sm:$0xf]
                %197 = vst [vmem:[%s195] sm:$0xf] %v196
                %v198 = vld [vmem:[%s194 + $0x24] sm:$0xf]
                %199 = vst [vmem:[%s195 + $0xc] sm:$0xf] %v198
                %v200 = vld [vmem:[%s194 + $0x48] sm:$0xf]
                %201 = vst [vmem:[%s195 + $0x18] sm:$0xf] %v200
                %v202 = vld [vmem:[%s194 + $0x6c] sm:$0xf]
                %203 = vst [vmem:[%s195 + $0x24] sm:$0xf] %v202
                %v204 = vld [vmem:[%s194 + $0x90] sm:$0xf]
                %205 = vst [vmem:[%s195 + $0x30] sm:$0xf] %v204
                %v206 = vld [vmem:[%s194 + $0xb4] sm:$0xf]
                %207 = vst [vmem:[%s195 + $0x3c] sm:$0xf] %v206
                %v208 = vld [vmem:[%s194 + $0xd8] sm:$0xf]
                %209 = vst [vmem:[%s195 + $0x48] sm:$0xf] %v208
                %v210 = vld [vmem:[%s194 + $0xfc] sm:$0xf]
                %211 = vst [vmem:[%s195 + $0x54] sm:$0xf] %v210
              $region44: #{_lambda_.9} parent=31 // loop_footer
                %s193 = sadd.s32 1, %s189
              $region45: #{_lambda_.9} parent=31 // loop_footer_branch
                %188 = sbr.rel target = $region41
              $region46: #{_lambda_.9} parent=31 // loop_exit
                _
            $region32: #{_lambda_.9} parent=27 // pred_fallthru
              _
          $region28: #{_lambda_.9} parent=23 // pred_fallthru
            _
          %212 = vnop
        $region24: #{_lambda_.9} parent=19 // pred_fallthru
          _
        // Predicated region
        $region47: #{_lambda_.9} parent=19 // pred_check
          %p213 = pneg %p69
        $region48: #{_lambda_.9} parent=19 // pred_check_branch
          %215 = sbr.rel (%p213) target = $region50
        $region49: #{_lambda_.9} parent=19 // pred_region
          %s216 = smul.u32 48, %s17
          %p217 = scmp.lt.s32.totalorder %s216, 143
          %s218 = scalar_select %p217, %s216, 143
          %s219 = smul.addr %s218, 4
          %s220 = scalar_lea.vmem %s1, %s219
          %s221 = smul.u32 48, %s17
        $region50: #{_lambda_.9} parent=19 // pred_fallthru
          _
      $region20: #{_lambda_.9} parent=5 // pred_fallthru
        _
      %p222 = scmp.le.s32.totalorder 1, %s9
      %p223 = scmp.lt.s32.totalorder %s9, 7
      %p224 = pnand %p222, %p223
      %p225 = pneg %p224
      // Predicated region
      $region51: #{_lambda_.9} parent=5 // pred_check
        _
      $region52: #{_lambda_.9} parent=5 // pred_check_branch
        %227 = sbr.rel (%p224) target = $region54
      $region53: #{_lambda_.9} parent=5 // pred_region
        %s228 = ssub.s32 %s9, 1
        %s229 = sand.u32 %s36, 1
        %s230 = sand.u32 %s36, 1
        %s231 = smul.addr %s230, 96
        %s232 = scalar_lea.vmem [#allocation3], %s231
        // Predicated region
        $region55: #{_lambda_.9} parent=53 // pred_check
          %p233 = pneg %p49
        $region56: #{_lambda_.9} parent=53 // pred_check_branch
          %235 = sbr.rel (%p233) target = $region58
        $region57: #{_lambda_.9} parent=53 // pred_region
          _
        $region58: #{_lambda_.9} parent=53 // pred_fallthru
          _
        %s236 = sand.u32 %s36, 1
        %s237 = sand.u32 %s36, 1
        %s238 = smul.addr %s237, 96
        %s239 = scalar_lea.vmem [#allocation3], %s238
        %p240 = pneg %p49
        %p241 = pneg %p46
        %s242 = smul.u32 48, %s19
        %p243 = scmp.lt.s32.totalorder %s242, 143
        %s244 = scalar_select %p243, %s242, 143
        %s245 = smul.addr %s244, 4
        %s246 = scalar_lea.vmem %s1, %s245
        %p247 = pneg %p75
        %p248 = pneg %p72
        %p249 = pneg %p96
        %p250 = pneg %p93
        %p251 = pneg %p122
        %p252 = pneg %p119
        %s253 = smul.u32 8, %s18
        %p254 = scmp.lt.s32.totalorder %s253, 15
        %s255 = scalar_select %p254, %s253, 15
        %s256 = smul.addr %s255, 4
        %s257 = scalar_lea.vmem %s3, %s256
        %s258 = smul.u32 8, %s18
        %s259 = smul.u32 3, %s19
        %s260 = smul.u32 48, %s19
        %p261 = scmp.lt.s32.totalorder %s260, 143
        %s262 = scalar_select %p261, %s260, 143
        %s263 = smul.addr %s262, 4
        %s264 = scalar_lea.vmem %s1, %s263
        %s265 = smul.u32 48, %s19
        %s266 = smul.u32 8, %s18
        %p267 = scmp.lt.s32.totalorder %s266, 15
        %s268 = scalar_select %p267, %s266, 15
        %s269 = smul.addr %s268, 4
        %s270 = scalar_lea.vmem %s3, %s269
        %s271 = smul.u32 8, %s18
        %p273 = scmp.eq.s32.totalorder %s19, 0
        // Predicated region
        $region59: #{_lambda_.9} parent=53 // pred_check
          %p274 = pneg %p273
        $region60: #{_lambda_.9} parent=53 // pred_check_branch
          %276 = sbr.rel (%p274) target = $region62
        $region61: #{_lambda_.9} parent=53 // pred_region
          %v277 = vld [vmem:[%s2] sm:$0x1]
          %v279 = vlaneseq
          %v280 = vshrl.u32 %v279, 7
          %v281 = vsub.s32 0, %v280
          %v282 = vrot.slane %v277, %v281
          %284 = vst [vmem:[#allocation2] sm:$0xff] %v282
          %285 = vst [vmem:[#allocation2 + $0x8] sm:$0xff] %v282
          %286 = vst [vmem:[#allocation2 + $0x10] sm:$0xff] %v282
          %287 = vst [vmem:[#allocation2 + $0x18] sm:$0xff] %v282
          %288 = vst [vmem:[#allocation2 + $0x20] sm:$0xff] %v282
          %289 = vst [vmem:[#allocation2 + $0x28] sm:$0xff] %v282
          %290 = vst [vmem:[#allocation2 + $0x30] sm:$0xff] %v282
          %291 = vst [vmem:[#allocation2 + $0x38] sm:$0xff] %v282
        $region62: #{_lambda_.9} parent=53 // pred_fallthru
          _
        %v292 = vld [vmem:[#allocation2] sm:$0xff]
        %v293 = vld [vmem:[#allocation2 + $0x8] sm:$0xff]
        %v294 = vld [vmem:[#allocation2 + $0x10] sm:$0xff]
        %v295 = vld [vmem:[#allocation2 + $0x18] sm:$0xff]
        %v296 = vld [vmem:[#allocation2 + $0x20] sm:$0xff]
        %v297 = vld [vmem:[#allocation2 + $0x28] sm:$0xff]
        %v298 = vld [vmem:[#allocation2 + $0x30] sm:$0xff]
        %v299 = vld [vmem:[#allocation2 + $0x38] sm:$0xff]
        %v300 = vld [vmem:[%s232] sm:$0xff]
        %v301 = vld [vmem:[%s232 + $0x8] sm:$0xf]
        %v302 = vld [vmem:[%s232 + $0xc] sm:$0xff]
        %v303 = vld [vmem:[%s232 + $0x14] sm:$0xf]
        %v304 = vld [vmem:[%s232 + $0x18] sm:$0xff]
        %v305 = vld [vmem:[%s232 + $0x20] sm:$0xf]
        %v306 = vld [vmem:[%s232 + $0x24] sm:$0xff]
        %v307 = vld [vmem:[%s232 + $0x2c] sm:$0xf]
        %v308 = vld [vmem:[%s232 + $0x30] sm:$0xff]
        %v309 = vld [vmem:[%s232 + $0x38] sm:$0xf]
        %v310 = vld [vmem:[%s232 + $0x3c] sm:$0xff]
        %v311 = vld [vmem:[%s232 + $0x44] sm:$0xf]
        %v312 = vld [vmem:[%s232 + $0x48] sm:$0xff]
        %v313 = vld [vmem:[%s232 + $0x50] sm:$0xf]
        %v314 = vld [vmem:[%s232 + $0x54] sm:$0xff]
        %v315 = vld [vmem:[%s232 + $0x5c] sm:$0xf]
        %v316 = vld [vmem:[%s264] sm:$0xf]
        %v317 = vld [vmem:[%s264 + $0x4] sm:$0xf]
        %v318 = vld [vmem:[%s264 + $0x8] sm:$0xf]
        %v319 = vld [vmem:[%s264 + $0xc] sm:$0xf]
        %v320 = vld [vmem:[%s264 + $0x10] sm:$0xf]
        %v321 = vld [vmem:[%s264 + $0x14] sm:$0xf]
        %v322 = vld [vmem:[%s264 + $0x18] sm:$0xf]
        %v323 = vld [vmem:[%s264 + $0x1c] sm:$0xf]
        %v324 = vld [vmem:[%s264 + $0x20] sm:$0xf]
        %v325 = vld [vmem:[%s264 + $0x24] sm:$0xf]
        %v326 = vld [vmem:[%s264 + $0x28] sm:$0xf]
        %v327 = vld [vmem:[%s264 + $0x2c] sm:$0xf]
        %v328 = vld [vmem:[%s264 + $0x30] sm:$0xf]
        %v329 = vld [vmem:[%s264 + $0x34] sm:$0xf]
        %v330 = vld [vmem:[%s264 + $0x38] sm:$0xf]
        %v331 = vld [vmem:[%s264 + $0x3c] sm:$0xf]
        %v332 = vld [vmem:[%s264 + $0x40] sm:$0xf]
        %v333 = vld [vmem:[%s264 + $0x44] sm:$0xf]
        %v334 = vld [vmem:[%s264 + $0x48] sm:$0xf]
        %v335 = vld [vmem:[%s264 + $0x4c] sm:$0xf]
        %v336 = vld [vmem:[%s264 + $0x50] sm:$0xf]
        %v337 = vld [vmem:[%s264 + $0x54] sm:$0xf]
        %v338 = vld [vmem:[%s264 + $0x58] sm:$0xf]
        %v339 = vld [vmem:[%s264 + $0x5c] sm:$0xf]
        %v340 = vld [vmem:[%s264 + $0x60] sm:$0xf]
        %v341 = vld [vmem:[%s264 + $0x64] sm:$0xf]
        %v342 = vld [vmem:[%s264 + $0x68] sm:$0xf]
        %v343 = vld [vmem:[%s264 + $0x6c] sm:$0xf]
        %v344 = vld [vmem:[%s264 + $0x70] sm:$0xf]
        %v345 = vld [vmem:[%s264 + $0x74] sm:$0xf]
        %v346 = vld [vmem:[%s264 + $0x78] sm:$0xf]
        %v347 = vld [vmem:[%s264 + $0x7c] sm:$0xf]
        %v348 = vld [vmem:[%s264 + $0x80] sm:$0xf]
        %v349 = vld [vmem:[%s264 + $0x84] sm:$0xf]
        %v350 = vld [vmem:[%s264 + $0x88] sm:$0xf]
        %v351 = vld [vmem:[%s264 + $0x8c] sm:$0xf]
        %v352 = vld [vmem:[%s264 + $0x90] sm:$0xf]
        %v353 = vld [vmem:[%s264 + $0x94] sm:$0xf]
        %v354 = vld [vmem:[%s264 + $0x98] sm:$0xf]
        %v355 = vld [vmem:[%s264 + $0x9c] sm:$0xf]
        %v356 = vld [vmem:[%s264 + $0xa0] sm:$0xf]
        %v357 = vld [vmem:[%s264 + $0xa4] sm:$0xf]
        %v358 = vld [vmem:[%s264 + $0xa8] sm:$0xf]
        %v359 = vld [vmem:[%s264 + $0xac] sm:$0xf]
        %v360 = vld [vmem:[%s264 + $0xb0] sm:$0xf]
        %v361 = vld [vmem:[%s264 + $0xb4] sm:$0xf]
        %v362 = vld [vmem:[%s264 + $0xb8] sm:$0xf]
        %v363 = vld [vmem:[%s264 + $0xbc] sm:$0xf]
        %v380 = vunpack.c.l.b16 %v300
        %v381 = vunpack.c.h.b16 %v300
        %v382 = vunpack.c.l.b16 %v301
        %v383 = vunpack.c.l.b16 %v302
        %v384 = vunpack.c.h.b16 %v302
        %v385 = vunpack.c.l.b16 %v303
        %v386 = vunpack.c.l.b16 %v304
        %v387 = vunpack.c.h.b16 %v304
        %v388 = vunpack.c.l.b16 %v305
        %v389 = vunpack.c.l.b16 %v306
        %v390 = vunpack.c.h.b16 %v306
        %v391 = vunpack.c.l.b16 %v307
        %v392 = vunpack.c.l.b16 %v308
        %v393 = vunpack.c.h.b16 %v308
        %v394 = vunpack.c.l.b16 %v309
        %v395 = vunpack.c.l.b16 %v310
        %v396 = vunpack.c.h.b16 %v310
        %v397 = vunpack.c.l.b16 %v311
        %v398 = vunpack.c.l.b16 %v312
        %v399 = vunpack.c.h.b16 %v312
        %v400 = vunpack.c.l.b16 %v313
        %v401 = vunpack.c.l.b16 %v314
        %v402 = vunpack.c.h.b16 %v314
        %v403 = vunpack.c.l.b16 %v315
        %v404 = vpack.c.b16 %v383, %v380
        %v405 = vpack.c.b16 %v384, %v381
        %v406 = vpack.c.b16 %v385, %v382
        %v407 = vpack.c.b16 %v389, %v386
        %v408 = vpack.c.b16 %v390, %v387
        %v409 = vpack.c.b16 %v391, %v388
        %v410 = vpack.c.b16 %v395, %v392
        %v411 = vpack.c.b16 %v396, %v393
        %v412 = vpack.c.b16 %v397, %v394
        %v413 = vpack.c.b16 %v401, %v398
        %v414 = vpack.c.b16 %v402, %v399
        %v415 = vpack.c.b16 %v403, %v400
        %v476 = vunpack.c.l.b16 %v316
        %v477 = vunpack.c.l.b16 %v317
        %v478 = vunpack.c.l.b16 %v318
        %v479 = vunpack.c.l.b16 %v319
        %v480 = vunpack.c.l.b16 %v320
        %v481 = vunpack.c.l.b16 %v321
        %v482 = vunpack.c.l.b16 %v322
        %v483 = vunpack.c.l.b16 %v323
        %v484 = vunpack.c.l.b16 %v324
        %v485 = vunpack.c.l.b16 %v325
        %v486 = vunpack.c.l.b16 %v326
        %v487 = vunpack.c.l.b16 %v327
        %v488 = vunpack.c.l.b16 %v328
        %v489 = vunpack.c.l.b16 %v329
        %v490 = vunpack.c.l.b16 %v330
        %v491 = vunpack.c.l.b16 %v331
        %v492 = vunpack.c.l.b16 %v332
        %v493 = vunpack.c.l.b16 %v333
        %v494 = vunpack.c.l.b16 %v334
        %v495 = vunpack.c.l.b16 %v335
        %v496 = vunpack.c.l.b16 %v336
        %v497 = vunpack.c.l.b16 %v337
        %v498 = vunpack.c.l.b16 %v338
        %v499 = vunpack.c.l.b16 %v339
        %v500 = vunpack.c.l.b16 %v340
        %v501 = vunpack.c.l.b16 %v341
        %v502 = vunpack.c.l.b16 %v342
        %v503 = vunpack.c.l.b16 %v343
        %v504 = vunpack.c.l.b16 %v344
        %v505 = vunpack.c.l.b16 %v345
        %v506 = vunpack.c.l.b16 %v346
        %v507 = vunpack.c.l.b16 %v347
        %v508 = vunpack.c.l.b16 %v348
        %v509 = vunpack.c.l.b16 %v349
        %v510 = vunpack.c.l.b16 %v350
        %v511 = vunpack.c.l.b16 %v351
        %v512 = vunpack.c.l.b16 %v352
        %v513 = vunpack.c.l.b16 %v353
        %v514 = vunpack.c.l.b16 %v354
        %v515 = vunpack.c.l.b16 %v355
        %v516 = vunpack.c.l.b16 %v356
        %v517 = vunpack.c.l.b16 %v357
        %v518 = vunpack.c.l.b16 %v358
        %v519 = vunpack.c.l.b16 %v359
        %v520 = vunpack.c.l.b16 %v360
        %v521 = vunpack.c.l.b16 %v361
        %v522 = vunpack.c.l.b16 %v362
        %v523 = vunpack.c.l.b16 %v363
        %v524 = vpack.c.b16 %v477, %v476
        %v525 = vpack.c.b16 %v479, %v478
        %v526 = vpack.c.b16 %v481, %v480
        %v527 = vpack.c.b16 %v483, %v482
        %v528 = vpack.c.b16 %v485, %v484
        %v529 = vpack.c.b16 %v487, %v486
        %v530 = vpack.c.b16 %v489, %v488
        %v531 = vpack.c.b16 %v491, %v490
        %v532 = vpack.c.b16 %v493, %v492
        %v533 = vpack.c.b16 %v495, %v494
        %v534 = vpack.c.b16 %v497, %v496
        %v535 = vpack.c.b16 %v499, %v498
        %v536 = vpack.c.b16 %v501, %v500
        %v537 = vpack.c.b16 %v503, %v502
        %v538 = vpack.c.b16 %v505, %v504
        %v539 = vpack.c.b16 %v507, %v506
        %v540 = vpack.c.b16 %v509, %v508
        %v541 = vpack.c.b16 %v511, %v510
        %v542 = vpack.c.b16 %v513, %v512
        %v543 = vpack.c.b16 %v515, %v514
        %v544 = vpack.c.b16 %v517, %v516
        %v545 = vpack.c.b16 %v519, %v518
        %v546 = vpack.c.b16 %v521, %v520
        %v547 = vpack.c.b16 %v523, %v522
        %572 = vmatprep.subr.bf16.mxu0 0
        %573 = vmatpush1.bf16.msra.mxu0 %v524
        %574 = vmatprep.subr.bf16.mxu0 0
        %575 = vmatpush1.bf16.msra.mxu0 %v525
        %576 = vmatprep.subr.bf16.mxu0 0
        %577 = vmatpush1.bf16.msra.mxu0 %v526
        %578 = vmatprep.subr.bf16.mxu0 0
        %579 = vmatpush1.bf16.msra.mxu0 %v527
        %580 = vmatprep.subr.bf16.mxu0 0
        %581 = vmatpush1.bf16.msra.mxu0 %v528
        %582 = vmatprep.subr.bf16.mxu0 0
        %583 = vmatpush1.bf16.msra.mxu0 %v529
        %584 = vmatprep.subr.bf16.mxu0 0
        %585 = vmatpush1.bf16.msra.mxu0 %v530
        %586 = vmatprep.subr.bf16.mxu0 0
        %587 = vmatpush1.bf16.msra.mxu0 %v531
        %588 = vmatprep.subr.bf16.mxu0 0
        %589 = vmatpush1.bf16.msra.mxu0 %v532
        %590 = vmatprep.subr.bf16.mxu0 0
        %591 = vmatpush1.bf16.msra.mxu0 %v533
        %592 = vmatprep.subr.bf16.mxu0 0
        %593 = vmatpush1.bf16.msra.mxu0 %v534
        %594 = vmatprep.subr.bf16.mxu0 0
        %595 = vmatpush1.bf16.msra.mxu0 %v535
        %596 = vmatprep.subr.bf16.mxu0 0
        %597 = vmatpush1.bf16.msra.mxu0 %v536
        %598 = vmatprep.subr.bf16.mxu0 0
        %599 = vmatpush1.bf16.msra.mxu0 %v537
        %600 = vmatprep.subr.bf16.mxu0 0
        %601 = vmatpush1.bf16.msra.mxu0 %v538
        %602 = vmatprep.subr.bf16.mxu0 0
        %603 = vmatpush1.bf16.msra.mxu0 %v539
        %604 = vmatprep.mubr.bf16.mxu0 %v405
        %605 = vmatmul.mubr.bf16.gmra.mrb[0].mxu0 %v404
        %v606 = vpop.f32.mrb[0].mxu0
        %v607 = vadd.f32 0.0, %v606
        %v608 = vpop.f32.mrb[0].mxu0
        %v609 = vpop.f32.mrb[0].mxu0
        %v610 = vadd.f32 0.0, %v609
        %v611 = vpop.f32.mrb[0].mxu0
        %612 = vmatprep.mubr.bf16.mxu0 %v408
        %613 = vmatmul.mubr.bf16.gmra.mrb[0].mxu0 %v407
        %v614 = vpop.f32.mrb[0].mxu0
        %v615 = vadd.f32 0.0, %v614
        %v616 = vpop.f32.mrb[0].mxu0
        %v617 = vpop.f32.mrb[0].mxu0
        %v618 = vadd.f32 0.0, %v617
        %v619 = vpop.f32.mrb[0].mxu0
        %620 = vmatprep.mubr.bf16.mxu0 %v411
        %621 = vmatmul.mubr.bf16.gmra.mrb[0].mxu0 %v410
        %v622 = vpop.f32.mrb[0].mxu0
        %v623 = vadd.f32 0.0, %v622
        %v624 = vpop.f32.mrb[0].mxu0
        %v625 = vpop.f32.mrb[0].mxu0
        %v626 = vadd.f32 0.0, %v625
        %v627 = vpop.f32.mrb[0].mxu0
        %628 = vmatprep.mubr.bf16.mxu0 %v414
        %629 = vmatmul.mubr.bf16.gmra.mrb[0].mxu0 %v413
        %v630 = vpop.f32.mrb[0].mxu0
        %v631 = vadd.f32 0.0, %v630
        %v632 = vpop.f32.mrb[0].mxu0
        %v633 = vpop.f32.mrb[0].mxu0
        %v634 = vadd.f32 0.0, %v633
        %v635 = vpop.f32.mrb[0].mxu0
        %636 = vdwg.mxu0
        %637 = vmatprep.subr.bf16.mxu0 0
        %638 = vmatpush1.bf16.msra.mxu0 %v540
        %639 = vmatprep.subr.bf16.mxu0 0
        %640 = vmatpush1.bf16.msra.mxu0 %v541
        %641 = vmatprep.subr.bf16.mxu0 0
        %642 = vmatpush1.bf16.msra.mxu0 %v542
        %643 = vmatprep.subr.bf16.mxu0 0
        %644 = vmatpush1.bf16.msra.mxu0 %v543
        %645 = vmatprep.subr.bf16.mxu0 0
        %646 = vmatpush1.bf16.msra.mxu0 %v544
        %647 = vmatprep.subr.bf16.mxu0 0
        %648 = vmatpush1.bf16.msra.mxu0 %v545
        %649 = vmatprep.subr.bf16.mxu0 0
        %650 = vmatpush1.bf16.msra.mxu0 %v546
        %651 = vmatprep.subr.bf16.mxu0 0
        %652 = vmatpush1.bf16.msra.mxu0 %v547
        %653 = vmatprep.subr.bf16.mxu0 0
        %654 = vmatpush1.bf16.msra.mxu0 0
        %655 = vmatprep.subr.bf16.mxu0 0
        %656 = vmatpush1.bf16.msra.mxu0 0
        %657 = vmatprep.subr.bf16.mxu0 0
        %658 = vmatpush1.bf16.msra.mxu0 0
        %659 = vmatprep.subr.bf16.mxu0 0
        %660 = vmatpush1.bf16.msra.mxu0 0
        %661 = vmatprep.subr.bf16.mxu0 0
        %662 = vmatpush1.bf16.msra.mxu0 0
        %663 = vmatprep.subr.bf16.mxu0 0
        %664 = vmatpush1.bf16.msra.mxu0 0
        %665 = vmatprep.subr.bf16.mxu0 0
        %666 = vmatpush1.bf16.msra.mxu0 0
        %667 = vmatprep.subr.bf16.mxu0 0
        %668 = vmatpush1.bf16.msra.mxu0 0
        %669 = vmatprep.mubr.bf16.mxu0 0
        %670 = vmatmul.mubr.bf16.gmra.mrb[0].mxu0 %v406
        %v671 = vpop.f32.mrb[0].mxu0
        %v672 = vadd.f32 %v607, %v671
        %v673 = vpop.f32.mrb[0].mxu0
        %v674 = vpop.f32.mrb[0].mxu0
        %v675 = vadd.f32 %v610, %v674
        %v676 = vpop.f32.mrb[0].mxu0
        %677 = vmatprep.mubr.bf16.mxu0 0
        %678 = vmatmul.mubr.bf16.gmra.mrb[0].mxu0 %v409
        %v679 = vpop.f32.mrb[0].mxu0
        %v680 = vadd.f32 %v615, %v679
        %v681 = vpop.f32.mrb[0].mxu0
        %v682 = vpop.f32.mrb[0].mxu0
        %v683 = vadd.f32 %v618, %v682
        %v684 = vpop.f32.mrb[0].mxu0
        %685 = vmatprep.mubr.bf16.mxu0 0
        %686 = vmatmul.mubr.bf16.gmra.mrb[0].mxu0 %v412
        %v687 = vpop.f32.mrb[0].mxu0
        %v688 = vadd.f32 %v623, %v687
        %v689 = vpop.f32.mrb[0].mxu0
        %v690 = vpop.f32.mrb[0].mxu0
        %v691 = vadd.f32 %v626, %v690
        %v692 = vpop.f32.mrb[0].mxu0
        %693 = vmatprep.mubr.bf16.mxu0 0
        %694 = vmatmul.mubr.bf16.gmra.mrb[0].mxu0 %v415
        %v695 = vpop.f32.mrb[0].mxu0
        %v696 = vadd.f32 %v631, %v695
        %v697 = vpop.f32.mrb[0].mxu0
        %v698 = vpop.f32.mrb[0].mxu0
        %v699 = vadd.f32 %v634, %v698
        %v700 = vpop.f32.mrb[0].mxu0
        %701 = vdwg.mxu0
        %v702 = vadd.f32 %v292, %v672
        %v703 = vadd.f32 %v293, %v675
        %v704 = vadd.f32 %v294, %v680
        %v705 = vadd.f32 %v295, %v683
        %v706 = vadd.f32 %v296, %v688
        %v707 = vadd.f32 %v297, %v691
        %v708 = vadd.f32 %v298, %v696
        %v709 = vadd.f32 %v299, %v699
        %710 = vst [vmem:[#allocation2] sm:$0xff] %v702
        %711 = vst [vmem:[#allocation2 + $0x8] sm:$0xff] %v703
        %712 = vst [vmem:[#allocation2 + $0x10] sm:$0xff] %v704
        %713 = vst [vmem:[#allocation2 + $0x18] sm:$0xff] %v705
        %714 = vst [vmem:[#allocation2 + $0x20] sm:$0xff] %v706
        %715 = vst [vmem:[#allocation2 + $0x28] sm:$0xff] %v707
        %716 = vst [vmem:[#allocation2 + $0x30] sm:$0xff] %v708
        %717 = vst [vmem:[#allocation2 + $0x38] sm:$0xff] %v709
        %p718 = scmp.eq.s32.totalorder %s19, 2
        // Predicated region
        $region63: #{_lambda_.9} parent=53 // pred_check
          %p719 = pneg %p718
        $region64: #{_lambda_.9} parent=53 // pred_check_branch
          %721 = sbr.rel (%p719) target = $region66
        $region65: #{_lambda_.9} parent=53 // pred_region
          %v722 = vld [vmem:[#allocation2] sm:$0xff]
          %v723 = vld [vmem:[#allocation2 + $0x8] sm:$0xff]
          %v724 = vld [vmem:[#allocation2 + $0x10] sm:$0xff]
          %v725 = vld [vmem:[#allocation2 + $0x18] sm:$0xff]
          %v726 = vld [vmem:[#allocation2 + $0x20] sm:$0xff]
          %v727 = vld [vmem:[#allocation2 + $0x28] sm:$0xff]
          %v728 = vld [vmem:[#allocation2 + $0x30] sm:$0xff]
          %v729 = vld [vmem:[#allocation2 + $0x38] sm:$0xff]
          %v730 = vadd.f32 %v722, %v723
          %v731 = vadd.f32 %v730, %v724
          %v732 = vadd.f32 %v731, %v725
          %v733 = vadd.f32 %v732, %v726
          %v734 = vadd.f32 %v733, %v727
          %v735 = vadd.f32 %v734, %v728
          %v736 = vadd.f32 %v735, %v729
          %v737 = vrot.slane %v736, 4
          %v738 = vadd.f32 %v736, %v737
          %v739 = vrot.slane %v738, 2
          %v740 = vadd.f32 %v738, %v739
          %v741 = vrot.slane %v740, 1
          %v742 = vadd.f32 %v740, %v741
          %v743 = vrcp.pop 64.0
          %v744 = vmul.f32 %v742, %v743
          %v745 = vsub.f32 %v722, %v744
          %v746 = vsub.f32 %v723, %v744
          %v747 = vsub.f32 %v724, %v744
          %v748 = vsub.f32 %v725, %v744
          %v749 = vsub.f32 %v726, %v744
          %v750 = vsub.f32 %v727, %v744
          %v751 = vsub.f32 %v728, %v744
          %v752 = vsub.f32 %v729, %v744
          %v753 = vmul.f32 %v745, %v745
          %v754 = vmul.f32 %v746, %v746
          %v755 = vmul.f32 %v747, %v747
          %v756 = vmul.f32 %v748, %v748
          %v757 = vmul.f32 %v749, %v749
          %v758 = vmul.f32 %v750, %v750
          %v759 = vmul.f32 %v751, %v751
          %v760 = vmul.f32 %v752, %v752
          %v761 = vadd.f32 %v753, %v754
          %v762 = vadd.f32 %v761, %v755
          %v763 = vadd.f32 %v762, %v756
          %v764 = vadd.f32 %v763, %v757
          %v765 = vadd.f32 %v764, %v758
          %v766 = vadd.f32 %v765, %v759
          %v767 = vadd.f32 %v766, %v760
          %v768 = vrot.slane %v767, 4
          %v769 = vadd.f32 %v767, %v768
          %v770 = vrot.slane %v769, 2
          %v771 = vadd.f32 %v769, %v770
          %v772 = vrot.slane %v771, 1
          %v773 = vadd.f32 %v771, %v772
          %v774 = vmul.f32 %v773, %v743
          %v775 = vadd.f32 %v774, 1e-05
          %v776 = vrsqrt.pop %v775
          %v777 = vmul.f32 %v745, %v776
          %v778 = vmul.f32 %v746, %v776
          %v779 = vmul.f32 %v747, %v776
          %v780 = vmul.f32 %v748, %v776
          %v781 = vmul.f32 %v749, %v776
          %v782 = vmul.f32 %v750, %v776
          %v783 = vmul.f32 %v751, %v776
          %v784 = vmul.f32 %v752, %v776
          %v785 = vmax.f32 %v777, 0.0
          %v786 = vmax.f32 %v778, 0.0
          %v787 = vmax.f32 %v779, 0.0
          %v788 = vmax.f32 %v780, 0.0
          %v789 = vmax.f32 %v781, 0.0
          %v790 = vmax.f32 %v782, 0.0
          %v791 = vmax.f32 %v783, 0.0
          %v792 = vmax.f32 %v784, 0.0
          %v793 = vpack.c.bf16 %v786, %v785
          %v794 = vpack.c.bf16 %v788, %v787
          %v795 = vpack.c.bf16 %v790, %v789
          %v796 = vpack.c.bf16 %v792, %v791
          %v801 = vunpack.c.l.b16 %v793
          %v802 = vunpack.c.h.b16 %v793
          %v803 = vunpack.c.l.b16 %v794
          %v804 = vunpack.c.h.b16 %v794
          %v805 = vunpack.c.l.b16 %v795
          %v806 = vunpack.c.h.b16 %v795
          %v807 = vunpack.c.l.b16 %v796
          %v808 = vunpack.c.h.b16 %v796
          %v809 = vpack.c.b16 %v801, %v801
          %v810 = vpack.c.b16 %v802, %v802
          %v811 = vpack.c.b16 %v803, %v803
          %v812 = vpack.c.b16 %v804, %v804
          %v813 = vpack.c.b16 %v805, %v805
          %v814 = vpack.c.b16 %v806, %v806
          %v815 = vpack.c.b16 %v807, %v807
          %v816 = vpack.c.b16 %v808, %v808
          %825 = vst [vmem:[%s270] sm:$0xf] %v809
          %826 = vst [vmem:[%s270 + $0x4] sm:$0xf] %v810
          %827 = vst [vmem:[%s270 + $0x8] sm:$0xf] %v811
          %828 = vst [vmem:[%s270 + $0xc] sm:$0xf] %v812
          %829 = vst [vmem:[%s270 + $0x10] sm:$0xf] %v813
          %830 = vst [vmem:[%s270 + $0x14] sm:$0xf] %v814
          %831 = vst [vmem:[%s270 + $0x18] sm:$0xf] %v815
          %832 = vst [vmem:[%s270 + $0x1c] sm:$0xf] %v816
        $region66: #{_lambda_.9} parent=53 // pred_fallthru
          _
        %s833 = smul.u32 8, %s18
        %p834 = scmp.lt.s32.totalorder %s833, 15
        %s835 = scalar_select %p834, %s833, 15
        %s836 = smul.addr %s835, 4
        %s837 = scalar_lea.vmem %s3, %s836
        // Predicated region
        $region67: #{_lambda_.9} parent=53 // pred_check
          %p838 = pneg %p119
        $region68: #{_lambda_.9} parent=53 // pred_check_branch
          %840 = sbr.rel (%p838) target = $region70
        $region69: #{_lambda_.9} parent=53 // pred_region
          %s841 = smul.u32 8, %s18
        $region70: #{_lambda_.9} parent=53 // pred_fallthru
          _
      $region54: #{_lambda_.9} parent=5 // pred_fallthru
        _
      %p842 = scmp.le.s32.totalorder 2, %s9
      // Predicated region
      $region71: #{_lambda_.9} parent=5 // pred_check
        %p843 = pneg %p842
      $region72: #{_lambda_.9} parent=5 // pred_check_branch
        %845 = sbr.rel (%p843) target = $region74
      $region73: #{_lambda_.9} parent=5 // pred_region
        %s846 = ssub.s32 %s9, 2
        // Predicated region
        $region75: #{_lambda_.9} parent=73 // pred_check
          %p847 = pneg %p125
        $region76: #{_lambda_.9} parent=73 // pred_check_branch
          %849 = sbr.rel (%p847) target = $region78
        $region77: #{_lambda_.9} parent=73 // pred_region
          %s850 = smul.u32 8, %s20
          %p851 = scmp.lt.s32.totalorder %s850, 15
          %s852 = scalar_select %p851, %s850, 15
          %s853 = smul.addr %s852, 4
          %s854 = scalar_lea.vmem %s3, %s853
        $region78: #{_lambda_.9} parent=73 // pred_fallthru
          _
      $region74: #{_lambda_.9} parent=5 // pred_fallthru
        _
    $region6: #{_lambda_.9} parent=1 // loop_footer
      %s13 = sadd.s32 1, %s9
    $region7: #{_lambda_.9} parent=1 // loop_footer_branch
      %8 = sbr.rel target = $region3
    $region8: #{_lambda_.9} parent=1 // loop_exit
      _

// kernel: _lambda_.10
$region0: #{_lambda_.10}
  #allocation0 [shape = 'u32[]', space=smem, size = 0x4, offset = 0x4, fixed_abs, tag = 'smem constant byte address 0x4 - core index']
  #allocation1 [shape = 'u32[144,128]{1,0:T(1,128)}', space=vmem, size = 0x12000, scoped, tag = 'internal scratch']
  #allocation2 [shape = 'f32[16,128]{1,0:T(8,128)}', space=vmem, size = 0x2000, scoped, tag = 'scratch operand']
  %s0 = inlined_call_operand.vmem [shape: bf16[32,1152], index: 0, kind: input, shape index: {}]
  %s1 = inlined_call_operand.vmem [shape: bf16[1152,128], index: 1, kind: input, shape index: {}]
  %s2 = inlined_call_operand.vmem [shape: f32[1,128], index: 2, kind: input, shape index: {}]
  %s3 = inlined_call_operand.vmem [shape: bf16[32,128], index: 3, kind: output, shape index: {}]
  %s4 = sld [smem:[#allocation0]]
  $region79: #{_lambda_.10} parent=0
    _
  %s6 = ssub.s32 1, %s4
  %s7 = scalar_select 0, %s6, %s4
  $region1: #{_lambda_.10} parent=0
    #allocation3 [shape = 'u8[24576]{0}', space=vmem, size = 0x6000, scoped, tag = 'input window, operand 0']
    loop: start=0, step=1, limit=8
    $region2: #{_lambda_.10} parent=1 // loop_pre_header
      _
    $region3: #{_lambda_.10} parent=1 // loop_header
      %s9 = sphi 0, %s13
      %p10 = scmp.ge.s32.totalorder %s9, 8
      %s16 = sphi 0, %s28
      %s17 = sphi 0, %s24
      %s18 = sphi 0, %s16
      %s19 = sphi 0, %s17
      %s20 = sphi 0, %s18
      %s21 = sphi 0, %s19
      %s33 = sphi 0, %s35
      %s36 = sphi 0, %s33
      %s37 = sphi 0, %s36
      %s53 = sphi 0, %s37
      %s59 = sphi 0, %s61
      %s62 = sphi 0, %s59
      %s63 = sphi 0, %s62
      %s79 = sphi 0, %s63
      %s83 = sphi 0, %s83
      %s85 = sphi 0, %s83
      %s86 = sphi 0, %s85
      %s100 = sphi 0, %s86
      %s106 = sphi 0, %s108
      %s109 = sphi 0, %s106
      %s110 = sphi 0, %s109
      %s126 = sphi 0, %s110
    $region4: #{_lambda_.10} parent=1 // loop_header_branch
      %12 = sbr.rel (%p10) target = $region8
    $region5: #{_lambda_.10} parent=1 // loop_body
      %s14 = ssub.s32 %s9, 1
      %s15 = ssub.s32 %s9, 2
      %s22 = sadd.s32 1, %s17
      %p23 = scmp.ge.s32.totalorder %s22, 3
      %s24 = scalar_select %p23, 0, %s22
      %s25 = sadd.s32 1, %s16
      %s26 = scalar_select %p23, %s25, %s16
      %p27 = scmp.ge.s32.totalorder %s26, 2
      %s28 = scalar_select %p27, 0, %s26
      %s29 = ssub.s32 %s16, %s28
      %s30 = ssub.s32 %s17, %s24
      %s31 = sor.u32 %s29, %s30
      %p32 = scmp.eq.s32.totalorder %s31, 0
      %s34 = sadd.s32 %s33, 1
      %s35 = scalar_select %p32, %s33, %s34
      %p38 = pneg %p32
      %p39 = scmp.eq.s32.totalorder %s9, 5
      %p40 = por %p38, %p39
      %p41 = scmp.ne.s32.totalorder %s33, %s36
      %p42 = scmp.eq.s32.totalorder %s9, 0
      %p43 = por %p41, %p42
      %p44 = scmp.ne.s32.totalorder %s33, %s36
      %p45 = scmp.eq.s32.totalorder %s14, 5
      %p46 = por %p44, %p45
      %p47 = scmp.ne.s32.totalorder %s36, %s37
      %p48 = scmp.eq.s32.totalorder %s14, 0
      %p49 = por %p47, %p48
      %p50 = scmp.ne.s32.totalorder %s36, %s37
      %p51 = scmp.eq.s32.totalorder %s15, 5
      %p52 = por %p50, %p51
      %p54 = scmp.ne.s32.totalorder %s37, %s53
      %p55 = scmp.eq.s32.totalorder %s15, 0
      %p56 = por %p54, %p55
      %s57 = ssub.s32 %s17, %s24
      %p58 = scmp.eq.s32.totalorder %s57, 0
      %s60 = sadd.s32 %s59, 1
      %s61 = scalar_select %p58, %s59, %s60
      %p64 = pneg %p58
      %p65 = scmp.eq.s32.totalorder %s9, 5
      %p66 = por %p64, %p65
      %p67 = scmp.ne.s32.totalorder %s59, %s62
      %p68 = scmp.eq.s32.totalorder %s9, 0
      %p69 = por %p67, %p68
      %p70 = scmp.ne.s32.totalorder %s59, %s62
      %p71 = scmp.eq.s32.totalorder %s14, 5
      %p72 = por %p70, %p71
      %p73 = scmp.ne.s32.totalorder %s62, %s63
      %p74 = scmp.eq.s32.totalorder %s14, 0
      %p75 = por %p73, %p74
      %p76 = scmp.ne.s32.totalorder %s62, %s63
      %p77 = scmp.eq.s32.totalorder %s15, 5
      %p78 = por %p76, %p77
      %p80 = scmp.ne.s32.totalorder %s63, %s79
      %p81 = scmp.eq.s32.totalorder %s15, 0
      %p82 = por %p80, %p81
      %s84 = sadd.s32 %s83, 1
      %p87 = scmp.eq.s32.totalorder %s9, 5
      %p88 = scmp.ne.s32.totalorder %s83, %s85
      %p89 = scmp.eq.s32.totalorder %s9, 0
      %p90 = por %p88, %p89
      %p91 = scmp.ne.s32.totalorder %s83, %s85
      %p92 = scmp.eq.s32.totalorder %s14, 5
      %p93 = por %p91, %p92
      %p94 = scmp.ne.s32.totalorder %s85, %s86
      %p95 = scmp.eq.s32.totalorder %s14, 0
      %p96 = por %p94, %p95
      %p97 = scmp.ne.s32.totalorder %s85, %s86
      %p98 = scmp.eq.s32.totalorder %s15, 5
      %p99 = por %p97, %p98
      %p101 = scmp.ne.s32.totalorder %s86, %s100
      %p102 = scmp.eq.s32.totalorder %s15, 0
      %p103 = por %p101, %p102
      %s104 = ssub.s32 %s16, %s28
      %p105 = scmp.eq.s32.totalorder %s104, 0
      %s107 = sadd.s32 %s106, 1
      %s108 = scalar_select %p105, %s106, %s107
      %p111 = pneg %p105
      %p112 = scmp.eq.s32.totalorder %s9, 5
      %p113 = por %p111, %p112
      %p114 = scmp.ne.s32.totalorder %s106, %s109
      %p115 = scmp.eq.s32.totalorder %s9, 0
      %p116 = por %p114, %p115
      %p117 = scmp.ne.s32.totalorder %s106, %s109
      %p118 = scmp.eq.s32.totalorder %s14, 5
      %p119 = por %p117, %p118
      %p120 = scmp.ne.s32.totalorder %s109, %s110
      %p121 = scmp.eq.s32.totalorder %s14, 0
      %p122 = por %p120, %p121
      %p123 = scmp.ne.s32.totalorder %s109, %s110
      %p124 = scmp.eq.s32.totalorder %s15, 5
      %p125 = por %p123, %p124
      %p127 = scmp.ne.s32.totalorder %s110, %s126
      %p128 = scmp.eq.s32.totalorder %s15, 0
      %p129 = por %p127, %p128
      %p130 = scmp.le.s32.totalorder 1, %s9
      %p131 = scmp.lt.s32.totalorder %s9, 7
      %p132 = pnand %p130, %p131
      %p133 = pneg %p132
      // Predicated region
      $region9: #{_lambda_.10} parent=5 // pred_check
        _
      $region10: #{_lambda_.10} parent=5 // pred_check_branch
        %135 = sbr.rel (%p132) target = $region12
      $region11: #{_lambda_.10} parent=5 // pred_region
        %s136 = ssub.s32 %s9, 1
        // Predicated region
        $region13: #{_lambda_.10} parent=11 // pred_check
          %p137 = pneg %p96
        $region14: #{_lambda_.10} parent=11 // pred_check_branch
          %139 = sbr.rel (%p137) target = $region16
        $region15: #{_lambda_.10} parent=11 // pred_region
          _
        $region16: #{_lambda_.10} parent=11 // pred_fallthru
          _
      $region12: #{_lambda_.10} parent=5 // pred_fallthru
        _
      %p140 = scmp.lt.s32.totalorder %s9, 6
      // Predicated region
      $region17: #{_lambda_.10} parent=5 // pred_check
        %p141 = pneg %p140
      $region18: #{_lambda_.10} parent=5 // pred_check_branch
        %143 = sbr.rel (%p141) target = $region20
      $region19: #{_lambda_.10} parent=5 // pred_region
        // Predicated region
        $region21: #{_lambda_.10} parent=19 // pred_check
          %p144 = pneg %p43
        $region22: #{_lambda_.10} parent=19 // pred_check_branch
          %146 = sbr.rel (%p144) target = $region24
        $region23: #{_lambda_.10} parent=19 // pred_region
          %s147 = sand.u32 %s33, 1
          %s148 = sand.u32 %s33, 1
          %s149 = smul.addr %s148, 24
          %s150 = scalar_lea.vmem [#allocation3], %s149
          %s151 = smul.u32 2, %s16
          %s152 = smul.u32 3, %s17
          %s153 = smul.addr %s151, 9
          %s154 = sadd.s32 %s152, %s153
          %s155 = smul.addr %s154, 4
          %s156 = scalar_lea.vmem %s0, %s155
          // Predicated region
          $region25: #{_lambda_.10} parent=23 // pred_check
            _
          $region26: #{_lambda_.10} parent=23 // pred_check_branch
            %158 = sbr.rel (0) target = $region28
          $region27: #{_lambda_.10} parent=23 // pred_region
            // Predicated region
            $region29: #{_lambda_.10} parent=27 // pred_check
              _
            $region30: #{_lambda_.10} parent=27 // pred_check_branch
              %160 = sbr.rel (0) target = $region32
            $region31: #{_lambda_.10} parent=27 // pred_region
              %s161 = scalar_lea.vmem %s156, 8
              %s162 = scalar_lea.vmem %s150, 8 [#allocation3]
              loop: start=0, step=1, limit=1
              $region33: #{_lambda_.10} parent=31 // loop_pre_header
                _
              $region34: #{_lambda_.10} parent=31 // loop_header
                %s164 = sphi 0, %s168
                %p165 = scmp.ge.s32.totalorder %s164, 1
                %s169 = sphi %s156, %s156
                %s170 = sphi %s150, %s150
              $region35: #{_lambda_.10} parent=31 // loop_header_branch
                %167 = sbr.rel (%p165) target = $region39
              $region36: #{_lambda_.10} parent=31 // loop_body
                %v171 = vld [vmem:[%s169] sm:$0xff]
                %172 = vst [vmem:[%s170] sm:$0xff] %v171
                %v173 = vld [vmem:[%s169 + $0x24] sm:$0xff]
                %174 = vst [vmem:[%s170 + $0xc] sm:$0xff] %v173
              $region37: #{_lambda_.10} parent=31 // loop_footer
                %s168 = sadd.s32 1, %s164
              $region38: #{_lambda_.10} parent=31 // loop_footer_branch
                %163 = sbr.rel target = $region34
              $region39: #{_lambda_.10} parent=31 // loop_exit
                _
              loop: start=0, step=1, limit=1
              $region40: #{_lambda_.10} parent=31 // loop_pre_header
                _
              $region41: #{_lambda_.10} parent=31 // loop_header
                %s177 = sphi 0, %s181
                %p178 = scmp.ge.s32.totalorder %s177, 1
                %s182 = sphi %s161, %s161
                %s183 = sphi %s162, %s162
              $region42: #{_lambda_.10} parent=31 // loop_header_branch
                %180 = sbr.rel (%p178) target = $region46
              $region43: #{_lambda_.10} parent=31 // loop_body
                %v184 = vld [vmem:[%s182] sm:$0xf]
                %185 = vst [vmem:[%s183] sm:$0xf] %v184
                %v186 = vld [vmem:[%s182 + $0x24] sm:$0xf]
                %187 = vst [vmem:[%s183 + $0xc] sm:$0xf] %v186
              $region44: #{_lambda_.10} parent=31 // loop_footer
                %s181 = sadd.s32 1, %s177
              $region45: #{_lambda_.10} parent=31 // loop_footer_branch
                %176 = sbr.rel target = $region41
              $region46: #{_lambda_.10} parent=31 // loop_exit
                _
            $region32: #{_lambda_.10} parent=27 // pred_fallthru
              _
          $region28: #{_lambda_.10} parent=23 // pred_fallthru
            _
          %188 = vnop
        $region24: #{_lambda_.10} parent=19 // pred_fallthru
          _
        // Predicated region
        $region47: #{_lambda_.10} parent=19 // pred_check
          %p189 = pneg %p69
        $region48: #{_lambda_.10} parent=19 // pred_check_branch
          %191 = sbr.rel (%p189) target = $region50
        $region49: #{_lambda_.10} parent=19 // pred_region
          %s192 = smul.u32 48, %s17
          %p193 = scmp.lt.s32.totalorder %s192, 143
          %s194 = scalar_select %p193, %s192, 143
          %s195 = smul.addr %s194, 4
          %s196 = scalar_lea.vmem %s1, %s195
          %s197 = smul.u32 48, %s17
        $region50: #{_lambda_.10} parent=19 // pred_fallthru
          _
      $region20: #{_lambda_.10} parent=5 // pred_fallthru
        _
      %p198 = scmp.le.s32.totalorder 1, %s9
      %p199 = scmp.lt.s32.totalorder %s9, 7
      %p200 = pnand %p198, %p199
      %p201 = pneg %p200
      // Predicated region
      $region51: #{_lambda_.10} parent=5 // pred_check
        _
      $region52: #{_lambda_.10} parent=5 // pred_check_branch
        %203 = sbr.rel (%p200) target = $region54
      $region53: #{_lambda_.10} parent=5 // pred_region
        %s204 = ssub.s32 %s9, 1
        %s205 = sand.u32 %s36, 1
        %s206 = sand.u32 %s36, 1
        %s207 = smul.addr %s206, 24
        %s208 = scalar_lea.vmem [#allocation3], %s207
        // Predicated region
        $region55: #{_lambda_.10} parent=53 // pred_check
          %p209 = pneg %p49
        $region56: #{_lambda_.10} parent=53 // pred_check_branch
          %211 = sbr.rel (%p209) target = $region58
        $region57: #{_lambda_.10} parent=53 // pred_region
          _
        $region58: #{_lambda_.10} parent=53 // pred_fallthru
          _
        %s212 = sand.u32 %s36, 1
        %s213 = sand.u32 %s36, 1
        %s214 = smul.addr %s213, 24
        %s215 = scalar_lea.vmem [#allocation3], %s214
        %p216 = pneg %p49
        %p217 = pneg %p46
        %s218 = smul.u32 48, %s19
        %p219 = scmp.lt.s32.totalorder %s218, 143
        %s220 = scalar_select %p219, %s218, 143
        %s221 = smul.addr %s220, 4
        %s222 = scalar_lea.vmem %s1, %s221
        %p223 = pneg %p75
        %p224 = pneg %p72
        %p225 = pneg %p96
        %p226 = pneg %p93
        %p227 = pneg %p122
        %p228 = pneg %p119
        %s229 = smul.u32 2, %s18
        %p230 = scmp.lt.s32.totalorder %s229, 3
        %s231 = scalar_select %p230, %s229, 3
        %s232 = smul.addr %s231, 4
        %s233 = scalar_lea.vmem %s3, %s232
        %s234 = smul.u32 2, %s18
        %s235 = smul.u32 3, %s19
        %s236 = smul.u32 48, %s19
        %p237 = scmp.lt.s32.totalorder %s236, 143
        %s238 = scalar_select %p237, %s236, 143
        %s239 = smul.addr %s238, 4
        %s240 = scalar_lea.vmem %s1, %s239
        %s241 = smul.u32 48, %s19
        %s242 = smul.u32 2, %s18
        %p243 = scmp.lt.s32.totalorder %s242, 3
        %s244 = scalar_select %p243, %s242, 3
        %s245 = smul.addr %s244, 4
        %s246 = scalar_lea.vmem %s3, %s245
        %s247 = smul.u32 2, %s18
        %p249 = scmp.eq.s32.totalorder %s19, 0
        // Predicated region
        $region59: #{_lambda_.10} parent=53 // pred_check
          %p250 = pneg %p249
        $region60: #{_lambda_.10} parent=53 // pred_check_branch
          %252 = sbr.rel (%p250) target = $region62
        $region61: #{_lambda_.10} parent=53 // pred_region
          %v253 = vld [vmem:[%s2] sm:$0x1]
          %v255 = vlaneseq
          %v256 = vshrl.u32 %v255, 7
          %v257 = vsub.s32 0, %v256
          %v258 = vrot.slane %v253, %v257
          %260 = vst [vmem:[#allocation2] sm:$0xff] %v258
          %261 = vst [vmem:[#allocation2 + $0x8] sm:$0xff] %v258
        $region62: #{_lambda_.10} parent=53 // pred_fallthru
          _
        %v262 = vld [vmem:[#allocation2] sm:$0xff]
        %v263 = vld [vmem:[#allocation2 + $0x8] sm:$0xff]
        %v264 = vld [vmem:[%s208] sm:$0xff]
        %v265 = vld [vmem:[%s208 + $0x8] sm:$0xf]
        %v266 = vld [vmem:[%s208 + $0xc] sm:$0xff]
        %v267 = vld [vmem:[%s208 + $0x14] sm:$0xf]
        %v268 = vld [vmem:[%s240] sm:$0xf]
        %v269 = vld [vmem:[%s240 + $0x4] sm:$0xf]
        %v270 = vld [vmem:[%s240 + $0x8] sm:$0xf]
        %v271 = vld [vmem:[%s240 + $0xc] sm:$0xf]
        %v272 = vld [vmem:[%s240 + $0x10] sm:$0xf]
        %v273 = vld [vmem:[%s240 + $0x14] sm:$0xf]
        %v274 = vld [vmem:[%s240 + $0x18] sm:$0xf]
        %v275 = vld [vmem:[%s240 + $0x1c] sm:$0xf]
        %v276 = vld [vmem:[%s240 + $0x20] sm:$0xf]
        %v277 = vld [vmem:[%s240 + $0x24] sm:$0xf]
        %v278 = vld [vmem:[%s240 + $0x28] sm:$0xf]
        %v279 = vld [vmem:[%s240 + $0x2c] sm:$0xf]
        %v280 = vld [vmem:[%s240 + $0x30] sm:$0xf]
        %v281 = vld [vmem:[%s240 + $0x34] sm:$0xf]
        %v282 = vld [vmem:[%s240 + $0x38] sm:$0xf]
        %v283 = vld [vmem:[%s240 + $0x3c] sm:$0xf]
        %v284 = vld [vmem:[%s240 + $0x40] sm:$0xf]
        %v285 = vld [vmem:[%s240 + $0x44] sm:$0xf]
        %v286 = vld [vmem:[%s240 + $0x48] sm:$0xf]
        %v287 = vld [vmem:[%s240 + $0x4c] sm:$0xf]
        %v288 = vld [vmem:[%s240 + $0x50] sm:$0xf]
        %v289 = vld [vmem:[%s240 + $0x54] sm:$0xf]
        %v290 = vld [vmem:[%s240 + $0x58] sm:$0xf]
        %v291 = vld [vmem:[%s240 + $0x5c] sm:$0xf]
        %v292 = vld [vmem:[%s240 + $0x60] sm:$0xf]
        %v293 = vld [vmem:[%s240 + $0x64] sm:$0xf]
        %v294 = vld [vmem:[%s240 + $0x68] sm:$0xf]
        %v295 = vld [vmem:[%s240 + $0x6c] sm:$0xf]
        %v296 = vld [vmem:[%s240 + $0x70] sm:$0xf]
        %v297 = vld [vmem:[%s240 + $0x74] sm:$0xf]
        %v298 = vld [vmem:[%s240 + $0x78] sm:$0xf]
        %v299 = vld [vmem:[%s240 + $0x7c] sm:$0xf]
        %v300 = vld [vmem:[%s240 + $0x80] sm:$0xf]
        %v301 = vld [vmem:[%s240 + $0x84] sm:$0xf]
        %v302 = vld [vmem:[%s240 + $0x88] sm:$0xf]
        %v303 = vld [vmem:[%s240 + $0x8c] sm:$0xf]
        %v304 = vld [vmem:[%s240 + $0x90] sm:$0xf]
        %v305 = vld [vmem:[%s240 + $0x94] sm:$0xf]
        %v306 = vld [vmem:[%s240 + $0x98] sm:$0xf]
        %v307 = vld [vmem:[%s240 + $0x9c] sm:$0xf]
        %v308 = vld [vmem:[%s240 + $0xa0] sm:$0xf]
        %v309 = vld [vmem:[%s240 + $0xa4] sm:$0xf]
        %v310 = vld [vmem:[%s240 + $0xa8] sm:$0xf]
        %v311 = vld [vmem:[%s240 + $0xac] sm:$0xf]
        %v312 = vld [vmem:[%s240 + $0xb0] sm:$0xf]
        %v313 = vld [vmem:[%s240 + $0xb4] sm:$0xf]
        %v314 = vld [vmem:[%s240 + $0xb8] sm:$0xf]
        %v315 = vld [vmem:[%s240 + $0xbc] sm:$0xf]
        %v320 = vunpack.c.l.b16 %v264
        %v321 = vunpack.c.h.b16 %v264
        %v322 = vunpack.c.l.b16 %v265
        %v323 = vunpack.c.l.b16 %v266
        %v324 = vunpack.c.h.b16 %v266
        %v325 = vunpack.c.l.b16 %v267
        %v326 = vpack.c.b16 %v323, %v320
        %v327 = vpack.c.b16 %v324, %v321
        %v328 = vpack.c.b16 %v325, %v322
        %v380 = vunpack.c.l.b16 %v268
        %v381 = vunpack.c.l.b16 %v269
        %v382 = vunpack.c.l.b16 %v270
        %v383 = vunpack.c.l.b16 %v271
        %v384 = vunpack.c.l.b16 %v272
        %v385 = vunpack.c.l.b16 %v273
        %v386 = vunpack.c.l.b16 %v274
        %v387 = vunpack.c.l.b16 %v275
        %v388 = vunpack.c.l.b16 %v276
        %v389 = vunpack.c.l.b16 %v277
        %v390 = vunpack.c.l.b16 %v278
        %v391 = vunpack.c.l.b16 %v279
        %v392 = vunpack.c.l.b16 %v280
        %v393 = vunpack.c.l.b16 %v281
        %v394 = vunpack.c.l.b16 %v282
        %v395 = vunpack.c.l.b16 %v283
        %v396 = vunpack.c.l.b16 %v284
        %v397 = vunpack.c.l.b16 %v285
        %v398 = vunpack.c.l.b16 %v286
        %v399 = vunpack.c.l.b16 %v287
        %v400 = vunpack.c.l.b16 %v288
        %v401 = vunpack.c.l.b16 %v289
        %v402 = vunpack.c.l.b16 %v290
        %v403 = vunpack.c.l.b16 %v291
        %v404 = vunpack.c.l.b16 %v292
        %v405 = vunpack.c.l.b16 %v293
        %v406 = vunpack.c.l.b16 %v294
        %v407 = vunpack.c.l.b16 %v295
        %v408 = vunpack.c.l.b16 %v296
        %v409 = vunpack.c.l.b16 %v297
        %v410 = vunpack.c.l.b16 %v298
        %v411 = vunpack.c.l.b16 %v299
        %v412 = vunpack.c.l.b16 %v300
        %v413 = vunpack.c.l.b16 %v301
        %v414 = vunpack.c.l.b16 %v302
        %v415 = vunpack.c.l.b16 %v303
        %v416 = vunpack.c.l.b16 %v304
        %v417 = vunpack.c.l.b16 %v305
        %v418 = vunpack.c.l.b16 %v306
        %v419 = vunpack.c.l.b16 %v307
        %v420 = vunpack.c.l.b16 %v308
        %v421 = vunpack.c.l.b16 %v309
        %v422 = vunpack.c.l.b16 %v310
        %v423 = vunpack.c.l.b16 %v311
        %v424 = vunpack.c.l.b16 %v312
        %v425 = vunpack.c.l.b16 %v313
        %v426 = vunpack.c.l.b16 %v314
        %v427 = vunpack.c.l.b16 %v315
        %v428 = vpack.c.b16 %v381, %v380
        %v429 = vpack.c.b16 %v383, %v382
        %v430 = vpack.c.b16 %v385, %v384
        %v431 = vpack.c.b16 %v387, %v386
        %v432 = vpack.c.b16 %v389, %v388
        %v433 = vpack.c.b16 %v391, %v390
        %v434 = vpack.c.b16 %v393, %v392
        %v435 = vpack.c.b16 %v395, %v394
        %v436 = vpack.c.b16 %v397, %v396
        %v437 = vpack.c.b16 %v399, %v398
        %v438 = vpack.c.b16 %v401, %v400
        %v439 = vpack.c.b16 %v403, %v402
        %v440 = vpack.c.b16 %v405, %v404
        %v441 = vpack.c.b16 %v407, %v406
        %v442 = vpack.c.b16 %v409, %v408
        %v443 = vpack.c.b16 %v411, %v410
        %v444 = vpack.c.b16 %v413, %v412
        %v445 = vpack.c.b16 %v415, %v414
        %v446 = vpack.c.b16 %v417, %v416
        %v447 = vpack.c.b16 %v419, %v418
        %v448 = vpack.c.b16 %v421, %v420
        %v449 = vpack.c.b16 %v423, %v422
        %v450 = vpack.c.b16 %v425, %v424
        %v451 = vpack.c.b16 %v427, %v426
        %476 = vmatprep.subr.bf16.mxu0 0
        %477 = vmatpush1.bf16.msra.mxu0 %v428
        %478 = vmatprep.subr.bf16.mxu0 0
        %479 = vmatpush1.bf16.msra.mxu0 %v429
        %480 = vmatprep.subr.bf16.mxu0 0
        %481 = vmatpush1.bf16.msra.mxu0 %v430
        %482 = vmatprep.subr.bf16.mxu0 0
        %483 = vmatpush1.bf16.msra.mxu0 %v431
        %484 = vmatprep.subr.bf16.mxu0 0
        %485 = vmatpush1.bf16.msra.mxu0 %v432
        %486 = vmatprep.subr.bf16.mxu0 0
        %487 = vmatpush1.bf16.msra.mxu0 %v433
        %488 = vmatprep.subr.bf16.mxu0 0
        %489 = vmatpush1.bf16.msra.mxu0 %v434
        %490 = vmatprep.subr.bf16.mxu0 0
        %491 = vmatpush1.bf16.msra.mxu0 %v435
        %492 = vmatprep.subr.bf16.mxu0 0
        %493 = vmatpush1.bf16.msra.mxu0 %v436
        %494 = vmatprep.subr.bf16.mxu0 0
        %495 = vmatpush1.bf16.msra.mxu0 %v437
        %496 = vmatprep.subr.bf16.mxu0 0
        %497 = vmatpush1.bf16.msra.mxu0 %v438
        %498 = vmatprep.subr.bf16.mxu0 0
        %499 = vmatpush1.bf16.msra.mxu0 %v439
        %500 = vmatprep.subr.bf16.mxu0 0
        %501 = vmatpush1.bf16.msra.mxu0 %v440
        %502 = vmatprep.subr.bf16.mxu0 0
        %503 = vmatpush1.bf16.msra.mxu0 %v441
        %504 = vmatprep.subr.bf16.mxu0 0
        %505 = vmatpush1.bf16.msra.mxu0 %v442
        %506 = vmatprep.subr.bf16.mxu0 0
        %507 = vmatpush1.bf16.msra.mxu0 %v443
        %508 = vmatprep.mubr.bf16.mxu0 %v327
        %509 = vmatmul.mubr.bf16.gmra.mrb[0].mxu0 %v326
        %v510 = vpop.f32.mrb[0].mxu0
        %v511 = vadd.f32 0.0, %v510
        %v512 = vpop.f32.mrb[0].mxu0
        %v513 = vpop.f32.mrb[0].mxu0
        %v514 = vadd.f32 0.0, %v513
        %v515 = vpop.f32.mrb[0].mxu0
        %516 = vdwg.mxu0
        %517 = vmatprep.subr.bf16.mxu0 0
        %518 = vmatpush1.bf16.msra.mxu0 %v444
        %519 = vmatprep.subr.bf16.mxu0 0
        %520 = vmatpush1.bf16.msra.mxu0 %v445
        %521 = vmatprep.subr.bf16.mxu0 0
        %522 = vmatpush1.bf16.msra.mxu0 %v446
        %523 = vmatprep.subr.bf16.mxu0 0
        %524 = vmatpush1.bf16.msra.mxu0 %v447
        %525 = vmatprep.subr.bf16.mxu0 0
        %526 = vmatpush1.bf16.msra.mxu0 %v448
        %527 = vmatprep.subr.bf16.mxu0 0
        %528 = vmatpush1.bf16.msra.mxu0 %v449
        %529 = vmatprep.subr.bf16.mxu0 0
        %530 = vmatpush1.bf16.msra.mxu0 %v450
        %531 = vmatprep.subr.bf16.mxu0 0
        %532 = vmatpush1.bf16.msra.mxu0 %v451
        %533 = vmatprep.subr.bf16.mxu0 0
        %534 = vmatpush1.bf16.msra.mxu0 0
        %535 = vmatprep.subr.bf16.mxu0 0
        %536 = vmatpush1.bf16.msra.mxu0 0
        %537 = vmatprep.subr.bf16.mxu0 0
        %538 = vmatpush1.bf16.msra.mxu0 0
        %539 = vmatprep.subr.bf16.mxu0 0
        %540 = vmatpush1.bf16.msra.mxu0 0
        %541 = vmatprep.subr.bf16.mxu0 0
        %542 = vmatpush1.bf16.msra.mxu0 0
        %543 = vmatprep.subr.bf16.mxu0 0
        %544 = vmatpush1.bf16.msra.mxu0 0
        %545 = vmatprep.subr.bf16.mxu0 0
        %546 = vmatpush1.bf16.msra.mxu0 0
        %547 = vmatprep.subr.bf16.mxu0 0
        %548 = vmatpush1.bf16.msra.mxu0 0
        %549 = vmatprep.mubr.bf16.mxu0 0
        %550 = vmatmul.mubr.bf16.gmra.mrb[0].mxu0 %v328
        %v551 = vpop.f32.mrb[0].mxu0
        %v552 = vadd.f32 %v511, %v551
        %v553 = vpop.f32.mrb[0].mxu0
        %v554 = vpop.f32.mrb[0].mxu0
        %v555 = vadd.f32 %v514, %v554
        %v556 = vpop.f32.mrb[0].mxu0
        %557 = vdwg.mxu0
        %v558 = vadd.f32 %v262, %v552
        %v559 = vadd.f32 %v263, %v555
        %560 = vst [vmem:[#allocation2] sm:$0xff] %v558
        %561 = vst [vmem:[#allocation2 + $0x8] sm:$0xff] %v559
        %p562 = scmp.eq.s32.totalorder %s19, 2
        // Predicated region
        $region63: #{_lambda_.10} parent=53 // pred_check
          %p563 = pneg %p562
        $region64: #{_lambda_.10} parent=53 // pred_check_branch
          %565 = sbr.rel (%p563) target = $region66
        $region65: #{_lambda_.10} parent=53 // pred_region
          %v566 = vld [vmem:[#allocation2] sm:$0xff]
          %v567 = vld [vmem:[#allocation2 + $0x8] sm:$0xff]
          %v568 = vadd.f32 %v566, %v567
          %v569 = vrot.slane %v568, 4
          %v570 = vadd.f32 %v568, %v569
          %v571 = vrot.slane %v570, 2
          %v572 = vadd.f32 %v570, %v571
          %v573 = vrot.slane %v572, 1
          %v574 = vadd.f32 %v572, %v573
          %v575 = vrcp.pop 16.0
          %v576 = vmul.f32 %v574, %v575
          %v577 = vsub.f32 %v566, %v576
          %v578 = vsub.f32 %v567, %v576
          %v579 = vmul.f32 %v577, %v577
          %v580 = vmul.f32 %v578, %v578
          %v581 = vadd.f32 %v579, %v580
          %v582 = vrot.slane %v581, 4
          %v583 = vadd.f32 %v581, %v582
          %v584 = vrot.slane %v583, 2
          %v585 = vadd.f32 %v583, %v584
          %v586 = vrot.slane %v585, 1
          %v587 = vadd.f32 %v585, %v586
          %v588 = vmul.f32 %v587, %v575
          %v589 = vadd.f32 %v588, 1e-05
          %v590 = vrsqrt.pop %v589
          %v591 = vmul.f32 %v577, %v590
          %v592 = vmul.f32 %v578, %v590
          %v593 = vmax.f32 %v591, 0.0
          %v594 = vmax.f32 %v592, 0.0
          %v595 = vpack.c.bf16 %v594, %v593
          %v597 = vunpack.c.l.b16 %v595
          %v598 = vunpack.c.h.b16 %v595
          %v599 = vpack.c.b16 %v597, %v597
          %v600 = vpack.c.b16 %v598, %v598
          %603 = vst [vmem:[%s246] sm:$0xf] %v599
          %604 = vst [vmem:[%s246 + $0x4] sm:$0xf] %v600
        $region66: #{_lambda_.10} parent=53 // pred_fallthru
          _
        %s605 = smul.u32 2, %s18
        %p606 = scmp.lt.s32.totalorder %s605, 3
        %s607 = scalar_select %p606, %s605, 3
        %s608 = smul.addr %s607, 4
        %s609 = scalar_lea.vmem %s3, %s608
        // Predicated region
        $region67: #{_lambda_.10} parent=53 // pred_check
          %p610 = pneg %p119
        $region68: #{_lambda_.10} parent=53 // pred_check_branch
          %612 = sbr.rel (%p610) target = $region70
        $region69: #{_lambda_.10} parent=53 // pred_region
          %s613 = smul.u32 2, %s18
        $region70: #{_lambda_.10} parent=53 // pred_fallthru
          _
      $region54: #{_lambda_.10} parent=5 // pred_fallthru
        _
      %p614 = scmp.le.s32.totalorder 2, %s9
      // Predicated region
      $region71: #{_lambda_.10} parent=5 // pred_check
        %p615 = pneg %p614
      $region72: #{_lambda_.10} parent=5 // pred_check_branch
        %617 = sbr.rel (%p615) target = $region74
      $region73: #{_lambda_.10} parent=5 // pred_region
        %s618 = ssub.s32 %s9, 2
        // Predicated region
        $region75: #{_lambda_.10} parent=73 // pred_check
          %p619 = pneg %p125
        $region76: #{_lambda_.10} parent=73 // pred_check_branch
          %621 = sbr.rel (%p619) target = $region78
        $region77: #{_lambda_.10} parent=73 // pred_region
          %s622 = smul.u32 2, %s20
          %p623 = scmp.lt.s32.totalorder %s622, 3
          %s624 = scalar_select %p623, %s622, 3
          %s625 = smul.addr %s624, 4
          %s626 = scalar_lea.vmem %s3, %s625
        $region78: #{_lambda_.10} parent=73 // pred_fallthru
          _
      $region74: #{_lambda_.10} parent=5 // pred_fallthru
        _
    $region6: #{_lambda_.10} parent=1 // loop_footer
      %s13 = sadd.s32 1, %s9
    $region7: #{_lambda_.10} parent=1 // loop_footer_branch
      %8 = sbr.rel target = $region3
    $region8: #{_lambda_.10} parent=1 // loop_exit
      _

// kernel: _lambda_.12
$region0: #{_lambda_.12}
  #allocation0 [shape = 'u32[]', space=smem, size = 0x4, offset = 0x4, fixed_abs, tag = 'smem constant byte address 0x4 - core index']
  #allocation1 [shape = 'u32[144,128]{1,0:T(1,128)}', space=vmem, size = 0x12000, scoped, tag = 'internal scratch']
  #allocation2 [shape = 'f32[16,128]{1,0:T(8,128)}', space=vmem, size = 0x2000, scoped, tag = 'scratch operand']
  %s0 = inlined_call_operand.vmem [shape: bf16[32,1152], index: 0, kind: input, shape index: {}]
  %s1 = inlined_call_operand.vmem [shape: bf16[1152,128], index: 1, kind: input, shape index: {}]
  %s2 = inlined_call_operand.vmem [shape: f32[1,128], index: 2, kind: input, shape index: {}]
  %s3 = inlined_call_operand.vmem [shape: bf16[32,128], index: 3, kind: input, shape index: {}]
  %s4 = inlined_call_operand.vmem [shape: bf16[32,128], index: 4, kind: output, shape index: {}]
  %s5 = sld [smem:[#allocation0]]
  $region83: #{_lambda_.12} parent=0
    _
  %s7 = ssub.s32 1, %s5
  %s8 = scalar_select 0, %s7, %s5
  $region1: #{_lambda_.12} parent=0
    #allocation3 [shape = 'u8[24576]{0}', space=vmem, size = 0x6000, scoped, tag = 'input window, operand 0']
    loop: start=0, step=1, limit=8
    $region2: #{_lambda_.12} parent=1 // loop_pre_header
      _
    $region3: #{_lambda_.12} parent=1 // loop_header
      %s10 = sphi 0, %s14
      %p11 = scmp.ge.s32.totalorder %s10, 8
      %s17 = sphi 0, %s29
      %s18 = sphi 0, %s25
      %s19 = sphi 0, %s17
      %s20 = sphi 0, %s18
      %s21 = sphi 0, %s19
      %s22 = sphi 0, %s20
      %s34 = sphi 0, %s36
      %s37 = sphi 0, %s34
      %s38 = sphi 0, %s37
      %s54 = sphi 0, %s38
      %s60 = sphi 0, %s62
      %s63 = sphi 0, %s60
      %s64 = sphi 0, %s63
      %s80 = sphi 0, %s64
      %s84 = sphi 0, %s84
      %s86 = sphi 0, %s84
      %s87 = sphi 0, %s86
      %s101 = sphi 0, %s87
      %s107 = sphi 0, %s109
      %s110 = sphi 0, %s107
      %s111 = sphi 0, %s110
      %s127 = sphi 0, %s111
      %s133 = sphi 0, %s135
      %s136 = sphi 0, %s133
      %s137 = sphi 0, %s136
      %s153 = sphi 0, %s137
    $region4: #{_lambda_.12} parent=1 // loop_header_branch
      %13 = sbr.rel (%p11) target = $region8
    $region5: #{_lambda_.12} parent=1 // loop_body
      %s15 = ssub.s32 %s10, 1
      %s16 = ssub.s32 %s10, 2
      %s23 = sadd.s32 1, %s18
      %p24 = scmp.ge.s32.totalorder %s23, 3
      %s25 = scalar_select %p24, 0, %s23
      %s26 = sadd.s32 1, %s17
      %s27 = scalar_select %p24, %s26, %s17
      %p28 = scmp.ge.s32.totalorder %s27, 2
      %s29 = scalar_select %p28, 0, %s27
      %s30 = ssub.s32 %s17, %s29
      %s31 = ssub.s32 %s18, %s25
      %s32 = sor.u32 %s30, %s31
      %p33 = scmp.eq.s32.totalorder %s32, 0
      %s35 = sadd.s32 %s34, 1
      %s36 = scalar_select %p33, %s34, %s35
      %p39 = pneg %p33
      %p40 = scmp.eq.s32.totalorder %s10, 5
      %p41 = por %p39, %p40
      %p42 = scmp.ne.s32.totalorder %s34, %s37
      %p43 = scmp.eq.s32.totalorder %s10, 0
      %p44 = por %p42, %p43
      %p45 = scmp.ne.s32.totalorder %s34, %s37
      %p46 = scmp.eq.s32.totalorder %s15, 5
      %p47 = por %p45, %p46
      %p48 = scmp.ne.s32.totalorder %s37, %s38
      %p49 = scmp.eq.s32.totalorder %s15, 0
      %p50 = por %p48, %p49
      %p51 = scmp.ne.s32.totalorder %s37, %s38
      %p52 = scmp.eq.s32.totalorder %s16, 5
      %p53 = por %p51, %p52
      %p55 = scmp.ne.s32.totalorder %s38, %s54
      %p56 = scmp.eq.s32.totalorder %s16, 0
      %p57 = por %p55, %p56
      %s58 = ssub.s32 %s18, %s25
      %p59 = scmp.eq.s32.totalorder %s58, 0
      %s61 = sadd.s32 %s60, 1
      %s62 = scalar_select %p59, %s60, %s61
      %p65 = pneg %p59
      %p66 = scmp.eq.s32.totalorder %s10, 5
      %p67 = por %p65, %p66
      %p68 = scmp.ne.s32.totalorder %s60, %s63
      %p69 = scmp.eq.s32.totalorder %s10, 0
      %p70 = por %p68, %p69
      %p71 = scmp.ne.s32.totalorder %s60, %s63
      %p72 = scmp.eq.s32.totalorder %s15, 5
      %p73 = por %p71, %p72
      %p74 = scmp.ne.s32.totalorder %s63, %s64
      %p75 = scmp.eq.s32.totalorder %s15, 0
      %p76 = por %p74, %p75
      %p77 = scmp.ne.s32.totalorder %s63, %s64
      %p78 = scmp.eq.s32.totalorder %s16, 5
      %p79 = por %p77, %p78
      %p81 = scmp.ne.s32.totalorder %s64, %s80
      %p82 = scmp.eq.s32.totalorder %s16, 0
      %p83 = por %p81, %p82
      %s85 = sadd.s32 %s84, 1
      %p88 = scmp.eq.s32.totalorder %s10, 5
      %p89 = scmp.ne.s32.totalorder %s84, %s86
      %p90 = scmp.eq.s32.totalorder %s10, 0
      %p91 = por %p89, %p90
      %p92 = scmp.ne.s32.totalorder %s84, %s86
      %p93 = scmp.eq.s32.totalorder %s15, 5
      %p94 = por %p92, %p93
      %p95 = scmp.ne.s32.totalorder %s86, %s87
      %p96 = scmp.eq.s32.totalorder %s15, 0
      %p97 = por %p95, %p96
      %p98 = scmp.ne.s32.totalorder %s86, %s87
      %p99 = scmp.eq.s32.totalorder %s16, 5
      %p100 = por %p98, %p99
      %p102 = scmp.ne.s32.totalorder %s87, %s101
      %p103 = scmp.eq.s32.totalorder %s16, 0
      %p104 = por %p102, %p103
      %s105 = ssub.s32 %s17, %s29
      %p106 = scmp.eq.s32.totalorder %s105, 0
      %s108 = sadd.s32 %s107, 1
      %s109 = scalar_select %p106, %s107, %s108
      %p112 = pneg %p106
      %p113 = scmp.eq.s32.totalorder %s10, 5
      %p114 = por %p112, %p113
      %p115 = scmp.ne.s32.totalorder %s107, %s110
      %p116 = scmp.eq.s32.totalorder %s10, 0
      %p117 = por %p115, %p116
      %p118 = scmp.ne.s32.totalorder %s107, %s110
      %p119 = scmp.eq.s32.totalorder %s15, 5
      %p120 = por %p118, %p119
      %p121 = scmp.ne.s32.totalorder %s110, %s111
      %p122 = scmp.eq.s32.totalorder %s15, 0
      %p123 = por %p121, %p122
      %p124 = scmp.ne.s32.totalorder %s110, %s111
      %p125 = scmp.eq.s32.totalorder %s16, 5
      %p126 = por %p124, %p125
      %p128 = scmp.ne.s32.totalorder %s111, %s127
      %p129 = scmp.eq.s32.totalorder %s16, 0
      %p130 = por %p128, %p129
      %s131 = ssub.s32 %s17, %s29
      %p132 = scmp.eq.s32.totalorder %s131, 0
      %s134 = sadd.s32 %s133, 1
      %s135 = scalar_select %p132, %s133, %s134
      %p138 = pneg %p132
      %p139 = scmp.eq.s32.totalorder %s10, 5
      %p140 = por %p138, %p139
      %p141 = scmp.ne.s32.totalorder %s133, %s136
      %p142 = scmp.eq.s32.totalorder %s10, 0
      %p143 = por %p141, %p142
      %p144 = scmp.ne.s32.totalorder %s133, %s136
      %p145 = scmp.eq.s32.totalorder %s15, 5
      %p146 = por %p144, %p145
      %p147 = scmp.ne.s32.totalorder %s136, %s137
      %p148 = scmp.eq.s32.totalorder %s15, 0
      %p149 = por %p147, %p148
      %p150 = scmp.ne.s32.totalorder %s136, %s137
      %p151 = scmp.eq.s32.totalorder %s16, 5
      %p152 = por %p150, %p151
      %p154 = scmp.ne.s32.totalorder %s137, %s153
      %p155 = scmp.eq.s32.totalorder %s16, 0
      %p156 = por %p154, %p155
      %p157 = scmp.le.s32.totalorder 1, %s10
      %p158 = scmp.lt.s32.totalorder %s10, 7
      %p159 = pnand %p157, %p158
      %p160 = pneg %p159
      // Predicated region
      $region9: #{_lambda_.12} parent=5 // pred_check
        _
      $region10: #{_lambda_.12} parent=5 // pred_check_branch
        %162 = sbr.rel (%p159) target = $region12
      $region11: #{_lambda_.12} parent=5 // pred_region
        %s163 = ssub.s32 %s10, 1
        // Predicated region
        $region13: #{_lambda_.12} parent=11 // pred_check
          %p164 = pneg %p97
        $region14: #{_lambda_.12} parent=11 // pred_check_branch
          %166 = sbr.rel (%p164) target = $region16
        $region15: #{_lambda_.12} parent=11 // pred_region
          _
        $region16: #{_lambda_.12} parent=11 // pred_fallthru
          _
      $region12: #{_lambda_.12} parent=5 // pred_fallthru
        _
      %p167 = scmp.lt.s32.totalorder %s10, 6
      // Predicated region
      $region17: #{_lambda_.12} parent=5 // pred_check
        %p168 = pneg %p167
      $region18: #{_lambda_.12} parent=5 // pred_check_branch
        %170 = sbr.rel (%p168) target = $region20
      $region19: #{_lambda_.12} parent=5 // pred_region
        // Predicated region
        $region21: #{_lambda_.12} parent=19 // pred_check
          %p171 = pneg %p44
        $region22: #{_lambda_.12} parent=19 // pred_check_branch
          %173 = sbr.rel (%p171) target = $region24
        $region23: #{_lambda_.12} parent=19 // pred_region
          %s174 = sand.u32 %s34, 1
          %s175 = sand.u32 %s34, 1
          %s176 = smul.addr %s175, 24
          %s177 = scalar_lea.vmem [#allocation3], %s176
          %s178 = smul.u32 2, %s17
          %s179 = smul.u32 3, %s18
          %s180 = smul.addr %s178, 9
          %s181 = sadd.s32 %s179, %s180
          %s182 = smul.addr %s181, 4
          %s183 = scalar_lea.vmem %s0, %s182
          // Predicated region
          $region25: #{_lambda_.12} parent=23 // pred_check
            _
          $region26: #{_lambda_.12} parent=23 // pred_check_branch
            %185 = sbr.rel (0) target = $region28
          $region27: #{_lambda_.12} parent=23 // pred_region
            // Predicated region
            $region29: #{_lambda_.12} parent=27 // pred_check
              _
            $region30: #{_lambda_.12} parent=27 // pred_check_branch
              %187 = sbr.rel (0) target = $region32
            $region31: #{_lambda_.12} parent=27 // pred_region
              %s188 = scalar_lea.vmem %s183, 8
              %s189 = scalar_lea.vmem %s177, 8 [#allocation3]
              loop: start=0, step=1, limit=1
              $region33: #{_lambda_.12} parent=31 // loop_pre_header
                _
              $region34: #{_lambda_.12} parent=31 // loop_header
                %s191 = sphi 0, %s195
                %p192 = scmp.ge.s32.totalorder %s191, 1
                %s196 = sphi %s183, %s183
                %s197 = sphi %s177, %s177
              $region35: #{_lambda_.12} parent=31 // loop_header_branch
                %194 = sbr.rel (%p192) target = $region39
              $region36: #{_lambda_.12} parent=31 // loop_body
                %v198 = vld [vmem:[%s196] sm:$0xff]
                %199 = vst [vmem:[%s197] sm:$0xff] %v198
                %v200 = vld [vmem:[%s196 + $0x24] sm:$0xff]
                %201 = vst [vmem:[%s197 + $0xc] sm:$0xff] %v200
              $region37: #{_lambda_.12} parent=31 // loop_footer
                %s195 = sadd.s32 1, %s191
              $region38: #{_lambda_.12} parent=31 // loop_footer_branch
                %190 = sbr.rel target = $region34
              $region39: #{_lambda_.12} parent=31 // loop_exit
                _
              loop: start=0, step=1, limit=1
              $region40: #{_lambda_.12} parent=31 // loop_pre_header
                _
              $region41: #{_lambda_.12} parent=31 // loop_header
                %s204 = sphi 0, %s208
                %p205 = scmp.ge.s32.totalorder %s204, 1
                %s209 = sphi %s188, %s188
                %s210 = sphi %s189, %s189
              $region42: #{_lambda_.12} parent=31 // loop_header_branch
                %207 = sbr.rel (%p205) target = $region46
              $region43: #{_lambda_.12} parent=31 // loop_body
                %v211 = vld [vmem:[%s209] sm:$0xf]
                %212 = vst [vmem:[%s210] sm:$0xf] %v211
                %v213 = vld [vmem:[%s209 + $0x24] sm:$0xf]
                %214 = vst [vmem:[%s210 + $0xc] sm:$0xf] %v213
              $region44: #{_lambda_.12} parent=31 // loop_footer
                %s208 = sadd.s32 1, %s204
              $region45: #{_lambda_.12} parent=31 // loop_footer_branch
                %203 = sbr.rel target = $region41
              $region46: #{_lambda_.12} parent=31 // loop_exit
                _
            $region32: #{_lambda_.12} parent=27 // pred_fallthru
              _
          $region28: #{_lambda_.12} parent=23 // pred_fallthru
            _
          %215 = vnop
        $region24: #{_lambda_.12} parent=19 // pred_fallthru
          _
        // Predicated region
        $region47: #{_lambda_.12} parent=19 // pred_check
          %p216 = pneg %p70
        $region48: #{_lambda_.12} parent=19 // pred_check_branch
          %218 = sbr.rel (%p216) target = $region50
        $region49: #{_lambda_.12} parent=19 // pred_region
          %s219 = smul.u32 48, %s18
          %p220 = scmp.lt.s32.totalorder %s219, 143
          %s221 = scalar_select %p220, %s219, 143
          %s222 = smul.addr %s221, 4
          %s223 = scalar_lea.vmem %s1, %s222
          %s224 = smul.u32 48, %s18
        $region50: #{_lambda_.12} parent=19 // pred_fallthru
          _
        // Predicated region
        $region51: #{_lambda_.12} parent=19 // pred_check
          %p225 = pneg %p117
        $region52: #{_lambda_.12} parent=19 // pred_check_branch
          %227 = sbr.rel (%p225) target = $region54
        $region53: #{_lambda_.12} parent=19 // pred_region
          %s228 = smul.u32 2, %s17
          %p229 = scmp.lt.s32.totalorder %s228, 3
          %s230 = scalar_select %p229, %s228, 3
          %s231 = smul.addr %s230, 4
          %s232 = scalar_lea.vmem %s3, %s231
          %s233 = smul.u32 2, %s17
        $region54: #{_lambda_.12} parent=19 // pred_fallthru
          _
      $region20: #{_lambda_.12} parent=5 // pred_fallthru
        _
      %p234 = scmp.le.s32.totalorder 1, %s10
      %p235 = scmp.lt.s32.totalorder %s10, 7
      %p236 = pnand %p234, %p235
      %p237 = pneg %p236
      // Predicated region
      $region55: #{_lambda_.12} parent=5 // pred_check
        _
      $region56: #{_lambda_.12} parent=5 // pred_check_branch
        %239 = sbr.rel (%p236) target = $region58
      $region57: #{_lambda_.12} parent=5 // pred_region
        %s240 = ssub.s32 %s10, 1
        %s241 = sand.u32 %s37, 1
        %s242 = sand.u32 %s37, 1
        %s243 = smul.addr %s242, 24
        %s244 = scalar_lea.vmem [#allocation3], %s243
        // Predicated region
        $region59: #{_lambda_.12} parent=57 // pred_check
          %p245 = pneg %p50
        $region60: #{_lambda_.12} parent=57 // pred_check_branch
          %247 = sbr.rel (%p245) target = $region62
        $region61: #{_lambda_.12} parent=57 // pred_region
          _
        $region62: #{_lambda_.12} parent=57 // pred_fallthru
          _
        %s248 = sand.u32 %s37, 1
        %s249 = sand.u32 %s37, 1
        %s250 = smul.addr %s249, 24
        %s251 = scalar_lea.vmem [#allocation3], %s250
        %p252 = pneg %p50
        %p253 = pneg %p47
        %s254 = smul.u32 48, %s20
        %p255 = scmp.lt.s32.totalorder %s254, 143
        %s256 = scalar_select %p255, %s254, 143
        %s257 = smul.addr %s256, 4
        %s258 = scalar_lea.vmem %s1, %s257
        %p259 = pneg %p76
        %p260 = pneg %p73
        %p261 = pneg %p97
        %p262 = pneg %p94
        %s263 = smul.u32 2, %s19
        %p264 = scmp.lt.s32.totalorder %s263, 3
        %s265 = scalar_select %p264, %s263, 3
        %s266 = smul.addr %s265, 4
        %s267 = scalar_lea.vmem %s3, %s266
        %p268 = pneg %p123
        %p269 = pneg %p120
        %p270 = pneg %p149
        %p271 = pneg %p146
        %s272 = smul.u32 2, %s19
        %p273 = scmp.lt.s32.totalorder %s272, 3
        %s274 = scalar_select %p273, %s272, 3
        %s275 = smul.addr %s274, 4
        %s276 = scalar_lea.vmem %s4, %s275
        %s277 = smul.u32 2, %s19
        %s278 = smul.u32 3, %s20
        %s279 = smul.u32 48, %s20
        %p280 = scmp.lt.s32.totalorder %s279, 143
        %s281 = scalar_select %p280, %s279, 143
        %s282 = smul.addr %s281, 4
        %s283 = scalar_lea.vmem %s1, %s282
        %s284 = smul.u32 48, %s20
        %s285 = smul.u32 2, %s19
        %p286 = scmp.lt.s32.totalorder %s285, 3
        %s287 = scalar_select %p286, %s285, 3
        %s288 = smul.addr %s287, 4
        %s289 = scalar_lea.vmem %s3, %s288
        %s290 = smul.u32 2, %s19
        %s291 = smul.u32 2, %s19
        %p292 = scmp.lt.s32.totalorder %s291, 3
        %s293 = scalar_select %p292, %s291, 3
        %s294 = smul.addr %s293, 4
        %s295 = scalar_lea.vmem %s4, %s294
        %s296 = smul.u32 2, %s19
        %p298 = scmp.eq.s32.totalorder %s20, 0
        // Predicated region
        $region63: #{_lambda_.12} parent=57 // pred_check
          %p299 = pneg %p298
        $region64: #{_lambda_.12} parent=57 // pred_check_branch
          %301 = sbr.rel (%p299) target = $region66
        $region65: #{_lambda_.12} parent=57 // pred_region
          %v302 = vld [vmem:[%s2] sm:$0x1]
          %v304 = vlaneseq
          %v305 = vshrl.u32 %v304, 7
          %v306 = vsub.s32 0, %v305
          %v307 = vrot.slane %v302, %v306
          %309 = vst [vmem:[#allocation2] sm:$0xff] %v307
          %310 = vst [vmem:[#allocation2 + $0x8] sm:$0xff] %v307
        $region66: #{_lambda_.12} parent=57 // pred_fallthru
          _
        %v311 = vld [vmem:[#allocation2] sm:$0xff]
        %v312 = vld [vmem:[#allocation2 + $0x8] sm:$0xff]
        %v313 = vld [vmem:[%s244] sm:$0xff]
        %v314 = vld [vmem:[%s244 + $0x8] sm:$0xf]
        %v315 = vld [vmem:[%s244 + $0xc] sm:$0xff]
        %v316 = vld [vmem:[%s244 + $0x14] sm:$0xf]
        %v317 = vld [vmem:[%s283] sm:$0xf]
        %v318 = vld [vmem:[%s283 + $0x4] sm:$0xf]
        %v319 = vld [vmem:[%s283 + $0x8] sm:$0xf]
        %v320 = vld [vmem:[%s283 + $0xc] sm:$0xf]
        %v321 = vld [vmem:[%s283 + $0x10] sm:$0xf]
        %v322 = vld [vmem:[%s283 + $0x14] sm:$0xf]
        %v323 = vld [vmem:[%s283 + $0x18] sm:$0xf]
        %v324 = vld [vmem:[%s283 + $0x1c] sm:$0xf]
        %v325 = vld [vmem:[%s283 + $0x20] sm:$0xf]
        %v326 = vld [vmem:[%s283 + $0x24] sm:$0xf]
        %v327 = vld [vmem:[%s283 + $0x28] sm:$0xf]
        %v328 = vld [vmem:[%s283 + $0x2c] sm:$0xf]
        %v329 = vld [vmem:[%s283 + $0x30] sm:$0xf]
        %v330 = vld [vmem:[%s283 + $0x34] sm:$0xf]
        %v331 = vld [vmem:[%s283 + $0x38] sm:$0xf]
        %v332 = vld [vmem:[%s283 + $0x3c] sm:$0xf]
        %v333 = vld [vmem:[%s283 + $0x40] sm:$0xf]
        %v334 = vld [vmem:[%s283 + $0x44] sm:$0xf]
        %v335 = vld [vmem:[%s283 + $0x48] sm:$0xf]
        %v336 = vld [vmem:[%s283 + $0x4c] sm:$0xf]
        %v337 = vld [vmem:[%s283 + $0x50] sm:$0xf]
        %v338 = vld [vmem:[%s283 + $0x54] sm:$0xf]
        %v339 = vld [vmem:[%s283 + $0x58] sm:$0xf]
        %v340 = vld [vmem:[%s283 + $0x5c] sm:$0xf]
        %v341 = vld [vmem:[%s283 + $0x60] sm:$0xf]
        %v342 = vld [vmem:[%s283 + $0x64] sm:$0xf]
        %v343 = vld [vmem:[%s283 + $0x68] sm:$0xf]
        %v344 = vld [vmem:[%s283 + $0x6c] sm:$0xf]
        %v345 = vld [vmem:[%s283 + $0x70] sm:$0xf]
        %v346 = vld [vmem:[%s283 + $0x74] sm:$0xf]
        %v347 = vld [vmem:[%s283 + $0x78] sm:$0xf]
        %v348 = vld [vmem:[%s283 + $0x7c] sm:$0xf]
        %v349 = vld [vmem:[%s283 + $0x80] sm:$0xf]
        %v350 = vld [vmem:[%s283 + $0x84] sm:$0xf]
        %v351 = vld [vmem:[%s283 + $0x88] sm:$0xf]
        %v352 = vld [vmem:[%s283 + $0x8c] sm:$0xf]
        %v353 = vld [vmem:[%s283 + $0x90] sm:$0xf]
        %v354 = vld [vmem:[%s283 + $0x94] sm:$0xf]
        %v355 = vld [vmem:[%s283 + $0x98] sm:$0xf]
        %v356 = vld [vmem:[%s283 + $0x9c] sm:$0xf]
        %v357 = vld [vmem:[%s283 + $0xa0] sm:$0xf]
        %v358 = vld [vmem:[%s283 + $0xa4] sm:$0xf]
        %v359 = vld [vmem:[%s283 + $0xa8] sm:$0xf]
        %v360 = vld [vmem:[%s283 + $0xac] sm:$0xf]
        %v361 = vld [vmem:[%s283 + $0xb0] sm:$0xf]
        %v362 = vld [vmem:[%s283 + $0xb4] sm:$0xf]
        %v363 = vld [vmem:[%s283 + $0xb8] sm:$0xf]
        %v364 = vld [vmem:[%s283 + $0xbc] sm:$0xf]
        %v369 = vunpack.c.l.b16 %v313
        %v370 = vunpack.c.h.b16 %v313
        %v371 = vunpack.c.l.b16 %v314
        %v372 = vunpack.c.l.b16 %v315
        %v373 = vunpack.c.h.b16 %v315
        %v374 = vunpack.c.l.b16 %v316
        %v375 = vpack.c.b16 %v372, %v369
        %v376 = vpack.c.b16 %v373, %v370
        %v377 = vpack.c.b16 %v374, %v371
        %v429 = vunpack.c.l.b16 %v317
        %v430 = vunpack.c.l.b16 %v318
        %v431 = vunpack.c.l.b16 %v319
        %v432 = vunpack.c.l.b16 %v320
        %v433 = vunpack.c.l.b16 %v321
        %v434 = vunpack.c.l.b16 %v322
        %v435 = vunpack.c.l.b16 %v323
        %v436 = vunpack.c.l.b16 %v324
        %v437 = vunpack.c.l.b16 %v325
        %v438 = vunpack.c.l.b16 %v326
        %v439 = vunpack.c.l.b16 %v327
        %v440 = vunpack.c.l.b16 %v328
        %v441 = vunpack.c.l.b16 %v329
        %v442 = vunpack.c.l.b16 %v330
        %v443 = vunpack.c.l.b16 %v331
        %v444 = vunpack.c.l.b16 %v332
        %v445 = vunpack.c.l.b16 %v333
        %v446 = vunpack.c.l.b16 %v334
        %v447 = vunpack.c.l.b16 %v335
        %v448 = vunpack.c.l.b16 %v336
        %v449 = vunpack.c.l.b16 %v337
        %v450 = vunpack.c.l.b16 %v338
        %v451 = vunpack.c.l.b16 %v339
        %v452 = vunpack.c.l.b16 %v340
        %v453 = vunpack.c.l.b16 %v341
        %v454 = vunpack.c.l.b16 %v342
        %v455 = vunpack.c.l.b16 %v343
        %v456 = vunpack.c.l.b16 %v344
        %v457 = vunpack.c.l.b16 %v345
        %v458 = vunpack.c.l.b16 %v346
        %v459 = vunpack.c.l.b16 %v347
        %v460 = vunpack.c.l.b16 %v348
        %v461 = vunpack.c.l.b16 %v349
        %v462 = vunpack.c.l.b16 %v350
        %v463 = vunpack.c.l.b16 %v351
        %v464 = vunpack.c.l.b16 %v352
        %v465 = vunpack.c.l.b16 %v353
        %v466 = vunpack.c.l.b16 %v354
        %v467 = vunpack.c.l.b16 %v355
        %v468 = vunpack.c.l.b16 %v356
        %v469 = vunpack.c.l.b16 %v357
        %v470 = vunpack.c.l.b16 %v358
        %v471 = vunpack.c.l.b16 %v359
        %v472 = vunpack.c.l.b16 %v360
        %v473 = vunpack.c.l.b16 %v361
        %v474 = vunpack.c.l.b16 %v362
        %v475 = vunpack.c.l.b16 %v363
        %v476 = vunpack.c.l.b16 %v364
        %v477 = vpack.c.b16 %v430, %v429
        %v478 = vpack.c.b16 %v432, %v431
        %v479 = vpack.c.b16 %v434, %v433
        %v480 = vpack.c.b16 %v436, %v435
        %v481 = vpack.c.b16 %v438, %v437
        %v482 = vpack.c.b16 %v440, %v439
        %v483 = vpack.c.b16 %v442, %v441
        %v484 = vpack.c.b16 %v444, %v443
        %v485 = vpack.c.b16 %v446, %v445
        %v486 = vpack.c.b16 %v448, %v447
        %v487 = vpack.c.b16 %v450, %v449
        %v488 = vpack.c.b16 %v452, %v451
        %v489 = vpack.c.b16 %v454, %v453
        %v490 = vpack.c.b16 %v456, %v455
        %v491 = vpack.c.b16 %v458, %v457
        %v492 = vpack.c.b16 %v460, %v459
        %v493 = vpack.c.b16 %v462, %v461
        %v494 = vpack.c.b16 %v464, %v463
        %v495 = vpack.c.b16 %v466, %v465
        %v496 = vpack.c.b16 %v468, %v467
        %v497 = vpack.c.b16 %v470, %v469
        %v498 = vpack.c.b16 %v472, %v471
        %v499 = vpack.c.b16 %v474, %v473
        %v500 = vpack.c.b16 %v476, %v475
        %525 = vmatprep.subr.bf16.mxu0 0
        %526 = vmatpush1.bf16.msra.mxu0 %v477
        %527 = vmatprep.subr.bf16.mxu0 0
        %528 = vmatpush1.bf16.msra.mxu0 %v478
        %529 = vmatprep.subr.bf16.mxu0 0
        %530 = vmatpush1.bf16.msra.mxu0 %v479
        %531 = vmatprep.subr.bf16.mxu0 0
        %532 = vmatpush1.bf16.msra.mxu0 %v480
        %533 = vmatprep.subr.bf16.mxu0 0
        %534 = vmatpush1.bf16.msra.mxu0 %v481
        %535 = vmatprep.subr.bf16.mxu0 0
        %536 = vmatpush1.bf16.msra.mxu0 %v482
        %537 = vmatprep.subr.bf16.mxu0 0
        %538 = vmatpush1.bf16.msra.mxu0 %v483
        %539 = vmatprep.subr.bf16.mxu0 0
        %540 = vmatpush1.bf16.msra.mxu0 %v484
        %541 = vmatprep.subr.bf16.mxu0 0
        %542 = vmatpush1.bf16.msra.mxu0 %v485
        %543 = vmatprep.subr.bf16.mxu0 0
        %544 = vmatpush1.bf16.msra.mxu0 %v486
        %545 = vmatprep.subr.bf16.mxu0 0
        %546 = vmatpush1.bf16.msra.mxu0 %v487
        %547 = vmatprep.subr.bf16.mxu0 0
        %548 = vmatpush1.bf16.msra.mxu0 %v488
        %549 = vmatprep.subr.bf16.mxu0 0
        %550 = vmatpush1.bf16.msra.mxu0 %v489
        %551 = vmatprep.subr.bf16.mxu0 0
        %552 = vmatpush1.bf16.msra.mxu0 %v490
        %553 = vmatprep.subr.bf16.mxu0 0
        %554 = vmatpush1.bf16.msra.mxu0 %v491
        %555 = vmatprep.subr.bf16.mxu0 0
        %556 = vmatpush1.bf16.msra.mxu0 %v492
        %557 = vmatprep.mubr.bf16.mxu0 %v376
        %558 = vmatmul.mubr.bf16.gmra.mrb[0].mxu0 %v375
        %v559 = vpop.f32.mrb[0].mxu0
        %v560 = vadd.f32 0.0, %v559
        %v561 = vpop.f32.mrb[0].mxu0
        %v562 = vpop.f32.mrb[0].mxu0
        %v563 = vadd.f32 0.0, %v562
        %v564 = vpop.f32.mrb[0].mxu0
        %565 = vdwg.mxu0
        %566 = vmatprep.subr.bf16.mxu0 0
        %567 = vmatpush1.bf16.msra.mxu0 %v493
        %568 = vmatprep.subr.bf16.mxu0 0
        %569 = vmatpush1.bf16.msra.mxu0 %v494
        %570 = vmatprep.subr.bf16.mxu0 0
        %571 = vmatpush1.bf16.msra.mxu0 %v495
        %572 = vmatprep.subr.bf16.mxu0 0
        %573 = vmatpush1.bf16.msra.mxu0 %v496
        %574 = vmatprep.subr.bf16.mxu0 0
        %575 = vmatpush1.bf16.msra.mxu0 %v497
        %576 = vmatprep.subr.bf16.mxu0 0
        %577 = vmatpush1.bf16.msra.mxu0 %v498
        %578 = vmatprep.subr.bf16.mxu0 0
        %579 = vmatpush1.bf16.msra.mxu0 %v499
        %580 = vmatprep.subr.bf16.mxu0 0
        %581 = vmatpush1.bf16.msra.mxu0 %v500
        %582 = vmatprep.subr.bf16.mxu0 0
        %583 = vmatpush1.bf16.msra.mxu0 0
        %584 = vmatprep.subr.bf16.mxu0 0
        %585 = vmatpush1.bf16.msra.mxu0 0
        %586 = vmatprep.subr.bf16.mxu0 0
        %587 = vmatpush1.bf16.msra.mxu0 0
        %588 = vmatprep.subr.bf16.mxu0 0
        %589 = vmatpush1.bf16.msra.mxu0 0
        %590 = vmatprep.subr.bf16.mxu0 0
        %591 = vmatpush1.bf16.msra.mxu0 0
        %592 = vmatprep.subr.bf16.mxu0 0
        %593 = vmatpush1.bf16.msra.mxu0 0
        %594 = vmatprep.subr.bf16.mxu0 0
        %595 = vmatpush1.bf16.msra.mxu0 0
        %596 = vmatprep.subr.bf16.mxu0 0
        %597 = vmatpush1.bf16.msra.mxu0 0
        %598 = vmatprep.mubr.bf16.mxu0 0
        %599 = vmatmul.mubr.bf16.gmra.mrb[0].mxu0 %v377
        %v600 = vpop.f32.mrb[0].mxu0
        %v601 = vadd.f32 %v560, %v600
        %v602 = vpop.f32.mrb[0].mxu0
        %v603 = vpop.f32.mrb[0].mxu0
        %v604 = vadd.f32 %v563, %v603
        %v605 = vpop.f32.mrb[0].mxu0
        %606 = vdwg.mxu0
        %v607 = vadd.f32 %v311, %v601
        %v608 = vadd.f32 %v312, %v604
        %609 = vst [vmem:[#allocation2] sm:$0xff] %v607
        %610 = vst [vmem:[#allocation2 + $0x8] sm:$0xff] %v608
        %p611 = scmp.eq.s32.totalorder %s20, 2
        // Predicated region
        $region67: #{_lambda_.12} parent=57 // pred_check
          %p612 = pneg %p611
        $region68: #{_lambda_.12} parent=57 // pred_check_branch
          %614 = sbr.rel (%p612) target = $region70
        $region69: #{_lambda_.12} parent=57 // pred_region
          %v615 = vld [vmem:[#allocation2] sm:$0xff]
          %v616 = vld [vmem:[#allocation2 + $0x8] sm:$0xff]
          %v617 = vadd.f32 %v615, %v616
          %v618 = vrot.slane %v617, 4
          %v619 = vadd.f32 %v617, %v618
          %v620 = vrot.slane %v619, 2
          %v621 = vadd.f32 %v619, %v620
          %v622 = vrot.slane %v621, 1
          %v623 = vadd.f32 %v621, %v622
          %v624 = vrcp.pop 16.0
          %v625 = vmul.f32 %v623, %v624
          %v626 = vsub.f32 %v615, %v625
          %v627 = vsub.f32 %v616, %v625
          %v628 = vmul.f32 %v626, %v626
          %v629 = vmul.f32 %v627, %v627
          %v630 = vadd.f32 %v628, %v629
          %v631 = vrot.slane %v630, 4
          %v632 = vadd.f32 %v630, %v631
          %v633 = vrot.slane %v632, 2
          %v634 = vadd.f32 %v632, %v633
          %v635 = vrot.slane %v634, 1
          %v636 = vadd.f32 %v634, %v635
          %v637 = vmul.f32 %v636, %v624
          %v638 = vadd.f32 %v637, 1e-05
          %v639 = vrsqrt.pop %v638
          %v640 = vmul.f32 %v626, %v639
          %v641 = vmul.f32 %v627, %v639
          %v642 = vld [vmem:[%s289] sm:$0xf]
          %v643 = vld [vmem:[%s289 + $0x4] sm:$0xf]
          %v644 = vunpack.c.l.bf16 %v642
          %v645 = vunpack.c.l.bf16 %v643
          %v646 = vadd.f32 %v640, %v644
          %v647 = vadd.f32 %v641, %v645
          %v648 = vpack.c.bf16 %v647, %v646
          %v650 = vunpack.c.l.b16 %v648
          %v651 = vunpack.c.h.b16 %v648
          %v652 = vpack.c.b16 %v650, %v650
          %v653 = vpack.c.b16 %v651, %v651
          %656 = vst [vmem:[%s295] sm:$0xf] %v652
          %657 = vst [vmem:[%s295 + $0x4] sm:$0xf] %v653
        $region70: #{_lambda_.12} parent=57 // pred_fallthru
          _
        %s658 = smul.u32 2, %s19
        %p659 = scmp.lt.s32.totalorder %s658, 3
        %s660 = scalar_select %p659, %s658, 3
        %s661 = smul.addr %s660, 4
        %s662 = scalar_lea.vmem %s4, %s661
        // Predicated region
        $region71: #{_lambda_.12} parent=57 // pred_check
          %p663 = pneg %p146
        $region72: #{_lambda_.12} parent=57 // pred_check_branch
          %665 = sbr.rel (%p663) target = $region74
        $region73: #{_lambda_.12} parent=57 // pred_region
          %s666 = smul.u32 2, %s19
        $region74: #{_lambda_.12} parent=57 // pred_fallthru
          _
      $region58: #{_lambda_.12} parent=5 // pred_fallthru
        _
      %p667 = scmp.le.s32.totalorder 2, %s10
      // Predicated region
      $region75: #{_lambda_.12} parent=5 // pred_check
        %p668 = pneg %p667
      $region76: #{_lambda_.12} parent=5 // pred_check_branch
        %670 = sbr.rel (%p668) target = $region78
      $region77: #{_lambda_.12} parent=5 // pred_region
        %s671 = ssub.s32 %s10, 2
        // Predicated region
        $region79: #{_lambda_.12} parent=77 // pred_check
          %p672 = pneg %p152
        $region80: #{_lambda_.12} parent=77 // pred_check_branch
          %674 = sbr.rel (%p672) target = $region82
        $region81: #{_lambda_.12} parent=77 // pred_region
          %s675 = smul.u32 2, %s21
          %p676 = scmp.lt.s32.totalorder %s675, 3
          %s677 = scalar_select %p676, %s675, 3
          %s678 = smul.addr %s677, 4
          %s679 = scalar_lea.vmem %s4, %s678
        $region82: #{_lambda_.12} parent=77 // pred_fallthru
          _
      $region78: #{_lambda_.12} parent=5 // pred_fallthru
        _
    $region6: #{_lambda_.12} parent=1 // loop_footer
      %s14 = sadd.s32 1, %s10
    $region7: #{_lambda_.12} parent=1 // loop_footer_branch
      %9 = sbr.rel target = $region3
    $region8: #{_lambda_.12} parent=1 // loop_exit
      _

// kernel: _lambda_.15
$region0: #{_lambda_.15}
  #allocation0 [shape = 'u32[]', space=smem, size = 0x4, offset = 0x4, fixed_abs, tag = 'smem constant byte address 0x4 - core index']
  #allocation1 [shape = 'u32[144,128]{1,0:T(1,128)}', space=vmem, size = 0x12000, scoped, tag = 'internal scratch']
  #allocation2 [shape = 'f32[2,1]{1,0:T(2,128)}', space=vmem, size = 0x400, scoped, tag = 'scratch operand']
  #allocation3 [shape = 'f32[1,1]{1,0:T(1,128)S(1)}', space=vmem, size = 0x200, scoped, tag = 'scoped memory for _lambda_.15']
  %s0 = inlined_call_operand.vmem [shape: f32[2,512], index: 0, kind: input, shape index: {}]
  %s1 = inlined_call_operand.vmem [shape: f32[1,512], index: 1, kind: input, shape index: {}]
  %s2 = inlined_call_operand.<no memory space> [shape: f32[1,1], index: 2, kind: input, shape index: {}]
  %s3 = inlined_call_operand.vmem [shape: f32[2,1], index: 3, kind: output, shape index: {}]
  %s4 = sld [smem:[#allocation0]]
  $region30: #{_lambda_.15} parent=0
    _
  %s6 = ssub.s32 1, %s4
  %s7 = scalar_select 0, %s6, %s4
  %v8 = vstv %s2
  %9 = vst [vmem:[#allocation3] sm:$0x1] %v8
  // Predicated region
  $region2: #{_lambda_.15} parent=0 // pred_check
    _
  $region3: #{_lambda_.15} parent=0 // pred_check_branch
    %11 = sbr.rel (0) target = $region5
  $region4: #{_lambda_.15} parent=0 // pred_region
    _
  $region5: #{_lambda_.15} parent=0 // pred_fallthru
    _
  // Predicated region
  $region6: #{_lambda_.15} parent=0 // pred_check
    _
  $region7: #{_lambda_.15} parent=0 // pred_check_branch
    %13 = sbr.rel (0) target = $region9
  $region8: #{_lambda_.15} parent=0 // pred_region
    _
  $region9: #{_lambda_.15} parent=0 // pred_fallthru
    _
  // Predicated region
  $region10: #{_lambda_.15} parent=0 // pred_check
    _
  $region11: #{_lambda_.15} parent=0 // pred_check_branch
    %15 = sbr.rel (0) target = $region13
  $region12: #{_lambda_.15} parent=0 // pred_region
    _
  $region13: #{_lambda_.15} parent=0 // pred_fallthru
    _
  %p16 = scmp.eq.s32.totalorder 0, 0
  // Predicated region
  $region14: #{_lambda_.15} parent=0 // pred_check
    %p17 = pneg %p16
  $region15: #{_lambda_.15} parent=0 // pred_check_branch
    %19 = sbr.rel (%p17) target = $region17
  $region16: #{_lambda_.15} parent=0 // pred_region
    %vm20 = vcmask 1024
    %21 = vst.msk [vmem:[#allocation2] sm:$0x3] %vm20, 0.0
  $region17: #{_lambda_.15} parent=0 // pred_fallthru
    _
  %v22 = vld [vmem:[%s0] sm:$0xff]
  %v23 = vld [vmem:[%s1] sm:$0xf]
  %v24 = vld [vmem:[#allocation2] sm:$0x3]
  %v26 = vlaneseq
  %v27 = vshrl.u32 %v26, 7
  %v28 = vsub.s32 0, %v27
  %v29 = vrot.slane %v23, %v28
  %v30 = vlaneseq
  %v31 = vshrl.u32 %v30, 7
  %v32 = vsub.s32 1, %v31
  %v33 = vrot.slane %v23, %v32
  %v34 = vlaneseq
  %v35 = vshrl.u32 %v34, 7
  %v36 = vsub.s32 2, %v35
  %v37 = vrot.slane %v23, %v36
  %v38 = vlaneseq
  %v39 = vshrl.u32 %v38, 7
  %v40 = vsub.s32 3, %v39
  %v41 = vrot.slane %v23, %v40
  %v42 = vcombine.low %v29, %v33
  %v43 = vcombine.low %v37, %v41
  %v45 = vunpack.c.l.s4 1983009808
  %v46 = vunpack.c.0.s8 %v45
  %v47 = vlaneseq
  %v48 = vshrl.u32 %v47, 7
  %v49 = vsub.s32 %v46, %v48
  %v50 = vrot.slane %v42, %v49
  %v52 = vunpack.c.l.s4 1983009808
  %v53 = vunpack.c.0.s8 %v52
  %v54 = vlaneseq
  %v55 = vshrl.u32 %v54, 7
  %v56 = vsub.s32 %v53, %v55
  %v57 = vrot.slane %v43, %v56
  %v58 = vcombine.low %v50, %v57
  %v60 = vmul.f32 %v22, %v58
  %v62 = vcombine.high %v60, %v60
  %v64 = vunpack.c.l.s4 1983009808
  %v65 = vunpack.c.0.s8 %v64
  %v66 = vlaneseq
  %v67 = vshrl.u32 %v66, 7
  %v68 = vsub.s32 %v65, %v67
  %v69 = vrot.slane %v60, %v68
  %v71 = vunpack.c.l.s4 1983009808
  %v72 = vunpack.c.0.s8 %v71
  %v73 = vlaneseq
  %v74 = vshrl.u32 %v73, 7
  %v75 = vsub.s32 %v72, %v74
  %v76 = vrot.slane %v62, %v75
  %v77 = vcombine.high %v69, %v69
  %v78 = vcombine.high %v76, %v76
  %vm83 = vcmask 1041408
  %v84 = vsel %vm83, %v69, 0.0
  %v85 = vsel %vm83, %v77, 0.0
  %v86 = vadd.f32 %v84, %v85
  %v87 = vsel %vm83, %v76, 0.0
  %v88 = vadd.f32 %v86, %v87
  %v89 = vsel %vm83, %v78, 0.0
  %v90 = vadd.f32 %v88, %v89
  %91 = vadd.xlane.f32.xlu0 %v90
  %v92 = vpop.xlane.xlu0 %91
  %v93 = vadd.f32 %v24, %v92
  %vm94 = vcmask 1024
  %95 = vst.msk [vmem:[#allocation2] sm:$0x3] %vm94, %v93
  // Predicated region
  $region18: #{_lambda_.15} parent=0 // pred_check
    %p96 = pneg %p16
  $region19: #{_lambda_.15} parent=0 // pred_check_branch
    %98 = sbr.rel (%p96) target = $region21
  $region20: #{_lambda_.15} parent=0 // pred_region
    %v99 = vld [vmem:[#allocation2] sm:$0x3]
    %v100 = vld [vmem:[#allocation3] sm:$0x1]
    %v102 = vlaneseq
    %v103 = vshrl.u32 %v102, 7
    %v104 = vsub.s32 0, %v103
    %v105 = vrot.slane %v100, %v104
    %v107 = vadd.f32 %v99, %v105
    %108 = vst.msk [vmem:[%s3] sm:$0x3] %vm94, %v107
  $region21: #{_lambda_.15} parent=0 // pred_fallthru
    _
  // Predicated region
  $region22: #{_lambda_.15} parent=0 // pred_check
    _
  $region23: #{_lambda_.15} parent=0 // pred_check_branch
    %110 = sbr.rel (0) target = $region25
  $region24: #{_lambda_.15} parent=0 // pred_region
    _
  $region25: #{_lambda_.15} parent=0 // pred_fallthru
    _
  // Predicated region
  $region26: #{_lambda_.15} parent=0 // pred_check
    _
  $region27: #{_lambda_.15} parent=0 // pred_check_branch
    %112 = sbr.rel (0) target = $region29
  $region28: #{_lambda_.15} parent=0 // pred_region
    _
  $region29: #{_lambda_.15} parent=0 // pred_fallthru
    _

</llo_original>
